<compile_context>
chip_gen: v7x
topology: tpu7x:2x2x1
jax: 0.10.0
libtpu: 0.0.40
codegen_flags: <defaults>
</compile_context>

<pallas_src>
import jax
import jax.numpy as jnp
from jax import lax
from jax.experimental import pallas as pl
from jax.experimental.pallas import tpu as pltpu

EPS = 1e-5  # nn.BatchNorm2d default


# ----------------------------------------------------------------------------- kernels
def _conv_rows(x_ref, w_ref):
    """Shared conv body: y[(n,h) rows, (w,co) lanes] via 3 banded matmuls (one per dy).

    x_ref: (TB, 10, 256)   padded NHWC rows, lanes = wp*Cin + ci (zero-padded to 256)
    w_ref: (3, 256, 2048)  banded weights, lanes = w*Cout + co
    returns (TB*8, 2048) float32
    """
    tb = x_ref.shape[0]
    lanes = x_ref.shape[2]
    rows = tb * 8
    y = None
    for dy in range(3):                                        # static unroll, 3 MXU calls
        xs = x_ref[:, dy:dy + 8, :].reshape(rows, lanes)       # aligned sublane merge (8-row groups)
        t = jnp.dot(xs, w_ref[dy], preferred_element_type=jnp.float32)
        y = t if y is None else y + t
    return y


def stats_kernel(x_ref, w_ref, out_ref, acc_ref):
    """Phase 1: per-(w, co) sum and sum-of-squares of y, accumulated per TensorCore.

    grid = (2, NB//2): axis 0 "parallel" (one partial per core), axis 1 "arbitrary".
    out_ref: (1, 8, 2048) per-core partial; row 0 = sum(y), row 1 = sum(y*y), rows 2..7 zero.
    acc_ref: (8, 2048) VMEM scratch, written to out_ref once at the last inner step.
    """
    i = pl.program_id(1)

    @pl.when(i == 0)
    def _init():
        acc_ref[...] = jnp.zeros_like(acc_ref)

    y = _conv_rows(x_ref, w_ref)                               # (TB*8, 2048)

    # axis-0 reduction on the MXU (it has slack) instead of a two-pass mean/var
    rows = y.shape[0]
    ones = jnp.ones((1, rows), dtype=jnp.float32)
    s1 = jnp.dot(ones, y, preferred_element_type=jnp.float32)          # (1, 2048)
    s2 = jnp.dot(ones, y * y, preferred_element_type=jnp.float32)      # (1, 2048)
    acc_ref[0:1, :] += s1
    acc_ref[1:2, :] += s2

    @pl.when(i == pl.num_programs(1) - 1)
    def _emit():
        out_ref[0] = acc_ref[...]


def norm_kernel(x_ref, w_ref, ss_ref, o_ref):
    """Phase 2: recompute y per tile and apply the pre-folded BN affine + ReLU.

    ss_ref: (8, 2048)  row 0 = scale (gamma*rsqrt(var+eps), tiled over w),
                       row 1 = shift (beta - mean*scale, tiled over w).
    o_ref:  (TB*8, 2048) lane-dense output, rows = (n, h), lanes = (w, co).
    """
    y = _conv_rows(x_ref, w_ref)
    o_ref[...] = jnp.maximum(y * ss_ref[0:1, :] + ss_ref[1:2, :], 0.0)


# ----------------------------------------------------------------------------- wrapper
def _ceil_div(a: int, b: int) -> int:
    return -(-a // b)


def conv_block_forward(x, w, b, gamma, beta, *, tb_max: int = 32):
    """x: (N, 22, 8, 8) NCHW float32.  w: (256, 22, 3, 3).  Returns (N, 256, 8, 8).

    `b` (conv bias) is accepted for API parity with nn.Conv2d but intentionally unused:
    a per-channel bias is exactly cancelled by training-mode BatchNorm mean subtraction.
    """
    del b  # redundant under training-mode BN (see header)

    x = x.reshape(-1, 22, 8, 8)                                # mimics s.view(-1, 22, 8, 8)
    N, Cin, H, W = x.shape
    Cout, KH, KW = w.shape[0], w.shape[2], w.shape[3]
    HP, WP = H + 2, W + 2                                      # spatially padded extents (10, 10)
    LANES = 256                                                # WP*Cin = 220 -> pad to 256 lanes
    WCO = W * Cout                                             # 8*256 = 2048 output lanes per row
    assert WP * Cin <= LANES

    # ---- XLA prep (tiny, O(N x 16 KiB)): NCHW -> spatially padded NHWC, (wp, ci) fused in lanes
    x_nhwc = jnp.transpose(x, (0, 2, 3, 1)).astype(jnp.float32)        # (N, H, W, Cin)
    xp = jnp.pad(x_nhwc, ((0, 0), (1, 1), (1, 1), (0, 0)))             # (N, 10, 10, Cin)
    xp = xp.reshape(N, HP, WP * Cin)
    xp = jnp.pad(xp, ((0, 0), (0, 0), (0, LANES - WP * Cin)))          # (N, 10, 256)

    # ---- batch tiling: even number of tiles (feeds both v7x TensorCores in phase 1)
    NB = max(2, 2 * _ceil_div(N, 2 * tb_max))                  # even tile count
    TB = _ceil_div(N, NB)                                      # images per tile (<= tb_max)
    Npad = NB * TB
    NB2 = NB // 2
    xp = jnp.pad(xp, ((0, Npad - N), (0, 0), (0, 0)))          # zero images: y == 0, stats exact

    # ---- banded weights W2[dy, wp*Cin+ci, w*Cout+co]  (built once in XLA, ~6 MiB, resident)
    wk = jnp.transpose(w, (2, 3, 1, 0)).astype(jnp.float32)    # (dy, dx, ci, co)
    ind = (jnp.arange(WP)[None, :, None]
           == jnp.arange(KW)[:, None, None] + jnp.arange(W)[None, None, :]
           ).astype(jnp.float32)                               # ind[dx, wp, w] = (wp == w + dx)
    w2 = jnp.einsum('xpw,dxic->dpiwc', ind, wk)                # (3, 10, 22, 8, 256)
    w2 = w2.reshape(KH, WP * Cin, WCO)
    w2 = jnp.pad(w2, ((0, 0), (0, LANES - WP * Cin), (0, 0)))  # (3, 256, 2048)

    cparams = pltpu.CompilerParams(vmem_limit_bytes=32 * 1024 * 1024)

    # ---- phase 1: per-core partial sum / sum-of-squares (2 TensorCores on v7x) -------------
    stats_part = pl.pallas_call(
        stats_kernel,
        out_shape=jax.ShapeDtypeStruct((2, 8, WCO), jnp.float32),
        grid=(2, NB2),
        in_specs=[
            pl.BlockSpec((TB, HP, LANES), lambda c, i: (c * NB2 + i, 0, 0)),
            pl.BlockSpec((KH, LANES, WCO), lambda c, i: (0, 0, 0)),
        ],
        out_specs=pl.BlockSpec((1, 8, WCO), lambda c, i: (c, 0, 0)),
        scratch_shapes=[pltpu.VMEM((8, WCO), jnp.float32)],
        compiler_params=pltpu.CompilerParams(
            dimension_semantics=("parallel", "arbitrary"),
            vmem_limit_bytes=32 * 1024 * 1024),
    )(xp, w2)

    # ---- BN math hoisted to XLA: fold into a single per-channel affine ----------------------
    s = stats_part.sum(axis=0)[:2]                             # (2, 2048): sum over the 2 cores
    s = s.reshape(2, W, Cout).sum(axis=1)                      # (2, 256):  fold the w groups
    m_total = float(N * H * W)
    mean = s[0] / m_total
    var = jnp.maximum(s[1] / m_total - mean * mean, 0.0)       # clamp single-pass cancellation
    scale = gamma.astype(jnp.float32) * lax.rsqrt(var + EPS)
    shift = beta.astype(jnp.float32) - mean * scale
    ss = jnp.zeros((8, WCO), jnp.float32)
    ss = ss.at[0].set(jnp.tile(scale, W)).at[1].set(jnp.tile(shift, W))

    # ---- phase 2: recompute y per tile, folded affine + ReLU (independent tiles) ------------
    out_flat = pl.pallas_call(
        norm_kernel,
        out_shape=jax.ShapeDtypeStruct((Npad * H, WCO), jnp.float32),
        grid=(NB,),
        in_specs=[
            pl.BlockSpec((TB, HP, LANES), lambda t: (t, 0, 0)),
            pl.BlockSpec((KH, LANES, WCO), lambda t: (0, 0, 0)),
            pl.BlockSpec((8, WCO), lambda t: (0, 0)),
        ],
        out_specs=pl.BlockSpec((TB * H, WCO), lambda t: (t, 0)),
        compiler_params=pltpu.CompilerParams(
            dimension_semantics=("parallel",),
            vmem_limit_bytes=32 * 1024 * 1024),
    )(xp, w2, ss)

    # rows = (n, h), lanes = (w, co): drop padded images, back to NCHW
    out = out_flat[:N * H].reshape(N, H, W, Cout).transpose(0, 3, 1, 2)
    return out


# ----------------------------------------------------------------------------- reference
def reference_forward(x, w, b, gamma, beta):
    """Pure-JAX reference of the PyTorch forward (training-mode BN, bias included)."""
    x = x.reshape(-1, 22, 8, 8)
    y = lax.conv_general_dilated(
        x, w, window_strides=(1, 1), padding=((1, 1), (1, 1)),
        dimension_numbers=("NCHW", "OIHW", "NCHW"),
    ) + b.reshape(1, -1, 1, 1)
    mean = jnp.mean(y, axis=(0, 2, 3), keepdims=True)
    var = jnp.mean((y - mean) ** 2, axis=(0, 2, 3), keepdims=True)
    y = (y - mean) * lax.rsqrt(var + EPS)
    y = y * gamma.reshape(1, -1, 1, 1) + beta.reshape(1, -1, 1, 1)
    return jnp.maximum(y, 0.0)


if __name__ == "__main__":
    key = jax.random.PRNGKey(0)
    k_x, k_w, k_b, k_g, k_be = jax.random.split(key, 5)

    N, Cin, H, W_, Cout = 4, 22, 8, 8, 256
    x = jax.random.normal(k_x, (N, Cin, H, W_), dtype=jnp.float32)

    # Parameter init consistent with nn.Conv2d(22, 256, 3) / nn.BatchNorm2d(256)
    fan_in = Cin * 3 * 3
    bound = 1.0 / (fan_in ** 0.5)
    w = jax.random.uniform(k_w, (Cout, Cin, 3, 3), minval=-bound, maxval=bound, dtype=jnp.float32)
    b = jax.random.uniform(k_b, (Cout,), minval=-bound, maxval=bound, dtype=jnp.float32)
    gamma = 1.0 + 0.1 * jax.random.normal(k_g, (Cout,), dtype=jnp.float32)
    beta = 0.1 * jax.random.normal(k_be, (Cout,), dtype=jnp.float32)

    # tb_max=1 forces 4 batch tiles so the multi-step accumulation / both grid axes are exercised
    out = conv_block_forward(x, w, b, gamma, beta, tb_max=1)
    jax.block_until_ready(out)

    ref = reference_forward(x, w, b, gamma, beta)
    assert out.shape == (N, Cout, H, W_)
    max_err = jnp.max(jnp.abs(out - ref))
    assert jnp.allclose(out, ref, atol=2e-4, rtol=2e-4), f"mismatch vs reference (max abs err {max_err})"

    print("KERNEL_OK")
</pallas_src>

<mosaic_0001>
module attributes {stable_mosaic.version = 11 : i64} {
  func.func @stats_kernel(%arg0: i32, %arg1: i32, %arg2: memref<1x10x256xf32, #tpu.memory_space<vmem>>, %arg3: memref<3x256x2048xf32, #tpu.memory_space<vmem>>, %arg4: memref<1x8x2048xf32, #tpu.memory_space<vmem>>, %arg5: memref<8x2048xf32, #tpu.memory_space<vmem>>) attributes {dimension_semantics = [#tpu.dimension_semantics<parallel>, #tpu.dimension_semantics<arbitrary>], iteration_bounds = array<i64: 2, 2>, scalar_prefetch = 0 : i64, scratch_operands = 1 : i64, tpu.core_type = #tpu.core_type<tc>, window_params = [{transform_indices = @transform_0, window_bounds = array<i64: 1, 10, 256>}, {pipeline_mode = #tpu.pipeline_mode<synchronous>, transform_indices = @transform_1, window_bounds = array<i64: 3, 256, 2048>}, {transform_indices = @transform_2, window_bounds = array<i64: 1, 8, 2048>}]} {
    %c0_i32 = arith.constant 0 : i32
    %0 = arith.cmpi eq, %arg1, %c0_i32 : i32
    %1 = arith.extui %0 : i1 to i32
    %c0_i32_0 = arith.constant 0 : i32
    %2 = arith.cmpi ne, %1, %c0_i32_0 : i32
    scf.if %2 {
      %cst_30 = arith.constant 0.000000e+00 : f32
      %33 = vector.broadcast %cst_30 : f32 to vector<8x2048xf32>
      %c0_31 = arith.constant 0 : index
      %c0_32 = arith.constant 0 : index
      %34 = vector.load %arg5[%c0_31, %c0_32] : memref<8x2048xf32, #tpu.memory_space<vmem>>, vector<8x2048xf32>
      tpu.vector_store %arg5[%c0_31, %c0_32], %33 {strides = array<i32>} : memref<8x2048xf32, #tpu.memory_space<vmem>>, vector<8x2048xf32>,
    } else {
    }
    %c0 = arith.constant 0 : index
    %c0_1 = arith.constant 0 : index
    %c0_2 = arith.constant 0 : index
    %3 = vector.load %arg2[%c0, %c0_1, %c0_2] : memref<1x10x256xf32, #tpu.memory_space<vmem>>, vector<1x8x256xf32>
    %4 = vector.shape_cast %3 : vector<1x8x256xf32> to vector<8x256xf32>
    %c0_3 = arith.constant 0 : index
    %c0_4 = arith.constant 0 : index
    %c0_5 = arith.constant 0 : index
    %5 = vector.load %arg3[%c0_3, %c0_4, %c0_5] : memref<3x256x2048xf32, #tpu.memory_space<vmem>>, vector<1x256x2048xf32>
    %6 = vector.shape_cast %5 : vector<1x256x2048xf32> to vector<256x2048xf32>
    %cst = arith.constant dense<0.000000e+00> : vector<8x2048xf32>
    %7 = tpu.matmul %4, %6, %cst {dimension_numbers = #tpu.dot_dimension_numbers<[1], [0], [0], [1], [0, 0, 1, 1], [], []>} : vector<8x256xf32>, vector<256x2048xf32>, vector<8x2048xf32> -> vector<8x2048xf32>
    %c0_6 = arith.constant 0 : index
    %c1 = arith.constant 1 : index
    %c0_7 = arith.constant 0 : index
    %8 = vector.load %arg2[%c0_6, %c1, %c0_7] : memref<1x10x256xf32, #tpu.memory_space<vmem>>, vector<1x8x256xf32>
    %9 = vector.shape_cast %8 : vector<1x8x256xf32> to vector<8x256xf32>
    %c1_8 = arith.constant 1 : index
    %c0_9 = arith.constant 0 : index
    %c0_10 = arith.constant 0 : index
    %10 = vector.load %arg3[%c1_8, %c0_9, %c0_10] : memref<3x256x2048xf32, #tpu.memory_space<vmem>>, vector<1x256x2048xf32>
    %11 = vector.shape_cast %10 : vector<1x256x2048xf32> to vector<256x2048xf32>
    %cst_11 = arith.constant dense<0.000000e+00> : vector<8x2048xf32>
    %12 = tpu.matmul %9, %11, %cst_11 {dimension_numbers = #tpu.dot_dimension_numbers<[1], [0], [0], [1], [0, 0, 1, 1], [], []>} : vector<8x256xf32>, vector<256x2048xf32>, vector<8x2048xf32> -> vector<8x2048xf32>
    %13 = arith.addf %7, %12 : vector<8x2048xf32>
    %c0_12 = arith.constant 0 : index
    %c2 = arith.constant 2 : index
    %c0_13 = arith.constant 0 : index
    %14 = vector.load %arg2[%c0_12, %c2, %c0_13] : memref<1x10x256xf32, #tpu.memory_space<vmem>>, vector<1x8x256xf32>
    %15 = vector.shape_cast %14 : vector<1x8x256xf32> to vector<8x256xf32>
    %c2_14 = arith.constant 2 : index
    %c0_15 = arith.constant 0 : index
    %c0_16 = arith.constant 0 : index
    %16 = vector.load %arg3[%c2_14, %c0_15, %c0_16] : memref<3x256x2048xf32, #tpu.memory_space<vmem>>, vector<1x256x2048xf32>
    %17 = vector.shape_cast %16 : vector<1x256x2048xf32> to vector<256x2048xf32>
    %cst_17 = arith.constant dense<0.000000e+00> : vector<8x2048xf32>
    %18 = tpu.matmul %15, %17, %cst_17 {dimension_numbers = #tpu.dot_dimension_numbers<[1], [0], [0], [1], [0, 0, 1, 1], [], []>} : vector<8x256xf32>, vector<256x2048xf32>, vector<8x2048xf32> -> vector<8x2048xf32>
    %19 = arith.addf %13, %18 : vector<8x2048xf32>
    %cst_18 = arith.constant 1.000000e+00 : f32
    %20 = vector.broadcast %cst_18 : f32 to vector<1x8xf32>
    %cst_19 = arith.constant dense<0.000000e+00> : vector<1x2048xf32>
    %21 = tpu.matmul %20, %19, %cst_19 {dimension_numbers = #tpu.dot_dimension_numbers<[1], [0], [0], [1], [0, 0, 1, 1], [], []>} : vector<1x8xf32>, vector<8x2048xf32>, vector<1x2048xf32> -> vector<1x2048xf32>
    %22 = arith.mulf %19, %19 : vector<8x2048xf32>
    %cst_20 = arith.constant dense<0.000000e+00> : vector<1x2048xf32>
    %23 = tpu.matmul %20, %22, %cst_20 {dimension_numbers = #tpu.dot_dimension_numbers<[1], [0], [0], [1], [0, 0, 1, 1], [], []>} : vector<1x8xf32>, vector<8x2048xf32>, vector<1x2048xf32> -> vector<1x2048xf32>
    %c0_21 = arith.constant 0 : index
    %c0_22 = arith.constant 0 : index
    %24 = vector.load %arg5[%c0_21, %c0_22] : memref<8x2048xf32, #tpu.memory_space<vmem>>, vector<1x2048xf32>
    %25 = arith.addf %24, %21 : vector<1x2048xf32>
    %c0_23 = arith.constant 0 : index
    %c0_24 = arith.constant 0 : index
    %26 = vector.load %arg5[%c0_23, %c0_24] : memref<8x2048xf32, #tpu.memory_space<vmem>>, vector<1x2048xf32>
    tpu.vector_store %arg5[%c0_23, %c0_24], %25 {strides = array<i32>} : memref<8x2048xf32, #tpu.memory_space<vmem>>, vector<1x2048xf32>,
    %c1_25 = arith.constant 1 : index
    %c0_26 = arith.constant 0 : index
    %27 = vector.load %arg5[%c1_25, %c0_26] : memref<8x2048xf32, #tpu.memory_space<vmem>>, vector<1x2048xf32>
    %28 = arith.addf %27, %23 : vector<1x2048xf32>
    %c1_27 = arith.constant 1 : index
    %c0_28 = arith.constant 0 : index
    %29 = vector.load %arg5[%c1_27, %c0_28] : memref<8x2048xf32, #tpu.memory_space<vmem>>, vector<1x2048xf32>
    tpu.vector_store %arg5[%c1_27, %c0_28], %28 {strides = array<i32>} : memref<8x2048xf32, #tpu.memory_space<vmem>>, vector<1x2048xf32>,
    %c1_i32 = arith.constant 1 : i32
    %30 = arith.cmpi eq, %arg1, %c1_i32 : i32
    %31 = arith.extui %30 : i1 to i32
    %c0_i32_29 = arith.constant 0 : i32
    %32 = arith.cmpi ne, %31, %c0_i32_29 : i32
    scf.if %32 {
      %c0_30 = arith.constant 0 : index
      %c0_31 = arith.constant 0 : index
      %33 = vector.load %arg5[%c0_30, %c0_31] : memref<8x2048xf32, #tpu.memory_space<vmem>>, vector<8x2048xf32>
      %c0_32 = arith.constant 0 : index
      %c0_33 = arith.constant 0 : index
      %c0_34 = arith.constant 0 : index
      %34 = vector.load %arg4[%c0_32, %c0_33, %c0_34] : memref<1x8x2048xf32, #tpu.memory_space<vmem>>, vector<1x8x2048xf32>
      %35 = vector.shape_cast %34 : vector<1x8x2048xf32> to vector<8x2048xf32>
      %36 = vector.shape_cast %33 : vector<8x2048xf32> to vector<1x8x2048xf32>
      tpu.vector_store %arg4[%c0_32, %c0_33, %c0_34], %36 {strides = array<i32>} : memref<1x8x2048xf32, #tpu.memory_space<vmem>>, vector<1x8x2048xf32>,
    } else {
    }
    return
  }
  func.func @transform_0(%arg0: i32, %arg1: i32) -> (i32, i32, i32) {
    %c2_i32 = arith.constant 2 : i32
    %0 = arith.muli %arg0, %c2_i32 : i32
    %1 = arith.addi %0, %arg1 : i32
    %c0_i32 = arith.constant 0 : i32
    %c0_i32_0 = arith.constant 0 : i32
    %c0_i32_1 = arith.constant 0 : i32
    return %1, %c0_i32, %c0_i32_0 : i32, i32, i32
  }
  func.func @transform_1(%arg0: i32, %arg1: i32) -> (i32, i32, i32) {
    %c0_i32 = arith.constant 0 : i32
    %c0_i32_0 = arith.constant 0 : i32
    %c0_i32_1 = arith.constant 0 : i32
    %c0_i32_2 = arith.constant 0 : i32
    return %c0_i32, %c0_i32_0, %c0_i32_1 : i32, i32, i32
  }
  func.func @transform_2(%arg0: i32, %arg1: i32) -> (i32, i32, i32) {
    %c0_i32 = arith.constant 0 : i32
    %c0_i32_0 = arith.constant 0 : i32
    %c0_i32_1 = arith.constant 0 : i32
    return %arg0, %c0_i32, %c0_i32_0 : i32, i32, i32
  }
}

</mosaic_0001>

<llo_original>
// kernel: tpu_custom_call.1
$region0: #{tpu_custom_call.1}
  #allocation0 [shape = 'u32[]', space=smem, size = 0x4, offset = 0x4, fixed_abs, tag = 'smem constant byte address 0x4 - core index']
  #allocation1 [shape = 'u32[144,128]{1,0:T(1,128)}', space=vmem, size = 0x12000, scoped, tag = 'internal scratch']
  #allocation2 [shape = 'f32[8,2048]{1,0:T(8,128)}', space=vmem, size = 0x10000, scoped, tag = 'scratch operand']
  %s0 = inlined_call_operand.vmem [shape: f32[4,10,256], index: 0, kind: input, shape index: {}]
  %s1 = inlined_call_operand.hbm [shape: f32[3,256,2048], index: 1, kind: input, shape index: {}]
  %s2 = inlined_call_operand.hbm [shape: f32[2,8,2048], index: 2, kind: output, shape index: {}]
  %s3 = sld [smem:[#allocation0]]
  $region53: #{tpu_custom_call.1} parent=0
    _
  %s5 = ssub.s32 1, %s3
  %s6 = scalar_select 0, %s5, %s3
  $region1: #{tpu_custom_call.1} parent=0
    #allocation3 [shape = 'u8[6291456]{0}', space=vmem, size = 0x600000, scoped, tag = 'input window, operand 1, single buffered']
    #allocation4 [shape = 's32[2]{0}', space=sflag, size = 0x8, scoped, tag = 'scoped memory for tpu_custom_call.1']
    #allocation5 [shape = 's32[2]{0}', space=sflag, size = 0x8, scoped, tag = 'scoped memory for tpu_custom_call.1']
    #allocation6 [shape = 'u8[131072]{0}', space=vmem, size = 0x20000, scoped, tag = 'output window, operand 0']
    %7 = vsyncpa [#allocation4], 0
    %8 = vsyncpa [#allocation5], 0
    %s9 = scalar_lea.sflag [#allocation5], 1
    %10 = vsyncpa %s9, 0
    loop: start=0, step=1, limit=6
    $region2: #{tpu_custom_call.1} parent=1 // loop_pre_header
      _
    $region3: #{tpu_custom_call.1} parent=1 // loop_header
      %s12 = sphi 0, %s16
      %p13 = scmp.ge.s32.totalorder %s12, 6
      %s19 = sphi 0, %s31
      %s20 = sphi 0, %s27
      %s21 = sphi 0, %s19
      %s22 = sphi 0, %s20
      %s23 = sphi 0, %s21
      %s24 = sphi 0, %s22
      %s38 = sphi 0, %s40
      %s41 = sphi 0, %s38
      %s42 = sphi 0, %s41
      %s58 = sphi 0, %s42
      %s62 = sphi 0, %s62
      %s64 = sphi 0, %s62
      %s65 = sphi 0, %s64
      %s79 = sphi 0, %s65
      %s85 = sphi 0, %s87
      %s88 = sphi 0, %s85
      %s89 = sphi 0, %s88
      %s105 = sphi 0, %s89
    $region4: #{tpu_custom_call.1} parent=1 // loop_header_branch
      %15 = sbr.rel (%p13) target = $region8
    $region5: #{tpu_custom_call.1} parent=1 // loop_body
      %s17 = ssub.s32 %s12, 1
      %s18 = ssub.s32 %s12, 2
      %s25 = sadd.s32 1, %s20
      %p26 = scmp.ge.s32.totalorder %s25, 2
      %s27 = scalar_select %p26, 0, %s25
      %s28 = sadd.s32 1, %s19
      %s29 = scalar_select %p26, %s28, %s19
      %p30 = scmp.ge.s32.totalorder %s29, 2
      %s31 = scalar_select %p30, 0, %s29
      %s32 = smul.u32 %s19, 2
      %s33 = sadd.s32 %s32, %s20
      %s34 = smul.u32 %s31, 2
      %s35 = sadd.s32 %s34, %s27
      %s36 = ssub.s32 %s33, %s35
      %p37 = scmp.eq.s32.totalorder %s36, 0
      %s39 = sadd.s32 %s38, 1
      %s40 = scalar_select %p37, %s38, %s39
      %p43 = pneg %p37
      %p44 = scmp.eq.s32.totalorder %s12, 3
      %p45 = por %p43, %p44
      %p46 = scmp.ne.s32.totalorder %s38, %s41
      %p47 = scmp.eq.s32.totalorder %s12, 0
      %p48 = por %p46, %p47
      %p49 = scmp.ne.s32.totalorder %s38, %s41
      %p50 = scmp.eq.s32.totalorder %s17, 3
      %p51 = por %p49, %p50
      %p52 = scmp.ne.s32.totalorder %s41, %s42
      %p53 = scmp.eq.s32.totalorder %s17, 0
      %p54 = por %p52, %p53
      %p55 = scmp.ne.s32.totalorder %s41, %s42
      %p56 = scmp.eq.s32.totalorder %s18, 3
      %p57 = por %p55, %p56
      %p59 = scmp.ne.s32.totalorder %s42, %s58
      %p60 = scmp.eq.s32.totalorder %s18, 0
      %p61 = por %p59, %p60
      %s63 = sadd.s32 %s62, 1
      %p66 = scmp.eq.s32.totalorder %s12, 3
      %p67 = scmp.ne.s32.totalorder %s62, %s64
      %p68 = scmp.eq.s32.totalorder %s12, 0
      %p69 = por %p67, %p68
      %p70 = scmp.ne.s32.totalorder %s62, %s64
      %p71 = scmp.eq.s32.totalorder %s17, 3
      %p72 = por %p70, %p71
      %p73 = scmp.ne.s32.totalorder %s64, %s65
      %p74 = scmp.eq.s32.totalorder %s17, 0
      %p75 = por %p73, %p74
      %p76 = scmp.ne.s32.totalorder %s64, %s65
      %p77 = scmp.eq.s32.totalorder %s18, 3
      %p78 = por %p76, %p77
      %p80 = scmp.ne.s32.totalorder %s65, %s79
      %p81 = scmp.eq.s32.totalorder %s18, 0
      %p82 = por %p80, %p81
      %s83 = ssub.s32 %s19, %s31
      %p84 = scmp.eq.s32.totalorder %s83, 0
      %s86 = sadd.s32 %s85, 1
      %s87 = scalar_select %p84, %s85, %s86
      %p90 = pneg %p84
      %p91 = scmp.eq.s32.totalorder %s12, 3
      %p92 = por %p90, %p91
      %p93 = scmp.ne.s32.totalorder %s85, %s88
      %p94 = scmp.eq.s32.totalorder %s12, 0
      %p95 = por %p93, %p94
      %p96 = scmp.ne.s32.totalorder %s85, %s88
      %p97 = scmp.eq.s32.totalorder %s17, 3
      %p98 = por %p96, %p97
      %p99 = scmp.ne.s32.totalorder %s88, %s89
      %p100 = scmp.eq.s32.totalorder %s17, 0
      %p101 = por %p99, %p100
      %p102 = scmp.ne.s32.totalorder %s88, %s89
      %p103 = scmp.eq.s32.totalorder %s18, 3
      %p104 = por %p102, %p103
      %p106 = scmp.ne.s32.totalorder %s89, %s105
      %p107 = scmp.eq.s32.totalorder %s18, 0
      %p108 = por %p106, %p107
      %p109 = scmp.le.s32.totalorder 1, %s12
      %p110 = scmp.lt.s32.totalorder %s12, 5
      %p111 = pnand %p109, %p110
      %p112 = pneg %p111
      // Predicated region
      $region9: #{tpu_custom_call.1} parent=5 // pred_check
        _
      $region10: #{tpu_custom_call.1} parent=5 // pred_check_branch
        %114 = sbr.rel (%p111) target = $region12
      $region11: #{tpu_custom_call.1} parent=5 // pred_region
        %s115 = ssub.s32 %s12, 1
        // Predicated region
        $region13: #{tpu_custom_call.1} parent=11 // pred_check
          %p116 = pneg %p75
        $region14: #{tpu_custom_call.1} parent=11 // pred_check_branch
          %118 = sbr.rel (%p116) target = $region16
        $region15: #{tpu_custom_call.1} parent=11 // pred_region
          %s120 = ssub.s32 196608, 196608
          %121 = vsyncadd [#allocation4], %s120
          %s122 = sshll.u32 [#allocation3], 4
          %s123 = int_to_ptr.vmem [resolvable:$true] %s122
          %128 = dma.hbm_to_vmem [thread:$0]  %s1, 196608, %s123, [#allocation4], 2048, 2048, 128
        $region16: #{tpu_custom_call.1} parent=11 // pred_fallthru
          _
      $region12: #{tpu_custom_call.1} parent=5 // pred_fallthru
        _
      %p129 = scmp.lt.s32.totalorder %s12, 4
      // Predicated region
      $region17: #{tpu_custom_call.1} parent=5 // pred_check
        %p130 = pneg %p129
      $region18: #{tpu_custom_call.1} parent=5 // pred_check_branch
        %132 = sbr.rel (%p130) target = $region20
      $region19: #{tpu_custom_call.1} parent=5 // pred_region
        // Predicated region
        $region21: #{tpu_custom_call.1} parent=19 // pred_check
          %p133 = pneg %p48
        $region22: #{tpu_custom_call.1} parent=19 // pred_check_branch
          %135 = sbr.rel (%p133) target = $region24
        $region23: #{tpu_custom_call.1} parent=19 // pred_region
          %s136 = smul.u32 %s19, 2
          %s137 = sadd.s32 %s136, %s20
          %p138 = scmp.lt.s32.totalorder %s137, 3
          %s139 = scalar_select %p138, %s137, 3
          %s140 = smul.addr %s139, 4
          %s141 = smul.addr %s140, 8
          %s142 = scalar_lea.vmem %s0, %s141
          %s143 = smul.u32 %s19, 2
          %s144 = sadd.s32 %s143, %s20
        $region24: #{tpu_custom_call.1} parent=19 // pred_fallthru
          _
      $region20: #{tpu_custom_call.1} parent=5 // pred_fallthru
        _
      %p145 = scmp.le.s32.totalorder 1, %s12
      %p146 = scmp.lt.s32.totalorder %s12, 5
      %p147 = pnand %p145, %p146
      %p148 = pneg %p147
      // Predicated region
      $region25: #{tpu_custom_call.1} parent=5 // pred_check
        _
      $region26: #{tpu_custom_call.1} parent=5 // pred_check_branch
        %150 = sbr.rel (%p147) target = $region28
      $region27: #{tpu_custom_call.1} parent=5 // pred_region
        %s151 = ssub.s32 %s12, 1
        // Predicated region
        $region29: #{tpu_custom_call.1} parent=27 // pred_check
          %p152 = pneg %p75
        $region30: #{tpu_custom_call.1} parent=27 // pred_check_branch
          %154 = sbr.rel (%p152) target = $region32
        $region31: #{tpu_custom_call.1} parent=27 // pred_region
          %155 = dma.done [#allocation4], 196608
        $region32: #{tpu_custom_call.1} parent=27 // pred_fallthru
          _
        %s156 = smul.u32 %s21, 2
        %s157 = sadd.s32 %s156, %s22
        %p158 = scmp.lt.s32.totalorder %s157, 3
        %s159 = scalar_select %p158, %s157, 3
        %s160 = smul.addr %s159, 4
        %s161 = smul.addr %s160, 8
        %s162 = scalar_lea.vmem %s0, %s161
        %p163 = pneg %p54
        %p164 = pneg %p51
        %p165 = pneg %p75
        %p166 = pneg %p72
        %p167 = pneg %p101
        %p168 = pneg %p98
        %s169 = sand.u32 %s88, 1
        %s170 = scalar_lea.sflag [#allocation5], %s169
        %s171 = sand.u32 %s88, 1
        %s172 = smul.addr %s171, 128
        %s173 = scalar_lea.vmem [#allocation6], %s172
        %s174 = smul.u32 %s21, 2
        %s175 = sadd.s32 %s174, %s22
        %p176 = scmp.lt.s32.totalorder %s175, 3
        %s177 = scalar_select %p176, %s175, 3
        %s178 = smul.addr %s177, 4
        %s179 = smul.addr %s178, 8
        %s180 = scalar_lea.vmem %s0, %s179
        %s181 = smul.u32 %s21, 2
        %s182 = sadd.s32 %s181, %s22
        %p183 = scmp.eq.s32.totalorder %s22, 0
        // Predicated region
        $region33: #{tpu_custom_call.1} parent=27 // pred_check
          %p184 = pneg %p183
        $region34: #{tpu_custom_call.1} parent=27 // pred_check_branch
          %186 = sbr.rel (%p184) target = $region36
        $region35: #{tpu_custom_call.1} parent=27 // pred_region
          %187 = vst [vmem:[#allocation2] sm:$0xff] 0.0
          %188 = vst [vmem:[#allocation2 + $0x8] sm:$0xff] 0.0
          %189 = vst [vmem:[#allocation2 + $0x10] sm:$0xff] 0.0
          %190 = vst [vmem:[#allocation2 + $0x18] sm:$0xff] 0.0
          %191 = vst [vmem:[#allocation2 + $0x20] sm:$0xff] 0.0
          %192 = vst [vmem:[#allocation2 + $0x28] sm:$0xff] 0.0
          %193 = vst [vmem:[#allocation2 + $0x30] sm:$0xff] 0.0
          %194 = vst [vmem:[#allocation2 + $0x38] sm:$0xff] 0.0
          %195 = vst [vmem:[#allocation2 + $0x40] sm:$0xff] 0.0
          %196 = vst [vmem:[#allocation2 + $0x48] sm:$0xff] 0.0
          %197 = vst [vmem:[#allocation2 + $0x50] sm:$0xff] 0.0
          %198 = vst [vmem:[#allocation2 + $0x58] sm:$0xff] 0.0
          %199 = vst [vmem:[#allocation2 + $0x60] sm:$0xff] 0.0
          %200 = vst [vmem:[#allocation2 + $0x68] sm:$0xff] 0.0
          %201 = vst [vmem:[#allocation2 + $0x70] sm:$0xff] 0.0
          %202 = vst [vmem:[#allocation2 + $0x78] sm:$0xff] 0.0
        $region36: #{tpu_custom_call.1} parent=27 // pred_fallthru
          _
        %v203 = vld [vmem:[%s180] sm:$0xff]
        %v204 = vld [vmem:[%s180 + $0x8] sm:$0xff]
        %v205 = vld [vmem:[#allocation3] sm:$0xff]
        %v206 = vld [vmem:[#allocation3 + $0x8] sm:$0xff]
        %v207 = vld [vmem:[#allocation3 + $0x10] sm:$0xff]
        %v208 = vld [vmem:[#allocation3 + $0x18] sm:$0xff]
        %v209 = vld [vmem:[#allocation3 + $0x20] sm:$0xff]
        %v210 = vld [vmem:[#allocation3 + $0x28] sm:$0xff]
        %v211 = vld [vmem:[#allocation3 + $0x30] sm:$0xff]
        %v212 = vld [vmem:[#allocation3 + $0x38] sm:$0xff]
        %v213 = vld [vmem:[#allocation3 + $0x40] sm:$0xff]
        %v214 = vld [vmem:[#allocation3 + $0x48] sm:$0xff]
        %v215 = vld [vmem:[#allocation3 + $0x50] sm:$0xff]
        %v216 = vld [vmem:[#allocation3 + $0x58] sm:$0xff]
        %v217 = vld [vmem:[#allocation3 + $0x60] sm:$0xff]
        %v218 = vld [vmem:[#allocation3 + $0x68] sm:$0xff]
        %v219 = vld [vmem:[#allocation3 + $0x70] sm:$0xff]
        %v220 = vld [vmem:[#allocation3 + $0x78] sm:$0xff]
        %v221 = vld [vmem:[#allocation3 + $0x80] sm:$0xff]
        %v222 = vld [vmem:[#allocation3 + $0x88] sm:$0xff]
        %v223 = vld [vmem:[#allocation3 + $0x90] sm:$0xff]
        %v224 = vld [vmem:[#allocation3 + $0x98] sm:$0xff]
        %v225 = vld [vmem:[#allocation3 + $0xa0] sm:$0xff]
        %v226 = vld [vmem:[#allocation3 + $0xa8] sm:$0xff]
        %v227 = vld [vmem:[#allocation3 + $0xb0] sm:$0xff]
        %v228 = vld [vmem:[#allocation3 + $0xb8] sm:$0xff]
        %v229 = vld [vmem:[#allocation3 + $0xc0] sm:$0xff]
        %v230 = vld [vmem:[#allocation3 + $0xc8] sm:$0xff]
        %v231 = vld [vmem:[#allocation3 + $0xd0] sm:$0xff]
        %v232 = vld [vmem:[#allocation3 + $0xd8] sm:$0xff]
        %v233 = vld [vmem:[#allocation3 + $0xe0] sm:$0xff]
        %v234 = vld [vmem:[#allocation3 + $0xe8] sm:$0xff]
        %v235 = vld [vmem:[#allocation3 + $0xf0] sm:$0xff]
        %v236 = vld [vmem:[#allocation3 + $0xf8] sm:$0xff]
        %v237 = vld [vmem:[#allocation3 + $0x100] sm:$0xff]
        %v238 = vld [vmem:[#allocation3 + $0x108] sm:$0xff]
        %v239 = vld [vmem:[#allocation3 + $0x110] sm:$0xff]
        %v240 = vld [vmem:[#allocation3 + $0x118] sm:$0xff]
        %v241 = vld [vmem:[#allocation3 + $0x120] sm:$0xff]
        %v242 = vld [vmem:[#allocation3 + $0x128] sm:$0xff]
        %v243 = vld [vmem:[#allocation3 + $0x130] sm:$0xff]
        %v244 = vld [vmem:[#allocation3 + $0x138] sm:$0xff]
        %v245 = vld [vmem:[#allocation3 + $0x140] sm:$0xff]
        %v246 = vld [vmem:[#allocation3 + $0x148] sm:$0xff]
        %v247 = vld [vmem:[#allocation3 + $0x150] sm:$0xff]
        %v248 = vld [vmem:[#allocation3 + $0x158] sm:$0xff]
        %v249 = vld [vmem:[#allocation3 + $0x160] sm:$0xff]
        %v250 = vld [vmem:[#allocation3 + $0x168] sm:$0xff]
        %v251 = vld [vmem:[#allocation3 + $0x170] sm:$0xff]
        %v252 = vld [vmem:[#allocation3 + $0x178] sm:$0xff]
        %v253 = vld [vmem:[#allocation3 + $0x180] sm:$0xff]
        %v254 = vld [vmem:[#allocation3 + $0x188] sm:$0xff]
        %v255 = vld [vmem:[#allocation3 + $0x190] sm:$0xff]
        %v256 = vld [vmem:[#allocation3 + $0x198] sm:$0xff]
        %v257 = vld [vmem:[#allocation3 + $0x1a0] sm:$0xff]
        %v258 = vld [vmem:[#allocation3 + $0x1a8] sm:$0xff]
        %v259 = vld [vmem:[#allocation3 + $0x1b0] sm:$0xff]
        %v260 = vld [vmem:[#allocation3 + $0x1b8] sm:$0xff]
        %v261 = vld [vmem:[#allocation3 + $0x1c0] sm:$0xff]
        %v262 = vld [vmem:[#allocation3 + $0x1c8] sm:$0xff]
        %v263 = vld [vmem:[#allocation3 + $0x1d0] sm:$0xff]
        %v264 = vld [vmem:[#allocation3 + $0x1d8] sm:$0xff]
        %v265 = vld [vmem:[#allocation3 + $0x1e0] sm:$0xff]
        %v266 = vld [vmem:[#allocation3 + $0x1e8] sm:$0xff]
        %v267 = vld [vmem:[#allocation3 + $0x1f0] sm:$0xff]
        %v268 = vld [vmem:[#allocation3 + $0x1f8] sm:$0xff]
        %v269 = vld [vmem:[#allocation3 + $0x200] sm:$0xff]
        %v270 = vld [vmem:[#allocation3 + $0x208] sm:$0xff]
        %v271 = vld [vmem:[#allocation3 + $0x210] sm:$0xff]
        %v272 = vld [vmem:[#allocation3 + $0x218] sm:$0xff]
        %v273 = vld [vmem:[#allocation3 + $0x220] sm:$0xff]
        %v274 = vld [vmem:[#allocation3 + $0x228] sm:$0xff]
        %v275 = vld [vmem:[#allocation3 + $0x230] sm:$0xff]
        %v276 = vld [vmem:[#allocation3 + $0x238] sm:$0xff]
        %v277 = vld [vmem:[#allocation3 + $0x240] sm:$0xff]
        %v278 = vld [vmem:[#allocation3 + $0x248] sm:$0xff]
        %v279 = vld [vmem:[#allocation3 + $0x250] sm:$0xff]
        %v280 = vld [vmem:[#allocation3 + $0x258] sm:$0xff]
        %v281 = vld [vmem:[#allocation3 + $0x260] sm:$0xff]
        %v282 = vld [vmem:[#allocation3 + $0x268] sm:$0xff]
        %v283 = vld [vmem:[#allocation3 + $0x270] sm:$0xff]
        %v284 = vld [vmem:[#allocation3 + $0x278] sm:$0xff]
        %v285 = vld [vmem:[#allocation3 + $0x280] sm:$0xff]
        %v286 = vld [vmem:[#allocation3 + $0x288] sm:$0xff]
        %v287 = vld [vmem:[#allocation3 + $0x290] sm:$0xff]
        %v288 = vld [vmem:[#allocation3 + $0x298] sm:$0xff]
        %v289 = vld [vmem:[#allocation3 + $0x2a0] sm:$0xff]
        %v290 = vld [vmem:[#allocation3 + $0x2a8] sm:$0xff]
        %v291 = vld [vmem:[#allocation3 + $0x2b0] sm:$0xff]
        %v292 = vld [vmem:[#allocation3 + $0x2b8] sm:$0xff]
        %v293 = vld [vmem:[#allocation3 + $0x2c0] sm:$0xff]
        %v294 = vld [vmem:[#allocation3 + $0x2c8] sm:$0xff]
        %v295 = vld [vmem:[#allocation3 + $0x2d0] sm:$0xff]
        %v296 = vld [vmem:[#allocation3 + $0x2d8] sm:$0xff]
        %v297 = vld [vmem:[#allocation3 + $0x2e0] sm:$0xff]
        %v298 = vld [vmem:[#allocation3 + $0x2e8] sm:$0xff]
        %v299 = vld [vmem:[#allocation3 + $0x2f0] sm:$0xff]
        %v300 = vld [vmem:[#allocation3 + $0x2f8] sm:$0xff]
        %v301 = vld [vmem:[#allocation3 + $0x300] sm:$0xff]
        %v302 = vld [vmem:[#allocation3 + $0x308] sm:$0xff]
        %v303 = vld [vmem:[#allocation3 + $0x310] sm:$0xff]
        %v304 = vld [vmem:[#allocation3 + $0x318] sm:$0xff]
        %v305 = vld [vmem:[#allocation3 + $0x320] sm:$0xff]
        %v306 = vld [vmem:[#allocation3 + $0x328] sm:$0xff]
        %v307 = vld [vmem:[#allocation3 + $0x330] sm:$0xff]
        %v308 = vld [vmem:[#allocation3 + $0x338] sm:$0xff]
        %v309 = vld [vmem:[#allocation3 + $0x340] sm:$0xff]
        %v310 = vld [vmem:[#allocation3 + $0x348] sm:$0xff]
        %v311 = vld [vmem:[#allocation3 + $0x350] sm:$0xff]
        %v312 = vld [vmem:[#allocation3 + $0x358] sm:$0xff]
        %v313 = vld [vmem:[#allocation3 + $0x360] sm:$0xff]
        %v314 = vld [vmem:[#allocation3 + $0x368] sm:$0xff]
        %v315 = vld [vmem:[#allocation3 + $0x370] sm:$0xff]
        %v316 = vld [vmem:[#allocation3 + $0x378] sm:$0xff]
        %v317 = vld [vmem:[#allocation3 + $0x380] sm:$0xff]
        %v318 = vld [vmem:[#allocation3 + $0x388] sm:$0xff]
        %v319 = vld [vmem:[#allocation3 + $0x390] sm:$0xff]
        %v320 = vld [vmem:[#allocation3 + $0x398] sm:$0xff]
        %v321 = vld [vmem:[#allocation3 + $0x3a0] sm:$0xff]
        %v322 = vld [vmem:[#allocation3 + $0x3a8] sm:$0xff]
        %v323 = vld [vmem:[#allocation3 + $0x3b0] sm:$0xff]
        %v324 = vld [vmem:[#allocation3 + $0x3b8] sm:$0xff]
        %v325 = vld [vmem:[#allocation3 + $0x3c0] sm:$0xff]
        %v326 = vld [vmem:[#allocation3 + $0x3c8] sm:$0xff]
        %v327 = vld [vmem:[#allocation3 + $0x3d0] sm:$0xff]
        %v328 = vld [vmem:[#allocation3 + $0x3d8] sm:$0xff]
        %v329 = vld [vmem:[#allocation3 + $0x3e0] sm:$0xff]
        %v330 = vld [vmem:[#allocation3 + $0x3e8] sm:$0xff]
        %v331 = vld [vmem:[#allocation3 + $0x3f0] sm:$0xff]
        %v332 = vld [vmem:[#allocation3 + $0x3f8] sm:$0xff]
        %v333 = vld [vmem:[#allocation3 + $0x400] sm:$0xff]
        %v334 = vld [vmem:[#allocation3 + $0x408] sm:$0xff]
        %v335 = vld [vmem:[#allocation3 + $0x410] sm:$0xff]
        %v336 = vld [vmem:[#allocation3 + $0x418] sm:$0xff]
        %v337 = vld [vmem:[#allocation3 + $0x420] sm:$0xff]
        %v338 = vld [vmem:[#allocation3 + $0x428] sm:$0xff]
        %v339 = vld [vmem:[#allocation3 + $0x430] sm:$0xff]
        %v340 = vld [vmem:[#allocation3 + $0x438] sm:$0xff]
        %v341 = vld [vmem:[#allocation3 + $0x440] sm:$0xff]
        %v342 = vld [vmem:[#allocation3 + $0x448] sm:$0xff]
        %v343 = vld [vmem:[#allocation3 + $0x450] sm:$0xff]
        %v344 = vld [vmem:[#allocation3 + $0x458] sm:$0xff]
        %v345 = vld [vmem:[#allocation3 + $0x460] sm:$0xff]
        %v346 = vld [vmem:[#allocation3 + $0x468] sm:$0xff]
        %v347 = vld [vmem:[#allocation3 + $0x470] sm:$0xff]
        %v348 = vld [vmem:[#allocation3 + $0x478] sm:$0xff]
        %v349 = vld [vmem:[#allocation3 + $0x480] sm:$0xff]
        %v350 = vld [vmem:[#allocation3 + $0x488] sm:$0xff]
        %v351 = vld [vmem:[#allocation3 + $0x490] sm:$0xff]
        %v352 = vld [vmem:[#allocation3 + $0x498] sm:$0xff]
        %v353 = vld [vmem:[#allocation3 + $0x4a0] sm:$0xff]
        %v354 = vld [vmem:[#allocation3 + $0x4a8] sm:$0xff]
        %v355 = vld [vmem:[#allocation3 + $0x4b0] sm:$0xff]
        %v356 = vld [vmem:[#allocation3 + $0x4b8] sm:$0xff]
        %v357 = vld [vmem:[#allocation3 + $0x4c0] sm:$0xff]
        %v358 = vld [vmem:[#allocation3 + $0x4c8] sm:$0xff]
        %v359 = vld [vmem:[#allocation3 + $0x4d0] sm:$0xff]
        %v360 = vld [vmem:[#allocation3 + $0x4d8] sm:$0xff]
        %v361 = vld [vmem:[#allocation3 + $0x4e0] sm:$0xff]
        %v362 = vld [vmem:[#allocation3 + $0x4e8] sm:$0xff]
        %v363 = vld [vmem:[#allocation3 + $0x4f0] sm:$0xff]
        %v364 = vld [vmem:[#allocation3 + $0x4f8] sm:$0xff]
        %v365 = vld [vmem:[#allocation3 + $0x500] sm:$0xff]
        %v366 = vld [vmem:[#allocation3 + $0x508] sm:$0xff]
        %v367 = vld [vmem:[#allocation3 + $0x510] sm:$0xff]
        %v368 = vld [vmem:[#allocation3 + $0x518] sm:$0xff]
        %v369 = vld [vmem:[#allocation3 + $0x520] sm:$0xff]
        %v370 = vld [vmem:[#allocation3 + $0x528] sm:$0xff]
        %v371 = vld [vmem:[#allocation3 + $0x530] sm:$0xff]
        %v372 = vld [vmem:[#allocation3 + $0x538] sm:$0xff]
        %v373 = vld [vmem:[#allocation3 + $0x540] sm:$0xff]
        %v374 = vld [vmem:[#allocation3 + $0x548] sm:$0xff]
        %v375 = vld [vmem:[#allocation3 + $0x550] sm:$0xff]
        %v376 = vld [vmem:[#allocation3 + $0x558] sm:$0xff]
        %v377 = vld [vmem:[#allocation3 + $0x560] sm:$0xff]
        %v378 = vld [vmem:[#allocation3 + $0x568] sm:$0xff]
        %v379 = vld [vmem:[#allocation3 + $0x570] sm:$0xff]
        %v380 = vld [vmem:[#allocation3 + $0x578] sm:$0xff]
        %v381 = vld [vmem:[#allocation3 + $0x580] sm:$0xff]
        %v382 = vld [vmem:[#allocation3 + $0x588] sm:$0xff]
        %v383 = vld [vmem:[#allocation3 + $0x590] sm:$0xff]
        %v384 = vld [vmem:[#allocation3 + $0x598] sm:$0xff]
        %v385 = vld [vmem:[#allocation3 + $0x5a0] sm:$0xff]
        %v386 = vld [vmem:[#allocation3 + $0x5a8] sm:$0xff]
        %v387 = vld [vmem:[#allocation3 + $0x5b0] sm:$0xff]
        %v388 = vld [vmem:[#allocation3 + $0x5b8] sm:$0xff]
        %v389 = vld [vmem:[#allocation3 + $0x5c0] sm:$0xff]
        %v390 = vld [vmem:[#allocation3 + $0x5c8] sm:$0xff]
        %v391 = vld [vmem:[#allocation3 + $0x5d0] sm:$0xff]
        %v392 = vld [vmem:[#allocation3 + $0x5d8] sm:$0xff]
        %v393 = vld [vmem:[#allocation3 + $0x5e0] sm:$0xff]
        %v394 = vld [vmem:[#allocation3 + $0x5e8] sm:$0xff]
        %v395 = vld [vmem:[#allocation3 + $0x5f0] sm:$0xff]
        %v396 = vld [vmem:[#allocation3 + $0x5f8] sm:$0xff]
        %v397 = vld [vmem:[#allocation3 + $0x600] sm:$0xff]
        %v398 = vld [vmem:[#allocation3 + $0x608] sm:$0xff]
        %v399 = vld [vmem:[#allocation3 + $0x610] sm:$0xff]
        %v400 = vld [vmem:[#allocation3 + $0x618] sm:$0xff]
        %v401 = vld [vmem:[#allocation3 + $0x620] sm:$0xff]
        %v402 = vld [vmem:[#allocation3 + $0x628] sm:$0xff]
        %v403 = vld [vmem:[#allocation3 + $0x630] sm:$0xff]
        %v404 = vld [vmem:[#allocation3 + $0x638] sm:$0xff]
        %v405 = vld [vmem:[#allocation3 + $0x640] sm:$0xff]
        %v406 = vld [vmem:[#allocation3 + $0x648] sm:$0xff]
        %v407 = vld [vmem:[#allocation3 + $0x650] sm:$0xff]
        %v408 = vld [vmem:[#allocation3 + $0x658] sm:$0xff]
        %v409 = vld [vmem:[#allocation3 + $0x660] sm:$0xff]
        %v410 = vld [vmem:[#allocation3 + $0x668] sm:$0xff]
        %v411 = vld [vmem:[#allocation3 + $0x670] sm:$0xff]
        %v412 = vld [vmem:[#allocation3 + $0x678] sm:$0xff]
        %v413 = vld [vmem:[#allocation3 + $0x680] sm:$0xff]
        %v414 = vld [vmem:[#allocation3 + $0x688] sm:$0xff]
        %v415 = vld [vmem:[#allocation3 + $0x690] sm:$0xff]
        %v416 = vld [vmem:[#allocation3 + $0x698] sm:$0xff]
        %v417 = vld [vmem:[#allocation3 + $0x6a0] sm:$0xff]
        %v418 = vld [vmem:[#allocation3 + $0x6a8] sm:$0xff]
        %v419 = vld [vmem:[#allocation3 + $0x6b0] sm:$0xff]
        %v420 = vld [vmem:[#allocation3 + $0x6b8] sm:$0xff]
        %v421 = vld [vmem:[#allocation3 + $0x6c0] sm:$0xff]
        %v422 = vld [vmem:[#allocation3 + $0x6c8] sm:$0xff]
        %v423 = vld [vmem:[#allocation3 + $0x6d0] sm:$0xff]
        %v424 = vld [vmem:[#allocation3 + $0x6d8] sm:$0xff]
        %v425 = vld [vmem:[#allocation3 + $0x6e0] sm:$0xff]
        %v426 = vld [vmem:[#allocation3 + $0x6e8] sm:$0xff]
        %v427 = vld [vmem:[#allocation3 + $0x6f0] sm:$0xff]
        %v428 = vld [vmem:[#allocation3 + $0x6f8] sm:$0xff]
        %v429 = vld [vmem:[#allocation3 + $0x700] sm:$0xff]
        %v430 = vld [vmem:[#allocation3 + $0x708] sm:$0xff]
        %v431 = vld [vmem:[#allocation3 + $0x710] sm:$0xff]
        %v432 = vld [vmem:[#allocation3 + $0x718] sm:$0xff]
        %v433 = vld [vmem:[#allocation3 + $0x720] sm:$0xff]
        %v434 = vld [vmem:[#allocation3 + $0x728] sm:$0xff]
        %v435 = vld [vmem:[#allocation3 + $0x730] sm:$0xff]
        %v436 = vld [vmem:[#allocation3 + $0x738] sm:$0xff]
        %v437 = vld [vmem:[#allocation3 + $0x740] sm:$0xff]
        %v438 = vld [vmem:[#allocation3 + $0x748] sm:$0xff]
        %v439 = vld [vmem:[#allocation3 + $0x750] sm:$0xff]
        %v440 = vld [vmem:[#allocation3 + $0x758] sm:$0xff]
        %v441 = vld [vmem:[#allocation3 + $0x760] sm:$0xff]
        %v442 = vld [vmem:[#allocation3 + $0x768] sm:$0xff]
        %v443 = vld [vmem:[#allocation3 + $0x770] sm:$0xff]
        %v444 = vld [vmem:[#allocation3 + $0x778] sm:$0xff]
        %v445 = vld [vmem:[#allocation3 + $0x780] sm:$0xff]
        %v446 = vld [vmem:[#allocation3 + $0x788] sm:$0xff]
        %v447 = vld [vmem:[#allocation3 + $0x790] sm:$0xff]
        %v448 = vld [vmem:[#allocation3 + $0x798] sm:$0xff]
        %v449 = vld [vmem:[#allocation3 + $0x7a0] sm:$0xff]
        %v450 = vld [vmem:[#allocation3 + $0x7a8] sm:$0xff]
        %v451 = vld [vmem:[#allocation3 + $0x7b0] sm:$0xff]
        %v452 = vld [vmem:[#allocation3 + $0x7b8] sm:$0xff]
        %v453 = vld [vmem:[#allocation3 + $0x7c0] sm:$0xff]
        %v454 = vld [vmem:[#allocation3 + $0x7c8] sm:$0xff]
        %v455 = vld [vmem:[#allocation3 + $0x7d0] sm:$0xff]
        %v456 = vld [vmem:[#allocation3 + $0x7d8] sm:$0xff]
        %v457 = vld [vmem:[#allocation3 + $0x7e0] sm:$0xff]
        %v458 = vld [vmem:[#allocation3 + $0x7e8] sm:$0xff]
        %v459 = vld [vmem:[#allocation3 + $0x7f0] sm:$0xff]
        %v460 = vld [vmem:[#allocation3 + $0x7f8] sm:$0xff]
        %v461 = vld [vmem:[#allocation3 + $0x800] sm:$0xff]
        %v462 = vld [vmem:[#allocation3 + $0x808] sm:$0xff]
        %v463 = vld [vmem:[#allocation3 + $0x810] sm:$0xff]
        %v464 = vld [vmem:[#allocation3 + $0x818] sm:$0xff]
        %v465 = vld [vmem:[#allocation3 + $0x820] sm:$0xff]
        %v466 = vld [vmem:[#allocation3 + $0x828] sm:$0xff]
        %v467 = vld [vmem:[#allocation3 + $0x830] sm:$0xff]
        %v468 = vld [vmem:[#allocation3 + $0x838] sm:$0xff]
        %v469 = vld [vmem:[#allocation3 + $0x840] sm:$0xff]
        %v470 = vld [vmem:[#allocation3 + $0x848] sm:$0xff]
        %v471 = vld [vmem:[#allocation3 + $0x850] sm:$0xff]
        %v472 = vld [vmem:[#allocation3 + $0x858] sm:$0xff]
        %v473 = vld [vmem:[#allocation3 + $0x860] sm:$0xff]
        %v474 = vld [vmem:[#allocation3 + $0x868] sm:$0xff]
        %v475 = vld [vmem:[#allocation3 + $0x870] sm:$0xff]
        %v476 = vld [vmem:[#allocation3 + $0x878] sm:$0xff]
        %v477 = vld [vmem:[#allocation3 + $0x880] sm:$0xff]
        %v478 = vld [vmem:[#allocation3 + $0x888] sm:$0xff]
        %v479 = vld [vmem:[#allocation3 + $0x890] sm:$0xff]
        %v480 = vld [vmem:[#allocation3 + $0x898] sm:$0xff]
        %v481 = vld [vmem:[#allocation3 + $0x8a0] sm:$0xff]
        %v482 = vld [vmem:[#allocation3 + $0x8a8] sm:$0xff]
        %v483 = vld [vmem:[#allocation3 + $0x8b0] sm:$0xff]
        %v484 = vld [vmem:[#allocation3 + $0x8b8] sm:$0xff]
        %v485 = vld [vmem:[#allocation3 + $0x8c0] sm:$0xff]
        %v486 = vld [vmem:[#allocation3 + $0x8c8] sm:$0xff]
        %v487 = vld [vmem:[#allocation3 + $0x8d0] sm:$0xff]
        %v488 = vld [vmem:[#allocation3 + $0x8d8] sm:$0xff]
        %v489 = vld [vmem:[#allocation3 + $0x8e0] sm:$0xff]
        %v490 = vld [vmem:[#allocation3 + $0x8e8] sm:$0xff]
        %v491 = vld [vmem:[#allocation3 + $0x8f0] sm:$0xff]
        %v492 = vld [vmem:[#allocation3 + $0x8f8] sm:$0xff]
        %v493 = vld [vmem:[#allocation3 + $0x900] sm:$0xff]
        %v494 = vld [vmem:[#allocation3 + $0x908] sm:$0xff]
        %v495 = vld [vmem:[#allocation3 + $0x910] sm:$0xff]
        %v496 = vld [vmem:[#allocation3 + $0x918] sm:$0xff]
        %v497 = vld [vmem:[#allocation3 + $0x920] sm:$0xff]
        %v498 = vld [vmem:[#allocation3 + $0x928] sm:$0xff]
        %v499 = vld [vmem:[#allocation3 + $0x930] sm:$0xff]
        %v500 = vld [vmem:[#allocation3 + $0x938] sm:$0xff]
        %v501 = vld [vmem:[#allocation3 + $0x940] sm:$0xff]
        %v502 = vld [vmem:[#allocation3 + $0x948] sm:$0xff]
        %v503 = vld [vmem:[#allocation3 + $0x950] sm:$0xff]
        %v504 = vld [vmem:[#allocation3 + $0x958] sm:$0xff]
        %v505 = vld [vmem:[#allocation3 + $0x960] sm:$0xff]
        %v506 = vld [vmem:[#allocation3 + $0x968] sm:$0xff]
        %v507 = vld [vmem:[#allocation3 + $0x970] sm:$0xff]
        %v508 = vld [vmem:[#allocation3 + $0x978] sm:$0xff]
        %v509 = vld [vmem:[#allocation3 + $0x980] sm:$0xff]
        %v510 = vld [vmem:[#allocation3 + $0x988] sm:$0xff]
        %v511 = vld [vmem:[#allocation3 + $0x990] sm:$0xff]
        %v512 = vld [vmem:[#allocation3 + $0x998] sm:$0xff]
        %v513 = vld [vmem:[#allocation3 + $0x9a0] sm:$0xff]
        %v514 = vld [vmem:[#allocation3 + $0x9a8] sm:$0xff]
        %v515 = vld [vmem:[#allocation3 + $0x9b0] sm:$0xff]
        %v516 = vld [vmem:[#allocation3 + $0x9b8] sm:$0xff]
        %v517 = vld [vmem:[#allocation3 + $0x9c0] sm:$0xff]
        %v518 = vld [vmem:[#allocation3 + $0x9c8] sm:$0xff]
        %v519 = vld [vmem:[#allocation3 + $0x9d0] sm:$0xff]
        %v520 = vld [vmem:[#allocation3 + $0x9d8] sm:$0xff]
        %v521 = vld [vmem:[#allocation3 + $0x9e0] sm:$0xff]
        %v522 = vld [vmem:[#allocation3 + $0x9e8] sm:$0xff]
        %v523 = vld [vmem:[#allocation3 + $0x9f0] sm:$0xff]
        %v524 = vld [vmem:[#allocation3 + $0x9f8] sm:$0xff]
        %v525 = vld [vmem:[#allocation3 + $0xa00] sm:$0xff]
        %v526 = vld [vmem:[#allocation3 + $0xa08] sm:$0xff]
        %v527 = vld [vmem:[#allocation3 + $0xa10] sm:$0xff]
        %v528 = vld [vmem:[#allocation3 + $0xa18] sm:$0xff]
        %v529 = vld [vmem:[#allocation3 + $0xa20] sm:$0xff]
        %v530 = vld [vmem:[#allocation3 + $0xa28] sm:$0xff]
        %v531 = vld [vmem:[#allocation3 + $0xa30] sm:$0xff]
        %v532 = vld [vmem:[#allocation3 + $0xa38] sm:$0xff]
        %v533 = vld [vmem:[#allocation3 + $0xa40] sm:$0xff]
        %v534 = vld [vmem:[#allocation3 + $0xa48] sm:$0xff]
        %v535 = vld [vmem:[#allocation3 + $0xa50] sm:$0xff]
        %v536 = vld [vmem:[#allocation3 + $0xa58] sm:$0xff]
        %v537 = vld [vmem:[#allocation3 + $0xa60] sm:$0xff]
        %v538 = vld [vmem:[#allocation3 + $0xa68] sm:$0xff]
        %v539 = vld [vmem:[#allocation3 + $0xa70] sm:$0xff]
        %v540 = vld [vmem:[#allocation3 + $0xa78] sm:$0xff]
        %v541 = vld [vmem:[#allocation3 + $0xa80] sm:$0xff]
        %v542 = vld [vmem:[#allocation3 + $0xa88] sm:$0xff]
        %v543 = vld [vmem:[#allocation3 + $0xa90] sm:$0xff]
        %v544 = vld [vmem:[#allocation3 + $0xa98] sm:$0xff]
        %v545 = vld [vmem:[#allocation3 + $0xaa0] sm:$0xff]
        %v546 = vld [vmem:[#allocation3 + $0xaa8] sm:$0xff]
        %v547 = vld [vmem:[#allocation3 + $0xab0] sm:$0xff]
        %v548 = vld [vmem:[#allocation3 + $0xab8] sm:$0xff]
        %v549 = vld [vmem:[#allocation3 + $0xac0] sm:$0xff]
        %v550 = vld [vmem:[#allocation3 + $0xac8] sm:$0xff]
        %v551 = vld [vmem:[#allocation3 + $0xad0] sm:$0xff]
        %v552 = vld [vmem:[#allocation3 + $0xad8] sm:$0xff]
        %v553 = vld [vmem:[#allocation3 + $0xae0] sm:$0xff]
        %v554 = vld [vmem:[#allocation3 + $0xae8] sm:$0xff]
        %v555 = vld [vmem:[#allocation3 + $0xaf0] sm:$0xff]
        %v556 = vld [vmem:[#allocation3 + $0xaf8] sm:$0xff]
        %v557 = vld [vmem:[#allocation3 + $0xb00] sm:$0xff]
        %v558 = vld [vmem:[#allocation3 + $0xb08] sm:$0xff]
        %v559 = vld [vmem:[#allocation3 + $0xb10] sm:$0xff]
        %v560 = vld [vmem:[#allocation3 + $0xb18] sm:$0xff]
        %v561 = vld [vmem:[#allocation3 + $0xb20] sm:$0xff]
        %v562 = vld [vmem:[#allocation3 + $0xb28] sm:$0xff]
        %v563 = vld [vmem:[#allocation3 + $0xb30] sm:$0xff]
        %v564 = vld [vmem:[#allocation3 + $0xb38] sm:$0xff]
        %v565 = vld [vmem:[#allocation3 + $0xb40] sm:$0xff]
        %v566 = vld [vmem:[#allocation3 + $0xb48] sm:$0xff]
        %v567 = vld [vmem:[#allocation3 + $0xb50] sm:$0xff]
        %v568 = vld [vmem:[#allocation3 + $0xb58] sm:$0xff]
        %v569 = vld [vmem:[#allocation3 + $0xb60] sm:$0xff]
        %v570 = vld [vmem:[#allocation3 + $0xb68] sm:$0xff]
        %v571 = vld [vmem:[#allocation3 + $0xb70] sm:$0xff]
        %v572 = vld [vmem:[#allocation3 + $0xb78] sm:$0xff]
        %v573 = vld [vmem:[#allocation3 + $0xb80] sm:$0xff]
        %v574 = vld [vmem:[#allocation3 + $0xb88] sm:$0xff]
        %v575 = vld [vmem:[#allocation3 + $0xb90] sm:$0xff]
        %v576 = vld [vmem:[#allocation3 + $0xb98] sm:$0xff]
        %v577 = vld [vmem:[#allocation3 + $0xba0] sm:$0xff]
        %v578 = vld [vmem:[#allocation3 + $0xba8] sm:$0xff]
        %v579 = vld [vmem:[#allocation3 + $0xbb0] sm:$0xff]
        %v580 = vld [vmem:[#allocation3 + $0xbb8] sm:$0xff]
        %v581 = vld [vmem:[#allocation3 + $0xbc0] sm:$0xff]
        %v582 = vld [vmem:[#allocation3 + $0xbc8] sm:$0xff]
        %v583 = vld [vmem:[#allocation3 + $0xbd0] sm:$0xff]
        %v584 = vld [vmem:[#allocation3 + $0xbd8] sm:$0xff]
        %v585 = vld [vmem:[#allocation3 + $0xbe0] sm:$0xff]
        %v586 = vld [vmem:[#allocation3 + $0xbe8] sm:$0xff]
        %v587 = vld [vmem:[#allocation3 + $0xbf0] sm:$0xff]
        %v588 = vld [vmem:[#allocation3 + $0xbf8] sm:$0xff]
        %v589 = vld [vmem:[#allocation3 + $0xc00] sm:$0xff]
        %v590 = vld [vmem:[#allocation3 + $0xc08] sm:$0xff]
        %v591 = vld [vmem:[#allocation3 + $0xc10] sm:$0xff]
        %v592 = vld [vmem:[#allocation3 + $0xc18] sm:$0xff]
        %v593 = vld [vmem:[#allocation3 + $0xc20] sm:$0xff]
        %v594 = vld [vmem:[#allocation3 + $0xc28] sm:$0xff]
        %v595 = vld [vmem:[#allocation3 + $0xc30] sm:$0xff]
        %v596 = vld [vmem:[#allocation3 + $0xc38] sm:$0xff]
        %v597 = vld [vmem:[#allocation3 + $0xc40] sm:$0xff]
        %v598 = vld [vmem:[#allocation3 + $0xc48] sm:$0xff]
        %v599 = vld [vmem:[#allocation3 + $0xc50] sm:$0xff]
        %v600 = vld [vmem:[#allocation3 + $0xc58] sm:$0xff]
        %v601 = vld [vmem:[#allocation3 + $0xc60] sm:$0xff]
        %v602 = vld [vmem:[#allocation3 + $0xc68] sm:$0xff]
        %v603 = vld [vmem:[#allocation3 + $0xc70] sm:$0xff]
        %v604 = vld [vmem:[#allocation3 + $0xc78] sm:$0xff]
        %v605 = vld [vmem:[#allocation3 + $0xc80] sm:$0xff]
        %v606 = vld [vmem:[#allocation3 + $0xc88] sm:$0xff]
        %v607 = vld [vmem:[#allocation3 + $0xc90] sm:$0xff]
        %v608 = vld [vmem:[#allocation3 + $0xc98] sm:$0xff]
        %v609 = vld [vmem:[#allocation3 + $0xca0] sm:$0xff]
        %v610 = vld [vmem:[#allocation3 + $0xca8] sm:$0xff]
        %v611 = vld [vmem:[#allocation3 + $0xcb0] sm:$0xff]
        %v612 = vld [vmem:[#allocation3 + $0xcb8] sm:$0xff]
        %v613 = vld [vmem:[#allocation3 + $0xcc0] sm:$0xff]
        %v614 = vld [vmem:[#allocation3 + $0xcc8] sm:$0xff]
        %v615 = vld [vmem:[#allocation3 + $0xcd0] sm:$0xff]
        %v616 = vld [vmem:[#allocation3 + $0xcd8] sm:$0xff]
        %v617 = vld [vmem:[#allocation3 + $0xce0] sm:$0xff]
        %v618 = vld [vmem:[#allocation3 + $0xce8] sm:$0xff]
        %v619 = vld [vmem:[#allocation3 + $0xcf0] sm:$0xff]
        %v620 = vld [vmem:[#allocation3 + $0xcf8] sm:$0xff]
        %v621 = vld [vmem:[#allocation3 + $0xd00] sm:$0xff]
        %v622 = vld [vmem:[#allocation3 + $0xd08] sm:$0xff]
        %v623 = vld [vmem:[#allocation3 + $0xd10] sm:$0xff]
        %v624 = vld [vmem:[#allocation3 + $0xd18] sm:$0xff]
        %v625 = vld [vmem:[#allocation3 + $0xd20] sm:$0xff]
        %v626 = vld [vmem:[#allocation3 + $0xd28] sm:$0xff]
        %v627 = vld [vmem:[#allocation3 + $0xd30] sm:$0xff]
        %v628 = vld [vmem:[#allocation3 + $0xd38] sm:$0xff]
        %v629 = vld [vmem:[#allocation3 + $0xd40] sm:$0xff]
        %v630 = vld [vmem:[#allocation3 + $0xd48] sm:$0xff]
        %v631 = vld [vmem:[#allocation3 + $0xd50] sm:$0xff]
        %v632 = vld [vmem:[#allocation3 + $0xd58] sm:$0xff]
        %v633 = vld [vmem:[#allocation3 + $0xd60] sm:$0xff]
        %v634 = vld [vmem:[#allocation3 + $0xd68] sm:$0xff]
        %v635 = vld [vmem:[#allocation3 + $0xd70] sm:$0xff]
        %v636 = vld [vmem:[#allocation3 + $0xd78] sm:$0xff]
        %v637 = vld [vmem:[#allocation3 + $0xd80] sm:$0xff]
        %v638 = vld [vmem:[#allocation3 + $0xd88] sm:$0xff]
        %v639 = vld [vmem:[#allocation3 + $0xd90] sm:$0xff]
        %v640 = vld [vmem:[#allocation3 + $0xd98] sm:$0xff]
        %v641 = vld [vmem:[#allocation3 + $0xda0] sm:$0xff]
        %v642 = vld [vmem:[#allocation3 + $0xda8] sm:$0xff]
        %v643 = vld [vmem:[#allocation3 + $0xdb0] sm:$0xff]
        %v644 = vld [vmem:[#allocation3 + $0xdb8] sm:$0xff]
        %v645 = vld [vmem:[#allocation3 + $0xdc0] sm:$0xff]
        %v646 = vld [vmem:[#allocation3 + $0xdc8] sm:$0xff]
        %v647 = vld [vmem:[#allocation3 + $0xdd0] sm:$0xff]
        %v648 = vld [vmem:[#allocation3 + $0xdd8] sm:$0xff]
        %v649 = vld [vmem:[#allocation3 + $0xde0] sm:$0xff]
        %v650 = vld [vmem:[#allocation3 + $0xde8] sm:$0xff]
        %v651 = vld [vmem:[#allocation3 + $0xdf0] sm:$0xff]
        %v652 = vld [vmem:[#allocation3 + $0xdf8] sm:$0xff]
        %v653 = vld [vmem:[#allocation3 + $0xe00] sm:$0xff]
        %v654 = vld [vmem:[#allocation3 + $0xe08] sm:$0xff]
        %v655 = vld [vmem:[#allocation3 + $0xe10] sm:$0xff]
        %v656 = vld [vmem:[#allocation3 + $0xe18] sm:$0xff]
        %v657 = vld [vmem:[#allocation3 + $0xe20] sm:$0xff]
        %v658 = vld [vmem:[#allocation3 + $0xe28] sm:$0xff]
        %v659 = vld [vmem:[#allocation3 + $0xe30] sm:$0xff]
        %v660 = vld [vmem:[#allocation3 + $0xe38] sm:$0xff]
        %v661 = vld [vmem:[#allocation3 + $0xe40] sm:$0xff]
        %v662 = vld [vmem:[#allocation3 + $0xe48] sm:$0xff]
        %v663 = vld [vmem:[#allocation3 + $0xe50] sm:$0xff]
        %v664 = vld [vmem:[#allocation3 + $0xe58] sm:$0xff]
        %v665 = vld [vmem:[#allocation3 + $0xe60] sm:$0xff]
        %v666 = vld [vmem:[#allocation3 + $0xe68] sm:$0xff]
        %v667 = vld [vmem:[#allocation3 + $0xe70] sm:$0xff]
        %v668 = vld [vmem:[#allocation3 + $0xe78] sm:$0xff]
        %v669 = vld [vmem:[#allocation3 + $0xe80] sm:$0xff]
        %v670 = vld [vmem:[#allocation3 + $0xe88] sm:$0xff]
        %v671 = vld [vmem:[#allocation3 + $0xe90] sm:$0xff]
        %v672 = vld [vmem:[#allocation3 + $0xe98] sm:$0xff]
        %v673 = vld [vmem:[#allocation3 + $0xea0] sm:$0xff]
        %v674 = vld [vmem:[#allocation3 + $0xea8] sm:$0xff]
        %v675 = vld [vmem:[#allocation3 + $0xeb0] sm:$0xff]
        %v676 = vld [vmem:[#allocation3 + $0xeb8] sm:$0xff]
        %v677 = vld [vmem:[#allocation3 + $0xec0] sm:$0xff]
        %v678 = vld [vmem:[#allocation3 + $0xec8] sm:$0xff]
        %v679 = vld [vmem:[#allocation3 + $0xed0] sm:$0xff]
        %v680 = vld [vmem:[#allocation3 + $0xed8] sm:$0xff]
        %v681 = vld [vmem:[#allocation3 + $0xee0] sm:$0xff]
        %v682 = vld [vmem:[#allocation3 + $0xee8] sm:$0xff]
        %v683 = vld [vmem:[#allocation3 + $0xef0] sm:$0xff]
        %v684 = vld [vmem:[#allocation3 + $0xef8] sm:$0xff]
        %v685 = vld [vmem:[#allocation3 + $0xf00] sm:$0xff]
        %v686 = vld [vmem:[#allocation3 + $0xf08] sm:$0xff]
        %v687 = vld [vmem:[#allocation3 + $0xf10] sm:$0xff]
        %v688 = vld [vmem:[#allocation3 + $0xf18] sm:$0xff]
        %v689 = vld [vmem:[#allocation3 + $0xf20] sm:$0xff]
        %v690 = vld [vmem:[#allocation3 + $0xf28] sm:$0xff]
        %v691 = vld [vmem:[#allocation3 + $0xf30] sm:$0xff]
        %v692 = vld [vmem:[#allocation3 + $0xf38] sm:$0xff]
        %v693 = vld [vmem:[#allocation3 + $0xf40] sm:$0xff]
        %v694 = vld [vmem:[#allocation3 + $0xf48] sm:$0xff]
        %v695 = vld [vmem:[#allocation3 + $0xf50] sm:$0xff]
        %v696 = vld [vmem:[#allocation3 + $0xf58] sm:$0xff]
        %v697 = vld [vmem:[#allocation3 + $0xf60] sm:$0xff]
        %v698 = vld [vmem:[#allocation3 + $0xf68] sm:$0xff]
        %v699 = vld [vmem:[#allocation3 + $0xf70] sm:$0xff]
        %v700 = vld [vmem:[#allocation3 + $0xf78] sm:$0xff]
        %v701 = vld [vmem:[#allocation3 + $0xf80] sm:$0xff]
        %v702 = vld [vmem:[#allocation3 + $0xf88] sm:$0xff]
        %v703 = vld [vmem:[#allocation3 + $0xf90] sm:$0xff]
        %v704 = vld [vmem:[#allocation3 + $0xf98] sm:$0xff]
        %v705 = vld [vmem:[#allocation3 + $0xfa0] sm:$0xff]
        %v706 = vld [vmem:[#allocation3 + $0xfa8] sm:$0xff]
        %v707 = vld [vmem:[#allocation3 + $0xfb0] sm:$0xff]
        %v708 = vld [vmem:[#allocation3 + $0xfb8] sm:$0xff]
        %v709 = vld [vmem:[#allocation3 + $0xfc0] sm:$0xff]
        %v710 = vld [vmem:[#allocation3 + $0xfc8] sm:$0xff]
        %v711 = vld [vmem:[#allocation3 + $0xfd0] sm:$0xff]
        %v712 = vld [vmem:[#allocation3 + $0xfd8] sm:$0xff]
        %v713 = vld [vmem:[#allocation3 + $0xfe0] sm:$0xff]
        %v714 = vld [vmem:[#allocation3 + $0xfe8] sm:$0xff]
        %v715 = vld [vmem:[#allocation3 + $0xff0] sm:$0xff]
        %v716 = vld [vmem:[#allocation3 + $0xff8] sm:$0xff]
        %v717 = vld [vmem:[%s180] sm:$0xfe]
        %v718 = vld [vmem:[%s180 + $0x8] sm:$0xfe]
        %v719 = vld [vmem:[%s180 + $0x10] sm:$0x1]
        %v720 = vld [vmem:[%s180 + $0x18] sm:$0x1]
        %s721 = scalar_lea.vmem [#allocation3], 4096
        %v722 = vld [vmem:[%s721] sm:$0xff]
        %v723 = vld [vmem:[%s721 + $0x8] sm:$0xff]
        %v724 = vld [vmem:[%s721 + $0x10] sm:$0xff]
        %v725 = vld [vmem:[%s721 + $0x18] sm:$0xff]
        %v726 = vld [vmem:[%s721 + $0x20] sm:$0xff]
        %v727 = vld [vmem:[%s721 + $0x28] sm:$0xff]
        %v728 = vld [vmem:[%s721 + $0x30] sm:$0xff]
        %v729 = vld [vmem:[%s721 + $0x38] sm:$0xff]
        %v730 = vld [vmem:[%s721 + $0x40] sm:$0xff]
        %v731 = vld [vmem:[%s721 + $0x48] sm:$0xff]
        %v732 = vld [vmem:[%s721 + $0x50] sm:$0xff]
        %v733 = vld [vmem:[%s721 + $0x58] sm:$0xff]
        %v734 = vld [vmem:[%s721 + $0x60] sm:$0xff]
        %v735 = vld [vmem:[%s721 + $0x68] sm:$0xff]
        %v736 = vld [vmem:[%s721 + $0x70] sm:$0xff]
        %v737 = vld [vmem:[%s721 + $0x78] sm:$0xff]
        %v738 = vld [vmem:[%s721 + $0x80] sm:$0xff]
        %v739 = vld [vmem:[%s721 + $0x88] sm:$0xff]
        %v740 = vld [vmem:[%s721 + $0x90] sm:$0xff]
        %v741 = vld [vmem:[%s721 + $0x98] sm:$0xff]
        %v742 = vld [vmem:[%s721 + $0xa0] sm:$0xff]
        %v743 = vld [vmem:[%s721 + $0xa8] sm:$0xff]
        %v744 = vld [vmem:[%s721 + $0xb0] sm:$0xff]
        %v745 = vld [vmem:[%s721 + $0xb8] sm:$0xff]
        %v746 = vld [vmem:[%s721 + $0xc0] sm:$0xff]
        %v747 = vld [vmem:[%s721 + $0xc8] sm:$0xff]
        %v748 = vld [vmem:[%s721 + $0xd0] sm:$0xff]
        %v749 = vld [vmem:[%s721 + $0xd8] sm:$0xff]
        %v750 = vld [vmem:[%s721 + $0xe0] sm:$0xff]
        %v751 = vld [vmem:[%s721 + $0xe8] sm:$0xff]
        %v752 = vld [vmem:[%s721 + $0xf0] sm:$0xff]
        %v753 = vld [vmem:[%s721 + $0xf8] sm:$0xff]
        %v754 = vld [vmem:[%s721 + $0x100] sm:$0xff]
        %v755 = vld [vmem:[%s721 + $0x108] sm:$0xff]
        %v756 = vld [vmem:[%s721 + $0x110] sm:$0xff]
        %v757 = vld [vmem:[%s721 + $0x118] sm:$0xff]
        %v758 = vld [vmem:[%s721 + $0x120] sm:$0xff]
        %v759 = vld [vmem:[%s721 + $0x128] sm:$0xff]
        %v760 = vld [vmem:[%s721 + $0x130] sm:$0xff]
        %v761 = vld [vmem:[%s721 + $0x138] sm:$0xff]
        %v762 = vld [vmem:[%s721 + $0x140] sm:$0xff]
        %v763 = vld [vmem:[%s721 + $0x148] sm:$0xff]
        %v764 = vld [vmem:[%s721 + $0x150] sm:$0xff]
        %v765 = vld [vmem:[%s721 + $0x158] sm:$0xff]
        %v766 = vld [vmem:[%s721 + $0x160] sm:$0xff]
        %v767 = vld [vmem:[%s721 + $0x168] sm:$0xff]
        %v768 = vld [vmem:[%s721 + $0x170] sm:$0xff]
        %v769 = vld [vmem:[%s721 + $0x178] sm:$0xff]
        %v770 = vld [vmem:[%s721 + $0x180] sm:$0xff]
        %v771 = vld [vmem:[%s721 + $0x188] sm:$0xff]
        %v772 = vld [vmem:[%s721 + $0x190] sm:$0xff]
        %v773 = vld [vmem:[%s721 + $0x198] sm:$0xff]
        %v774 = vld [vmem:[%s721 + $0x1a0] sm:$0xff]
        %v775 = vld [vmem:[%s721 + $0x1a8] sm:$0xff]
        %v776 = vld [vmem:[%s721 + $0x1b0] sm:$0xff]
        %v777 = vld [vmem:[%s721 + $0x1b8] sm:$0xff]
        %v778 = vld [vmem:[%s721 + $0x1c0] sm:$0xff]
        %v779 = vld [vmem:[%s721 + $0x1c8] sm:$0xff]
        %v780 = vld [vmem:[%s721 + $0x1d0] sm:$0xff]
        %v781 = vld [vmem:[%s721 + $0x1d8] sm:$0xff]
        %v782 = vld [vmem:[%s721 + $0x1e0] sm:$0xff]
        %v783 = vld [vmem:[%s721 + $0x1e8] sm:$0xff]
        %v784 = vld [vmem:[%s721 + $0x1f0] sm:$0xff]
        %v785 = vld [vmem:[%s721 + $0x1f8] sm:$0xff]
        %v786 = vld [vmem:[%s721 + $0x200] sm:$0xff]
        %v787 = vld [vmem:[%s721 + $0x208] sm:$0xff]
        %v788 = vld [vmem:[%s721 + $0x210] sm:$0xff]
        %v789 = vld [vmem:[%s721 + $0x218] sm:$0xff]
        %v790 = vld [vmem:[%s721 + $0x220] sm:$0xff]
        %v791 = vld [vmem:[%s721 + $0x228] sm:$0xff]
        %v792 = vld [vmem:[%s721 + $0x230] sm:$0xff]
        %v793 = vld [vmem:[%s721 + $0x238] sm:$0xff]
        %v794 = vld [vmem:[%s721 + $0x240] sm:$0xff]
        %v795 = vld [vmem:[%s721 + $0x248] sm:$0xff]
        %v796 = vld [vmem:[%s721 + $0x250] sm:$0xff]
        %v797 = vld [vmem:[%s721 + $0x258] sm:$0xff]
        %v798 = vld [vmem:[%s721 + $0x260] sm:$0xff]
        %v799 = vld [vmem:[%s721 + $0x268] sm:$0xff]
        %v800 = vld [vmem:[%s721 + $0x270] sm:$0xff]
        %v801 = vld [vmem:[%s721 + $0x278] sm:$0xff]
        %v802 = vld [vmem:[%s721 + $0x280] sm:$0xff]
        %v803 = vld [vmem:[%s721 + $0x288] sm:$0xff]
        %v804 = vld [vmem:[%s721 + $0x290] sm:$0xff]
        %v805 = vld [vmem:[%s721 + $0x298] sm:$0xff]
        %v806 = vld [vmem:[%s721 + $0x2a0] sm:$0xff]
        %v807 = vld [vmem:[%s721 + $0x2a8] sm:$0xff]
        %v808 = vld [vmem:[%s721 + $0x2b0] sm:$0xff]
        %v809 = vld [vmem:[%s721 + $0x2b8] sm:$0xff]
        %v810 = vld [vmem:[%s721 + $0x2c0] sm:$0xff]
        %v811 = vld [vmem:[%s721 + $0x2c8] sm:$0xff]
        %v812 = vld [vmem:[%s721 + $0x2d0] sm:$0xff]
        %v813 = vld [vmem:[%s721 + $0x2d8] sm:$0xff]
        %v814 = vld [vmem:[%s721 + $0x2e0] sm:$0xff]
        %v815 = vld [vmem:[%s721 + $0x2e8] sm:$0xff]
        %v816 = vld [vmem:[%s721 + $0x2f0] sm:$0xff]
        %v817 = vld [vmem:[%s721 + $0x2f8] sm:$0xff]
        %v818 = vld [vmem:[%s721 + $0x300] sm:$0xff]
        %v819 = vld [vmem:[%s721 + $0x308] sm:$0xff]
        %v820 = vld [vmem:[%s721 + $0x310] sm:$0xff]
        %v821 = vld [vmem:[%s721 + $0x318] sm:$0xff]
        %v822 = vld [vmem:[%s721 + $0x320] sm:$0xff]
        %v823 = vld [vmem:[%s721 + $0x328] sm:$0xff]
        %v824 = vld [vmem:[%s721 + $0x330] sm:$0xff]
        %v825 = vld [vmem:[%s721 + $0x338] sm:$0xff]
        %v826 = vld [vmem:[%s721 + $0x340] sm:$0xff]
        %v827 = vld [vmem:[%s721 + $0x348] sm:$0xff]
        %v828 = vld [vmem:[%s721 + $0x350] sm:$0xff]
        %v829 = vld [vmem:[%s721 + $0x358] sm:$0xff]
        %v830 = vld [vmem:[%s721 + $0x360] sm:$0xff]
        %v831 = vld [vmem:[%s721 + $0x368] sm:$0xff]
        %v832 = vld [vmem:[%s721 + $0x370] sm:$0xff]
        %v833 = vld [vmem:[%s721 + $0x378] sm:$0xff]
        %v834 = vld [vmem:[%s721 + $0x380] sm:$0xff]
        %v835 = vld [vmem:[%s721 + $0x388] sm:$0xff]
        %v836 = vld [vmem:[%s721 + $0x390] sm:$0xff]
        %v837 = vld [vmem:[%s721 + $0x398] sm:$0xff]
        %v838 = vld [vmem:[%s721 + $0x3a0] sm:$0xff]
        %v839 = vld [vmem:[%s721 + $0x3a8] sm:$0xff]
        %v840 = vld [vmem:[%s721 + $0x3b0] sm:$0xff]
        %v841 = vld [vmem:[%s721 + $0x3b8] sm:$0xff]
        %v842 = vld [vmem:[%s721 + $0x3c0] sm:$0xff]
        %v843 = vld [vmem:[%s721 + $0x3c8] sm:$0xff]
        %v844 = vld [vmem:[%s721 + $0x3d0] sm:$0xff]
        %v845 = vld [vmem:[%s721 + $0x3d8] sm:$0xff]
        %v846 = vld [vmem:[%s721 + $0x3e0] sm:$0xff]
        %v847 = vld [vmem:[%s721 + $0x3e8] sm:$0xff]
        %v848 = vld [vmem:[%s721 + $0x3f0] sm:$0xff]
        %v849 = vld [vmem:[%s721 + $0x3f8] sm:$0xff]
        %v850 = vld [vmem:[%s721 + $0x400] sm:$0xff]
        %v851 = vld [vmem:[%s721 + $0x408] sm:$0xff]
        %v852 = vld [vmem:[%s721 + $0x410] sm:$0xff]
        %v853 = vld [vmem:[%s721 + $0x418] sm:$0xff]
        %v854 = vld [vmem:[%s721 + $0x420] sm:$0xff]
        %v855 = vld [vmem:[%s721 + $0x428] sm:$0xff]
        %v856 = vld [vmem:[%s721 + $0x430] sm:$0xff]
        %v857 = vld [vmem:[%s721 + $0x438] sm:$0xff]
        %v858 = vld [vmem:[%s721 + $0x440] sm:$0xff]
        %v859 = vld [vmem:[%s721 + $0x448] sm:$0xff]
        %v860 = vld [vmem:[%s721 + $0x450] sm:$0xff]
        %v861 = vld [vmem:[%s721 + $0x458] sm:$0xff]
        %v862 = vld [vmem:[%s721 + $0x460] sm:$0xff]
        %v863 = vld [vmem:[%s721 + $0x468] sm:$0xff]
        %v864 = vld [vmem:[%s721 + $0x470] sm:$0xff]
        %v865 = vld [vmem:[%s721 + $0x478] sm:$0xff]
        %v866 = vld [vmem:[%s721 + $0x480] sm:$0xff]
        %v867 = vld [vmem:[%s721 + $0x488] sm:$0xff]
        %v868 = vld [vmem:[%s721 + $0x490] sm:$0xff]
        %v869 = vld [vmem:[%s721 + $0x498] sm:$0xff]
        %v870 = vld [vmem:[%s721 + $0x4a0] sm:$0xff]
        %v871 = vld [vmem:[%s721 + $0x4a8] sm:$0xff]
        %v872 = vld [vmem:[%s721 + $0x4b0] sm:$0xff]
        %v873 = vld [vmem:[%s721 + $0x4b8] sm:$0xff]
        %v874 = vld [vmem:[%s721 + $0x4c0] sm:$0xff]
        %v875 = vld [vmem:[%s721 + $0x4c8] sm:$0xff]
        %v876 = vld [vmem:[%s721 + $0x4d0] sm:$0xff]
        %v877 = vld [vmem:[%s721 + $0x4d8] sm:$0xff]
        %v878 = vld [vmem:[%s721 + $0x4e0] sm:$0xff]
        %v879 = vld [vmem:[%s721 + $0x4e8] sm:$0xff]
        %v880 = vld [vmem:[%s721 + $0x4f0] sm:$0xff]
        %v881 = vld [vmem:[%s721 + $0x4f8] sm:$0xff]
        %v882 = vld [vmem:[%s721 + $0x500] sm:$0xff]
        %v883 = vld [vmem:[%s721 + $0x508] sm:$0xff]
        %v884 = vld [vmem:[%s721 + $0x510] sm:$0xff]
        %v885 = vld [vmem:[%s721 + $0x518] sm:$0xff]
        %v886 = vld [vmem:[%s721 + $0x520] sm:$0xff]
        %v887 = vld [vmem:[%s721 + $0x528] sm:$0xff]
        %v888 = vld [vmem:[%s721 + $0x530] sm:$0xff]
        %v889 = vld [vmem:[%s721 + $0x538] sm:$0xff]
        %v890 = vld [vmem:[%s721 + $0x540] sm:$0xff]
        %v891 = vld [vmem:[%s721 + $0x548] sm:$0xff]
        %v892 = vld [vmem:[%s721 + $0x550] sm:$0xff]
        %v893 = vld [vmem:[%s721 + $0x558] sm:$0xff]
        %v894 = vld [vmem:[%s721 + $0x560] sm:$0xff]
        %v895 = vld [vmem:[%s721 + $0x568] sm:$0xff]
        %v896 = vld [vmem:[%s721 + $0x570] sm:$0xff]
        %v897 = vld [vmem:[%s721 + $0x578] sm:$0xff]
        %v898 = vld [vmem:[%s721 + $0x580] sm:$0xff]
        %v899 = vld [vmem:[%s721 + $0x588] sm:$0xff]
        %v900 = vld [vmem:[%s721 + $0x590] sm:$0xff]
        %v901 = vld [vmem:[%s721 + $0x598] sm:$0xff]
        %v902 = vld [vmem:[%s721 + $0x5a0] sm:$0xff]
        %v903 = vld [vmem:[%s721 + $0x5a8] sm:$0xff]
        %v904 = vld [vmem:[%s721 + $0x5b0] sm:$0xff]
        %v905 = vld [vmem:[%s721 + $0x5b8] sm:$0xff]
        %v906 = vld [vmem:[%s721 + $0x5c0] sm:$0xff]
        %v907 = vld [vmem:[%s721 + $0x5c8] sm:$0xff]
        %v908 = vld [vmem:[%s721 + $0x5d0] sm:$0xff]
        %v909 = vld [vmem:[%s721 + $0x5d8] sm:$0xff]
        %v910 = vld [vmem:[%s721 + $0x5e0] sm:$0xff]
        %v911 = vld [vmem:[%s721 + $0x5e8] sm:$0xff]
        %v912 = vld [vmem:[%s721 + $0x5f0] sm:$0xff]
        %v913 = vld [vmem:[%s721 + $0x5f8] sm:$0xff]
        %v914 = vld [vmem:[%s721 + $0x600] sm:$0xff]
        %v915 = vld [vmem:[%s721 + $0x608] sm:$0xff]
        %v916 = vld [vmem:[%s721 + $0x610] sm:$0xff]
        %v917 = vld [vmem:[%s721 + $0x618] sm:$0xff]
        %v918 = vld [vmem:[%s721 + $0x620] sm:$0xff]
        %v919 = vld [vmem:[%s721 + $0x628] sm:$0xff]
        %v920 = vld [vmem:[%s721 + $0x630] sm:$0xff]
        %v921 = vld [vmem:[%s721 + $0x638] sm:$0xff]
        %v922 = vld [vmem:[%s721 + $0x640] sm:$0xff]
        %v923 = vld [vmem:[%s721 + $0x648] sm:$0xff]
        %v924 = vld [vmem:[%s721 + $0x650] sm:$0xff]
        %v925 = vld [vmem:[%s721 + $0x658] sm:$0xff]
        %v926 = vld [vmem:[%s721 + $0x660] sm:$0xff]
        %v927 = vld [vmem:[%s721 + $0x668] sm:$0xff]
        %v928 = vld [vmem:[%s721 + $0x670] sm:$0xff]
        %v929 = vld [vmem:[%s721 + $0x678] sm:$0xff]
        %v930 = vld [vmem:[%s721 + $0x680] sm:$0xff]
        %v931 = vld [vmem:[%s721 + $0x688] sm:$0xff]
        %v932 = vld [vmem:[%s721 + $0x690] sm:$0xff]
        %v933 = vld [vmem:[%s721 + $0x698] sm:$0xff]
        %v934 = vld [vmem:[%s721 + $0x6a0] sm:$0xff]
        %v935 = vld [vmem:[%s721 + $0x6a8] sm:$0xff]
        %v936 = vld [vmem:[%s721 + $0x6b0] sm:$0xff]
        %v937 = vld [vmem:[%s721 + $0x6b8] sm:$0xff]
        %v938 = vld [vmem:[%s721 + $0x6c0] sm:$0xff]
        %v939 = vld [vmem:[%s721 + $0x6c8] sm:$0xff]
        %v940 = vld [vmem:[%s721 + $0x6d0] sm:$0xff]
        %v941 = vld [vmem:[%s721 + $0x6d8] sm:$0xff]
        %v942 = vld [vmem:[%s721 + $0x6e0] sm:$0xff]
        %v943 = vld [vmem:[%s721 + $0x6e8] sm:$0xff]
        %v944 = vld [vmem:[%s721 + $0x6f0] sm:$0xff]
        %v945 = vld [vmem:[%s721 + $0x6f8] sm:$0xff]
        %v946 = vld [vmem:[%s721 + $0x700] sm:$0xff]
        %v947 = vld [vmem:[%s721 + $0x708] sm:$0xff]
        %v948 = vld [vmem:[%s721 + $0x710] sm:$0xff]
        %v949 = vld [vmem:[%s721 + $0x718] sm:$0xff]
        %v950 = vld [vmem:[%s721 + $0x720] sm:$0xff]
        %v951 = vld [vmem:[%s721 + $0x728] sm:$0xff]
        %v952 = vld [vmem:[%s721 + $0x730] sm:$0xff]
        %v953 = vld [vmem:[%s721 + $0x738] sm:$0xff]
        %v954 = vld [vmem:[%s721 + $0x740] sm:$0xff]
        %v955 = vld [vmem:[%s721 + $0x748] sm:$0xff]
        %v956 = vld [vmem:[%s721 + $0x750] sm:$0xff]
        %v957 = vld [vmem:[%s721 + $0x758] sm:$0xff]
        %v958 = vld [vmem:[%s721 + $0x760] sm:$0xff]
        %v959 = vld [vmem:[%s721 + $0x768] sm:$0xff]
        %v960 = vld [vmem:[%s721 + $0x770] sm:$0xff]
        %v961 = vld [vmem:[%s721 + $0x778] sm:$0xff]
        %v962 = vld [vmem:[%s721 + $0x780] sm:$0xff]
        %v963 = vld [vmem:[%s721 + $0x788] sm:$0xff]
        %v964 = vld [vmem:[%s721 + $0x790] sm:$0xff]
        %v965 = vld [vmem:[%s721 + $0x798] sm:$0xff]
        %v966 = vld [vmem:[%s721 + $0x7a0] sm:$0xff]
        %v967 = vld [vmem:[%s721 + $0x7a8] sm:$0xff]
        %v968 = vld [vmem:[%s721 + $0x7b0] sm:$0xff]
        %v969 = vld [vmem:[%s721 + $0x7b8] sm:$0xff]
        %v970 = vld [vmem:[%s721 + $0x7c0] sm:$0xff]
        %v971 = vld [vmem:[%s721 + $0x7c8] sm:$0xff]
        %v972 = vld [vmem:[%s721 + $0x7d0] sm:$0xff]
        %v973 = vld [vmem:[%s721 + $0x7d8] sm:$0xff]
        %v974 = vld [vmem:[%s721 + $0x7e0] sm:$0xff]
        %v975 = vld [vmem:[%s721 + $0x7e8] sm:$0xff]
        %v976 = vld [vmem:[%s721 + $0x7f0] sm:$0xff]
        %v977 = vld [vmem:[%s721 + $0x7f8] sm:$0xff]
        %v978 = vld [vmem:[%s721 + $0x800] sm:$0xff]
        %v979 = vld [vmem:[%s721 + $0x808] sm:$0xff]
        %v980 = vld [vmem:[%s721 + $0x810] sm:$0xff]
        %v981 = vld [vmem:[%s721 + $0x818] sm:$0xff]
        %v982 = vld [vmem:[%s721 + $0x820] sm:$0xff]
        %v983 = vld [vmem:[%s721 + $0x828] sm:$0xff]
        %v984 = vld [vmem:[%s721 + $0x830] sm:$0xff]
        %v985 = vld [vmem:[%s721 + $0x838] sm:$0xff]
        %v986 = vld [vmem:[%s721 + $0x840] sm:$0xff]
        %v987 = vld [vmem:[%s721 + $0x848] sm:$0xff]
        %v988 = vld [vmem:[%s721 + $0x850] sm:$0xff]
        %v989 = vld [vmem:[%s721 + $0x858] sm:$0xff]
        %v990 = vld [vmem:[%s721 + $0x860] sm:$0xff]
        %v991 = vld [vmem:[%s721 + $0x868] sm:$0xff]
        %v992 = vld [vmem:[%s721 + $0x870] sm:$0xff]
        %v993 = vld [vmem:[%s721 + $0x878] sm:$0xff]
        %v994 = vld [vmem:[%s721 + $0x880] sm:$0xff]
        %v995 = vld [vmem:[%s721 + $0x888] sm:$0xff]
        %v996 = vld [vmem:[%s721 + $0x890] sm:$0xff]
        %v997 = vld [vmem:[%s721 + $0x898] sm:$0xff]
        %v998 = vld [vmem:[%s721 + $0x8a0] sm:$0xff]
        %v999 = vld [vmem:[%s721 + $0x8a8] sm:$0xff]
        %v1000 = vld [vmem:[%s721 + $0x8b0] sm:$0xff]
        %v1001 = vld [vmem:[%s721 + $0x8b8] sm:$0xff]
        %v1002 = vld [vmem:[%s721 + $0x8c0] sm:$0xff]
        %v1003 = vld [vmem:[%s721 + $0x8c8] sm:$0xff]
        %v1004 = vld [vmem:[%s721 + $0x8d0] sm:$0xff]
        %v1005 = vld [vmem:[%s721 + $0x8d8] sm:$0xff]
        %v1006 = vld [vmem:[%s721 + $0x8e0] sm:$0xff]
        %v1007 = vld [vmem:[%s721 + $0x8e8] sm:$0xff]
        %v1008 = vld [vmem:[%s721 + $0x8f0] sm:$0xff]
        %v1009 = vld [vmem:[%s721 + $0x8f8] sm:$0xff]
        %v1010 = vld [vmem:[%s721 + $0x900] sm:$0xff]
        %v1011 = vld [vmem:[%s721 + $0x908] sm:$0xff]
        %v1012 = vld [vmem:[%s721 + $0x910] sm:$0xff]
        %v1013 = vld [vmem:[%s721 + $0x918] sm:$0xff]
        %v1014 = vld [vmem:[%s721 + $0x920] sm:$0xff]
        %v1015 = vld [vmem:[%s721 + $0x928] sm:$0xff]
        %v1016 = vld [vmem:[%s721 + $0x930] sm:$0xff]
        %v1017 = vld [vmem:[%s721 + $0x938] sm:$0xff]
        %v1018 = vld [vmem:[%s721 + $0x940] sm:$0xff]
        %v1019 = vld [vmem:[%s721 + $0x948] sm:$0xff]
        %v1020 = vld [vmem:[%s721 + $0x950] sm:$0xff]
        %v1021 = vld [vmem:[%s721 + $0x958] sm:$0xff]
        %v1022 = vld [vmem:[%s721 + $0x960] sm:$0xff]
        %v1023 = vld [vmem:[%s721 + $0x968] sm:$0xff]
        %v1024 = vld [vmem:[%s721 + $0x970] sm:$0xff]
        %v1025 = vld [vmem:[%s721 + $0x978] sm:$0xff]
        %v1026 = vld [vmem:[%s721 + $0x980] sm:$0xff]
        %v1027 = vld [vmem:[%s721 + $0x988] sm:$0xff]
        %v1028 = vld [vmem:[%s721 + $0x990] sm:$0xff]
        %v1029 = vld [vmem:[%s721 + $0x998] sm:$0xff]
        %v1030 = vld [vmem:[%s721 + $0x9a0] sm:$0xff]
        %v1031 = vld [vmem:[%s721 + $0x9a8] sm:$0xff]
        %v1032 = vld [vmem:[%s721 + $0x9b0] sm:$0xff]
        %v1033 = vld [vmem:[%s721 + $0x9b8] sm:$0xff]
        %v1034 = vld [vmem:[%s721 + $0x9c0] sm:$0xff]
        %v1035 = vld [vmem:[%s721 + $0x9c8] sm:$0xff]
        %v1036 = vld [vmem:[%s721 + $0x9d0] sm:$0xff]
        %v1037 = vld [vmem:[%s721 + $0x9d8] sm:$0xff]
        %v1038 = vld [vmem:[%s721 + $0x9e0] sm:$0xff]
        %v1039 = vld [vmem:[%s721 + $0x9e8] sm:$0xff]
        %v1040 = vld [vmem:[%s721 + $0x9f0] sm:$0xff]
        %v1041 = vld [vmem:[%s721 + $0x9f8] sm:$0xff]
        %v1042 = vld [vmem:[%s721 + $0xa00] sm:$0xff]
        %v1043 = vld [vmem:[%s721 + $0xa08] sm:$0xff]
        %v1044 = vld [vmem:[%s721 + $0xa10] sm:$0xff]
        %v1045 = vld [vmem:[%s721 + $0xa18] sm:$0xff]
        %v1046 = vld [vmem:[%s721 + $0xa20] sm:$0xff]
        %v1047 = vld [vmem:[%s721 + $0xa28] sm:$0xff]
        %v1048 = vld [vmem:[%s721 + $0xa30] sm:$0xff]
        %v1049 = vld [vmem:[%s721 + $0xa38] sm:$0xff]
        %v1050 = vld [vmem:[%s721 + $0xa40] sm:$0xff]
        %v1051 = vld [vmem:[%s721 + $0xa48] sm:$0xff]
        %v1052 = vld [vmem:[%s721 + $0xa50] sm:$0xff]
        %v1053 = vld [vmem:[%s721 + $0xa58] sm:$0xff]
        %v1054 = vld [vmem:[%s721 + $0xa60] sm:$0xff]
        %v1055 = vld [vmem:[%s721 + $0xa68] sm:$0xff]
        %v1056 = vld [vmem:[%s721 + $0xa70] sm:$0xff]
        %v1057 = vld [vmem:[%s721 + $0xa78] sm:$0xff]
        %v1058 = vld [vmem:[%s721 + $0xa80] sm:$0xff]
        %v1059 = vld [vmem:[%s721 + $0xa88] sm:$0xff]
        %v1060 = vld [vmem:[%s721 + $0xa90] sm:$0xff]
        %v1061 = vld [vmem:[%s721 + $0xa98] sm:$0xff]
        %v1062 = vld [vmem:[%s721 + $0xaa0] sm:$0xff]
        %v1063 = vld [vmem:[%s721 + $0xaa8] sm:$0xff]
        %v1064 = vld [vmem:[%s721 + $0xab0] sm:$0xff]
        %v1065 = vld [vmem:[%s721 + $0xab8] sm:$0xff]
        %v1066 = vld [vmem:[%s721 + $0xac0] sm:$0xff]
        %v1067 = vld [vmem:[%s721 + $0xac8] sm:$0xff]
        %v1068 = vld [vmem:[%s721 + $0xad0] sm:$0xff]
        %v1069 = vld [vmem:[%s721 + $0xad8] sm:$0xff]
        %v1070 = vld [vmem:[%s721 + $0xae0] sm:$0xff]
        %v1071 = vld [vmem:[%s721 + $0xae8] sm:$0xff]
        %v1072 = vld [vmem:[%s721 + $0xaf0] sm:$0xff]
        %v1073 = vld [vmem:[%s721 + $0xaf8] sm:$0xff]
        %v1074 = vld [vmem:[%s721 + $0xb00] sm:$0xff]
        %v1075 = vld [vmem:[%s721 + $0xb08] sm:$0xff]
        %v1076 = vld [vmem:[%s721 + $0xb10] sm:$0xff]
        %v1077 = vld [vmem:[%s721 + $0xb18] sm:$0xff]
        %v1078 = vld [vmem:[%s721 + $0xb20] sm:$0xff]
        %v1079 = vld [vmem:[%s721 + $0xb28] sm:$0xff]
        %v1080 = vld [vmem:[%s721 + $0xb30] sm:$0xff]
        %v1081 = vld [vmem:[%s721 + $0xb38] sm:$0xff]
        %v1082 = vld [vmem:[%s721 + $0xb40] sm:$0xff]
        %v1083 = vld [vmem:[%s721 + $0xb48] sm:$0xff]
        %v1084 = vld [vmem:[%s721 + $0xb50] sm:$0xff]
        %v1085 = vld [vmem:[%s721 + $0xb58] sm:$0xff]
        %v1086 = vld [vmem:[%s721 + $0xb60] sm:$0xff]
        %v1087 = vld [vmem:[%s721 + $0xb68] sm:$0xff]
        %v1088 = vld [vmem:[%s721 + $0xb70] sm:$0xff]
        %v1089 = vld [vmem:[%s721 + $0xb78] sm:$0xff]
        %v1090 = vld [vmem:[%s721 + $0xb80] sm:$0xff]
        %v1091 = vld [vmem:[%s721 + $0xb88] sm:$0xff]
        %v1092 = vld [vmem:[%s721 + $0xb90] sm:$0xff]
        %v1093 = vld [vmem:[%s721 + $0xb98] sm:$0xff]
        %v1094 = vld [vmem:[%s721 + $0xba0] sm:$0xff]
        %v1095 = vld [vmem:[%s721 + $0xba8] sm:$0xff]
        %v1096 = vld [vmem:[%s721 + $0xbb0] sm:$0xff]
        %v1097 = vld [vmem:[%s721 + $0xbb8] sm:$0xff]
        %v1098 = vld [vmem:[%s721 + $0xbc0] sm:$0xff]
        %v1099 = vld [vmem:[%s721 + $0xbc8] sm:$0xff]
        %v1100 = vld [vmem:[%s721 + $0xbd0] sm:$0xff]
        %v1101 = vld [vmem:[%s721 + $0xbd8] sm:$0xff]
        %v1102 = vld [vmem:[%s721 + $0xbe0] sm:$0xff]
        %v1103 = vld [vmem:[%s721 + $0xbe8] sm:$0xff]
        %v1104 = vld [vmem:[%s721 + $0xbf0] sm:$0xff]
        %v1105 = vld [vmem:[%s721 + $0xbf8] sm:$0xff]
        %v1106 = vld [vmem:[%s721 + $0xc00] sm:$0xff]
        %v1107 = vld [vmem:[%s721 + $0xc08] sm:$0xff]
        %v1108 = vld [vmem:[%s721 + $0xc10] sm:$0xff]
        %v1109 = vld [vmem:[%s721 + $0xc18] sm:$0xff]
        %v1110 = vld [vmem:[%s721 + $0xc20] sm:$0xff]
        %v1111 = vld [vmem:[%s721 + $0xc28] sm:$0xff]
        %v1112 = vld [vmem:[%s721 + $0xc30] sm:$0xff]
        %v1113 = vld [vmem:[%s721 + $0xc38] sm:$0xff]
        %v1114 = vld [vmem:[%s721 + $0xc40] sm:$0xff]
        %v1115 = vld [vmem:[%s721 + $0xc48] sm:$0xff]
        %v1116 = vld [vmem:[%s721 + $0xc50] sm:$0xff]
        %v1117 = vld [vmem:[%s721 + $0xc58] sm:$0xff]
        %v1118 = vld [vmem:[%s721 + $0xc60] sm:$0xff]
        %v1119 = vld [vmem:[%s721 + $0xc68] sm:$0xff]
        %v1120 = vld [vmem:[%s721 + $0xc70] sm:$0xff]
        %v1121 = vld [vmem:[%s721 + $0xc78] sm:$0xff]
        %v1122 = vld [vmem:[%s721 + $0xc80] sm:$0xff]
        %v1123 = vld [vmem:[%s721 + $0xc88] sm:$0xff]
        %v1124 = vld [vmem:[%s721 + $0xc90] sm:$0xff]
        %v1125 = vld [vmem:[%s721 + $0xc98] sm:$0xff]
        %v1126 = vld [vmem:[%s721 + $0xca0] sm:$0xff]
        %v1127 = vld [vmem:[%s721 + $0xca8] sm:$0xff]
        %v1128 = vld [vmem:[%s721 + $0xcb0] sm:$0xff]
        %v1129 = vld [vmem:[%s721 + $0xcb8] sm:$0xff]
        %v1130 = vld [vmem:[%s721 + $0xcc0] sm:$0xff]
        %v1131 = vld [vmem:[%s721 + $0xcc8] sm:$0xff]
        %v1132 = vld [vmem:[%s721 + $0xcd0] sm:$0xff]
        %v1133 = vld [vmem:[%s721 + $0xcd8] sm:$0xff]
        %v1134 = vld [vmem:[%s721 + $0xce0] sm:$0xff]
        %v1135 = vld [vmem:[%s721 + $0xce8] sm:$0xff]
        %v1136 = vld [vmem:[%s721 + $0xcf0] sm:$0xff]
        %v1137 = vld [vmem:[%s721 + $0xcf8] sm:$0xff]
        %v1138 = vld [vmem:[%s721 + $0xd00] sm:$0xff]
        %v1139 = vld [vmem:[%s721 + $0xd08] sm:$0xff]
        %v1140 = vld [vmem:[%s721 + $0xd10] sm:$0xff]
        %v1141 = vld [vmem:[%s721 + $0xd18] sm:$0xff]
        %v1142 = vld [vmem:[%s721 + $0xd20] sm:$0xff]
        %v1143 = vld [vmem:[%s721 + $0xd28] sm:$0xff]
        %v1144 = vld [vmem:[%s721 + $0xd30] sm:$0xff]
        %v1145 = vld [vmem:[%s721 + $0xd38] sm:$0xff]
        %v1146 = vld [vmem:[%s721 + $0xd40] sm:$0xff]
        %v1147 = vld [vmem:[%s721 + $0xd48] sm:$0xff]
        %v1148 = vld [vmem:[%s721 + $0xd50] sm:$0xff]
        %v1149 = vld [vmem:[%s721 + $0xd58] sm:$0xff]
        %v1150 = vld [vmem:[%s721 + $0xd60] sm:$0xff]
        %v1151 = vld [vmem:[%s721 + $0xd68] sm:$0xff]
        %v1152 = vld [vmem:[%s721 + $0xd70] sm:$0xff]
        %v1153 = vld [vmem:[%s721 + $0xd78] sm:$0xff]
        %v1154 = vld [vmem:[%s721 + $0xd80] sm:$0xff]
        %v1155 = vld [vmem:[%s721 + $0xd88] sm:$0xff]
        %v1156 = vld [vmem:[%s721 + $0xd90] sm:$0xff]
        %v1157 = vld [vmem:[%s721 + $0xd98] sm:$0xff]
        %v1158 = vld [vmem:[%s721 + $0xda0] sm:$0xff]
        %v1159 = vld [vmem:[%s721 + $0xda8] sm:$0xff]
        %v1160 = vld [vmem:[%s721 + $0xdb0] sm:$0xff]
        %v1161 = vld [vmem:[%s721 + $0xdb8] sm:$0xff]
        %v1162 = vld [vmem:[%s721 + $0xdc0] sm:$0xff]
        %v1163 = vld [vmem:[%s721 + $0xdc8] sm:$0xff]
        %v1164 = vld [vmem:[%s721 + $0xdd0] sm:$0xff]
        %v1165 = vld [vmem:[%s721 + $0xdd8] sm:$0xff]
        %v1166 = vld [vmem:[%s721 + $0xde0] sm:$0xff]
        %v1167 = vld [vmem:[%s721 + $0xde8] sm:$0xff]
        %v1168 = vld [vmem:[%s721 + $0xdf0] sm:$0xff]
        %v1169 = vld [vmem:[%s721 + $0xdf8] sm:$0xff]
        %v1170 = vld [vmem:[%s721 + $0xe00] sm:$0xff]
        %v1171 = vld [vmem:[%s721 + $0xe08] sm:$0xff]
        %v1172 = vld [vmem:[%s721 + $0xe10] sm:$0xff]
        %v1173 = vld [vmem:[%s721 + $0xe18] sm:$0xff]
        %v1174 = vld [vmem:[%s721 + $0xe20] sm:$0xff]
        %v1175 = vld [vmem:[%s721 + $0xe28] sm:$0xff]
        %v1176 = vld [vmem:[%s721 + $0xe30] sm:$0xff]
        %v1177 = vld [vmem:[%s721 + $0xe38] sm:$0xff]
        %v1178 = vld [vmem:[%s721 + $0xe40] sm:$0xff]
        %v1179 = vld [vmem:[%s721 + $0xe48] sm:$0xff]
        %v1180 = vld [vmem:[%s721 + $0xe50] sm:$0xff]
        %v1181 = vld [vmem:[%s721 + $0xe58] sm:$0xff]
        %v1182 = vld [vmem:[%s721 + $0xe60] sm:$0xff]
        %v1183 = vld [vmem:[%s721 + $0xe68] sm:$0xff]
        %v1184 = vld [vmem:[%s721 + $0xe70] sm:$0xff]
        %v1185 = vld [vmem:[%s721 + $0xe78] sm:$0xff]
        %v1186 = vld [vmem:[%s721 + $0xe80] sm:$0xff]
        %v1187 = vld [vmem:[%s721 + $0xe88] sm:$0xff]
        %v1188 = vld [vmem:[%s721 + $0xe90] sm:$0xff]
        %v1189 = vld [vmem:[%s721 + $0xe98] sm:$0xff]
        %v1190 = vld [vmem:[%s721 + $0xea0] sm:$0xff]
        %v1191 = vld [vmem:[%s721 + $0xea8] sm:$0xff]
        %v1192 = vld [vmem:[%s721 + $0xeb0] sm:$0xff]
        %v1193 = vld [vmem:[%s721 + $0xeb8] sm:$0xff]
        %v1194 = vld [vmem:[%s721 + $0xec0] sm:$0xff]
        %v1195 = vld [vmem:[%s721 + $0xec8] sm:$0xff]
        %v1196 = vld [vmem:[%s721 + $0xed0] sm:$0xff]
        %v1197 = vld [vmem:[%s721 + $0xed8] sm:$0xff]
        %v1198 = vld [vmem:[%s721 + $0xee0] sm:$0xff]
        %v1199 = vld [vmem:[%s721 + $0xee8] sm:$0xff]
        %v1200 = vld [vmem:[%s721 + $0xef0] sm:$0xff]
        %v1201 = vld [vmem:[%s721 + $0xef8] sm:$0xff]
        %v1202 = vld [vmem:[%s721 + $0xf00] sm:$0xff]
        %v1203 = vld [vmem:[%s721 + $0xf08] sm:$0xff]
        %v1204 = vld [vmem:[%s721 + $0xf10] sm:$0xff]
        %v1205 = vld [vmem:[%s721 + $0xf18] sm:$0xff]
        %v1206 = vld [vmem:[%s721 + $0xf20] sm:$0xff]
        %v1207 = vld [vmem:[%s721 + $0xf28] sm:$0xff]
        %v1208 = vld [vmem:[%s721 + $0xf30] sm:$0xff]
        %v1209 = vld [vmem:[%s721 + $0xf38] sm:$0xff]
        %v1210 = vld [vmem:[%s721 + $0xf40] sm:$0xff]
        %v1211 = vld [vmem:[%s721 + $0xf48] sm:$0xff]
        %v1212 = vld [vmem:[%s721 + $0xf50] sm:$0xff]
        %v1213 = vld [vmem:[%s721 + $0xf58] sm:$0xff]
        %v1214 = vld [vmem:[%s721 + $0xf60] sm:$0xff]
        %v1215 = vld [vmem:[%s721 + $0xf68] sm:$0xff]
        %v1216 = vld [vmem:[%s721 + $0xf70] sm:$0xff]
        %v1217 = vld [vmem:[%s721 + $0xf78] sm:$0xff]
        %v1218 = vld [vmem:[%s721 + $0xf80] sm:$0xff]
        %v1219 = vld [vmem:[%s721 + $0xf88] sm:$0xff]
        %v1220 = vld [vmem:[%s721 + $0xf90] sm:$0xff]
        %v1221 = vld [vmem:[%s721 + $0xf98] sm:$0xff]
        %v1222 = vld [vmem:[%s721 + $0xfa0] sm:$0xff]
        %v1223 = vld [vmem:[%s721 + $0xfa8] sm:$0xff]
        %v1224 = vld [vmem:[%s721 + $0xfb0] sm:$0xff]
        %v1225 = vld [vmem:[%s721 + $0xfb8] sm:$0xff]
        %v1226 = vld [vmem:[%s721 + $0xfc0] sm:$0xff]
        %v1227 = vld [vmem:[%s721 + $0xfc8] sm:$0xff]
        %v1228 = vld [vmem:[%s721 + $0xfd0] sm:$0xff]
        %v1229 = vld [vmem:[%s721 + $0xfd8] sm:$0xff]
        %v1230 = vld [vmem:[%s721 + $0xfe0] sm:$0xff]
        %v1231 = vld [vmem:[%s721 + $0xfe8] sm:$0xff]
        %v1232 = vld [vmem:[%s721 + $0xff0] sm:$0xff]
        %v1233 = vld [vmem:[%s721 + $0xff8] sm:$0xff]
        %vm1238 = vcmask 1046528
        %v1239 = vrot.slane %v717, 1
        %v1240 = vrot.slane %v719, 1
        %v1241 = vsel %vm1238, %v1239, %v1240
        %v1242 = vrot.slane %v718, 1
        %v1243 = vrot.slane %v720, 1
        %v1244 = vsel %vm1238, %v1242, %v1243
        %1247 = vmatprep.subr.mxu0 %v723
        %1248 = vmatpush1.msra.mxu0 %v722
        %1249 = vmatprep.subr.mxu0 %v739
        %1250 = vmatpush1.msra.mxu0 %v738
        %1251 = vmatprep.subr.mxu0 %v755
        %1252 = vmatpush1.msra.mxu0 %v754
        %1253 = vmatprep.subr.mxu0 %v771
        %1254 = vmatpush1.msra.mxu0 %v770
        %1255 = vmatprep.subr.mxu0 %v787
        %1256 = vmatpush1.msra.mxu0 %v786
        %1257 = vmatprep.subr.mxu0 %v803
        %1258 = vmatpush1.msra.mxu0 %v802
        %1259 = vmatprep.subr.mxu0 %v819
        %1260 = vmatpush1.msra.mxu0 %v818
        %1261 = vmatprep.subr.mxu0 %v835
        %1262 = vmatpush1.msra.mxu0 %v834
        %1263 = vmatprep.subr.mxu0 %v851
        %1264 = vmatpush1.msra.mxu0 %v850
        %1265 = vmatprep.subr.mxu0 %v867
        %1266 = vmatpush1.msra.mxu0 %v866
        %1267 = vmatprep.subr.mxu0 %v883
        %1268 = vmatpush1.msra.mxu0 %v882
        %1269 = vmatprep.subr.mxu0 %v899
        %1270 = vmatpush1.msra.mxu0 %v898
        %1271 = vmatprep.subr.mxu0 %v915
        %1272 = vmatpush1.msra.mxu0 %v914
        %1273 = vmatprep.subr.mxu0 %v931
        %1274 = vmatpush1.msra.mxu0 %v930
        %1275 = vmatprep.subr.mxu0 %v947
        %1276 = vmatpush1.msra.mxu0 %v946
        %1277 = vmatprep.subr.mxu0 %v963
        %1278 = vmatpush1.msra.mxu0 %v962
        %1279 = vmatprep.subr.mxu0 %v979
        %1280 = vmatpush1.msra.mxu0 %v978
        %1281 = vmatprep.subr.mxu0 %v995
        %1282 = vmatpush1.msra.mxu0 %v994
        %1283 = vmatprep.subr.mxu0 %v1011
        %1284 = vmatpush1.msra.mxu0 %v1010
        %1285 = vmatprep.subr.mxu0 %v1027
        %1286 = vmatpush1.msra.mxu0 %v1026
        %1287 = vmatprep.subr.mxu0 %v1043
        %1288 = vmatpush1.msra.mxu0 %v1042
        %1289 = vmatprep.subr.mxu0 %v1059
        %1290 = vmatpush1.msra.mxu0 %v1058
        %1291 = vmatprep.subr.mxu0 %v1075
        %1292 = vmatpush1.msra.mxu0 %v1074
        %1293 = vmatprep.subr.mxu0 %v1091
        %1294 = vmatpush1.msra.mxu0 %v1090
        %1295 = vmatprep.subr.mxu0 %v1107
        %1296 = vmatpush1.msra.mxu0 %v1106
        %1297 = vmatprep.subr.mxu0 %v1123
        %1298 = vmatpush1.msra.mxu0 %v1122
        %1299 = vmatprep.subr.mxu0 %v1139
        %1300 = vmatpush1.msra.mxu0 %v1138
        %1301 = vmatprep.subr.mxu0 %v1155
        %1302 = vmatpush1.msra.mxu0 %v1154
        %1303 = vmatprep.subr.mxu0 %v1171
        %1304 = vmatpush1.msra.mxu0 %v1170
        %1305 = vmatprep.subr.mxu0 %v1187
        %1306 = vmatpush1.msra.mxu0 %v1186
        %1307 = vmatprep.subr.mxu0 %v1203
        %1308 = vmatpush1.msra.mxu0 %v1202
        %1309 = vmatprep.subr.mxu0 %v1219
        %1310 = vmatpush1.msra.mxu0 %v1218
        %1311 = vmatprep.mubr.f32.mxu0 %v1244
        %1312 = vmatmul.mubr.f32.gmra.mrb[0].mxu0 %v1241
        %v1313 = vpop.f32.mrb[0].mxu0
        %v1314 = vadd.f32 0.0, %v1313
        %v1315 = vpop.f32.mrb[0].mxu0
        %v1316 = vadd.f32 0.0, %v1315
        %1317 = vdwg.mxu0
        %1318 = vmatprep.subr.mxu0 %v725
        %1319 = vmatpush1.msra.mxu0 %v724
        %1320 = vmatprep.subr.mxu0 %v741
        %1321 = vmatpush1.msra.mxu0 %v740
        %1322 = vmatprep.subr.mxu0 %v757
        %1323 = vmatpush1.msra.mxu0 %v756
        %1324 = vmatprep.subr.mxu0 %v773
        %1325 = vmatpush1.msra.mxu0 %v772
        %1326 = vmatprep.subr.mxu0 %v789
        %1327 = vmatpush1.msra.mxu0 %v788
        %1328 = vmatprep.subr.mxu0 %v805
        %1329 = vmatpush1.msra.mxu0 %v804
        %1330 = vmatprep.subr.mxu0 %v821
        %1331 = vmatpush1.msra.mxu0 %v820
        %1332 = vmatprep.subr.mxu0 %v837
        %1333 = vmatpush1.msra.mxu0 %v836
        %1334 = vmatprep.subr.mxu0 %v853
        %1335 = vmatpush1.msra.mxu0 %v852
        %1336 = vmatprep.subr.mxu0 %v869
        %1337 = vmatpush1.msra.mxu0 %v868
        %1338 = vmatprep.subr.mxu0 %v885
        %1339 = vmatpush1.msra.mxu0 %v884
        %1340 = vmatprep.subr.mxu0 %v901
        %1341 = vmatpush1.msra.mxu0 %v900
        %1342 = vmatprep.subr.mxu0 %v917
        %1343 = vmatpush1.msra.mxu0 %v916
        %1344 = vmatprep.subr.mxu0 %v933
        %1345 = vmatpush1.msra.mxu0 %v932
        %1346 = vmatprep.subr.mxu0 %v949
        %1347 = vmatpush1.msra.mxu0 %v948
        %1348 = vmatprep.subr.mxu0 %v965
        %1349 = vmatpush1.msra.mxu0 %v964
        %1350 = vmatprep.subr.mxu0 %v981
        %1351 = vmatpush1.msra.mxu0 %v980
        %1352 = vmatprep.subr.mxu0 %v997
        %1353 = vmatpush1.msra.mxu0 %v996
        %1354 = vmatprep.subr.mxu0 %v1013
        %1355 = vmatpush1.msra.mxu0 %v1012
        %1356 = vmatprep.subr.mxu0 %v1029
        %1357 = vmatpush1.msra.mxu0 %v1028
        %1358 = vmatprep.subr.mxu0 %v1045
        %1359 = vmatpush1.msra.mxu0 %v1044
        %1360 = vmatprep.subr.mxu0 %v1061
        %1361 = vmatpush1.msra.mxu0 %v1060
        %1362 = vmatprep.subr.mxu0 %v1077
        %1363 = vmatpush1.msra.mxu0 %v1076
        %1364 = vmatprep.subr.mxu0 %v1093
        %1365 = vmatpush1.msra.mxu0 %v1092
        %1366 = vmatprep.subr.mxu0 %v1109
        %1367 = vmatpush1.msra.mxu0 %v1108
        %1368 = vmatprep.subr.mxu0 %v1125
        %1369 = vmatpush1.msra.mxu0 %v1124
        %1370 = vmatprep.subr.mxu0 %v1141
        %1371 = vmatpush1.msra.mxu0 %v1140
        %1372 = vmatprep.subr.mxu0 %v1157
        %1373 = vmatpush1.msra.mxu0 %v1156
        %1374 = vmatprep.subr.mxu0 %v1173
        %1375 = vmatpush1.msra.mxu0 %v1172
        %1376 = vmatprep.subr.mxu0 %v1189
        %1377 = vmatpush1.msra.mxu0 %v1188
        %1378 = vmatprep.subr.mxu0 %v1205
        %1379 = vmatpush1.msra.mxu0 %v1204
        %1380 = vmatprep.subr.mxu0 %v1221
        %1381 = vmatpush1.msra.mxu0 %v1220
        %1382 = vmatprep.mubr.f32.mxu0 %v1244
        %1383 = vmatmul.mubr.f32.gmra.mrb[0].mxu0 %v1241
        %v1384 = vpop.f32.mrb[0].mxu0
        %v1385 = vadd.f32 0.0, %v1384
        %v1386 = vpop.f32.mrb[0].mxu0
        %v1387 = vadd.f32 0.0, %v1386
        %1388 = vdwg.mxu0
        %1389 = vmatprep.subr.mxu0 %v727
        %1390 = vmatpush1.msra.mxu0 %v726
        %1391 = vmatprep.subr.mxu0 %v743
        %1392 = vmatpush1.msra.mxu0 %v742
        %1393 = vmatprep.subr.mxu0 %v759
        %1394 = vmatpush1.msra.mxu0 %v758
        %1395 = vmatprep.subr.mxu0 %v775
        %1396 = vmatpush1.msra.mxu0 %v774
        %1397 = vmatprep.subr.mxu0 %v791
        %1398 = vmatpush1.msra.mxu0 %v790
        %1399 = vmatprep.subr.mxu0 %v807
        %1400 = vmatpush1.msra.mxu0 %v806
        %1401 = vmatprep.subr.mxu0 %v823
        %1402 = vmatpush1.msra.mxu0 %v822
        %1403 = vmatprep.subr.mxu0 %v839
        %1404 = vmatpush1.msra.mxu0 %v838
        %1405 = vmatprep.subr.mxu0 %v855
        %1406 = vmatpush1.msra.mxu0 %v854
        %1407 = vmatprep.subr.mxu0 %v871
        %1408 = vmatpush1.msra.mxu0 %v870
        %1409 = vmatprep.subr.mxu0 %v887
        %1410 = vmatpush1.msra.mxu0 %v886
        %1411 = vmatprep.subr.mxu0 %v903
        %1412 = vmatpush1.msra.mxu0 %v902
        %1413 = vmatprep.subr.mxu0 %v919
        %1414 = vmatpush1.msra.mxu0 %v918
        %1415 = vmatprep.subr.mxu0 %v935
        %1416 = vmatpush1.msra.mxu0 %v934
        %1417 = vmatprep.subr.mxu0 %v951
        %1418 = vmatpush1.msra.mxu0 %v950
        %1419 = vmatprep.subr.mxu0 %v967
        %1420 = vmatpush1.msra.mxu0 %v966
        %1421 = vmatprep.subr.mxu0 %v983
        %1422 = vmatpush1.msra.mxu0 %v982
        %1423 = vmatprep.subr.mxu0 %v999
        %1424 = vmatpush1.msra.mxu0 %v998
        %1425 = vmatprep.subr.mxu0 %v1015
        %1426 = vmatpush1.msra.mxu0 %v1014
        %1427 = vmatprep.subr.mxu0 %v1031
        %1428 = vmatpush1.msra.mxu0 %v1030
        %1429 = vmatprep.subr.mxu0 %v1047
        %1430 = vmatpush1.msra.mxu0 %v1046
        %1431 = vmatprep.subr.mxu0 %v1063
        %1432 = vmatpush1.msra.mxu0 %v1062
        %1433 = vmatprep.subr.mxu0 %v1079
        %1434 = vmatpush1.msra.mxu0 %v1078
        %1435 = vmatprep.subr.mxu0 %v1095
        %1436 = vmatpush1.msra.mxu0 %v1094
        %1437 = vmatprep.subr.mxu0 %v1111
        %1438 = vmatpush1.msra.mxu0 %v1110
        %1439 = vmatprep.subr.mxu0 %v1127
        %1440 = vmatpush1.msra.mxu0 %v1126
        %1441 = vmatprep.subr.mxu0 %v1143
        %1442 = vmatpush1.msra.mxu0 %v1142
        %1443 = vmatprep.subr.mxu0 %v1159
        %1444 = vmatpush1.msra.mxu0 %v1158
        %1445 = vmatprep.subr.mxu0 %v1175
        %1446 = vmatpush1.msra.mxu0 %v1174
        %1447 = vmatprep.subr.mxu0 %v1191
        %1448 = vmatpush1.msra.mxu0 %v1190
        %1449 = vmatprep.subr.mxu0 %v1207
        %1450 = vmatpush1.msra.mxu0 %v1206
        %1451 = vmatprep.subr.mxu0 %v1223
        %1452 = vmatpush1.msra.mxu0 %v1222
        %1453 = vmatprep.mubr.f32.mxu0 %v1244
        %1454 = vmatmul.mubr.f32.gmra.mrb[0].mxu0 %v1241
        %v1455 = vpop.f32.mrb[0].mxu0
        %v1456 = vadd.f32 0.0, %v1455
        %v1457 = vpop.f32.mrb[0].mxu0
        %v1458 = vadd.f32 0.0, %v1457
        %1459 = vdwg.mxu0
        %1460 = vmatprep.subr.mxu0 %v729
        %1461 = vmatpush1.msra.mxu0 %v728
        %1462 = vmatprep.subr.mxu0 %v745
        %1463 = vmatpush1.msra.mxu0 %v744
        %1464 = vmatprep.subr.mxu0 %v761
        %1465 = vmatpush1.msra.mxu0 %v760
        %1466 = vmatprep.subr.mxu0 %v777
        %1467 = vmatpush1.msra.mxu0 %v776
        %1468 = vmatprep.subr.mxu0 %v793
        %1469 = vmatpush1.msra.mxu0 %v792
        %1470 = vmatprep.subr.mxu0 %v809
        %1471 = vmatpush1.msra.mxu0 %v808
        %1472 = vmatprep.subr.mxu0 %v825
        %1473 = vmatpush1.msra.mxu0 %v824
        %1474 = vmatprep.subr.mxu0 %v841
        %1475 = vmatpush1.msra.mxu0 %v840
        %1476 = vmatprep.subr.mxu0 %v857
        %1477 = vmatpush1.msra.mxu0 %v856
        %1478 = vmatprep.subr.mxu0 %v873
        %1479 = vmatpush1.msra.mxu0 %v872
        %1480 = vmatprep.subr.mxu0 %v889
        %1481 = vmatpush1.msra.mxu0 %v888
        %1482 = vmatprep.subr.mxu0 %v905
        %1483 = vmatpush1.msra.mxu0 %v904
        %1484 = vmatprep.subr.mxu0 %v921
        %1485 = vmatpush1.msra.mxu0 %v920
        %1486 = vmatprep.subr.mxu0 %v937
        %1487 = vmatpush1.msra.mxu0 %v936
        %1488 = vmatprep.subr.mxu0 %v953
        %1489 = vmatpush1.msra.mxu0 %v952
        %1490 = vmatprep.subr.mxu0 %v969
        %1491 = vmatpush1.msra.mxu0 %v968
        %1492 = vmatprep.subr.mxu0 %v985
        %1493 = vmatpush1.msra.mxu0 %v984
        %1494 = vmatprep.subr.mxu0 %v1001
        %1495 = vmatpush1.msra.mxu0 %v1000
        %1496 = vmatprep.subr.mxu0 %v1017
        %1497 = vmatpush1.msra.mxu0 %v1016
        %1498 = vmatprep.subr.mxu0 %v1033
        %1499 = vmatpush1.msra.mxu0 %v1032
        %1500 = vmatprep.subr.mxu0 %v1049
        %1501 = vmatpush1.msra.mxu0 %v1048
        %1502 = vmatprep.subr.mxu0 %v1065
        %1503 = vmatpush1.msra.mxu0 %v1064
        %1504 = vmatprep.subr.mxu0 %v1081
        %1505 = vmatpush1.msra.mxu0 %v1080
        %1506 = vmatprep.subr.mxu0 %v1097
        %1507 = vmatpush1.msra.mxu0 %v1096
        %1508 = vmatprep.subr.mxu0 %v1113
        %1509 = vmatpush1.msra.mxu0 %v1112
        %1510 = vmatprep.subr.mxu0 %v1129
        %1511 = vmatpush1.msra.mxu0 %v1128
        %1512 = vmatprep.subr.mxu0 %v1145
        %1513 = vmatpush1.msra.mxu0 %v1144
        %1514 = vmatprep.subr.mxu0 %v1161
        %1515 = vmatpush1.msra.mxu0 %v1160
        %1516 = vmatprep.subr.mxu0 %v1177
        %1517 = vmatpush1.msra.mxu0 %v1176
        %1518 = vmatprep.subr.mxu0 %v1193
        %1519 = vmatpush1.msra.mxu0 %v1192
        %1520 = vmatprep.subr.mxu0 %v1209
        %1521 = vmatpush1.msra.mxu0 %v1208
        %1522 = vmatprep.subr.mxu0 %v1225
        %1523 = vmatpush1.msra.mxu0 %v1224
        %1524 = vmatprep.mubr.f32.mxu0 %v1244
        %1525 = vmatmul.mubr.f32.gmra.mrb[0].mxu0 %v1241
        %v1526 = vpop.f32.mrb[0].mxu0
        %v1527 = vadd.f32 0.0, %v1526
        %v1528 = vpop.f32.mrb[0].mxu0
        %v1529 = vadd.f32 0.0, %v1528
        %1530 = vdwg.mxu0
        %1531 = vmatprep.subr.mxu0 %v731
        %1532 = vmatpush1.msra.mxu0 %v730
        %1533 = vmatprep.subr.mxu0 %v747
        %1534 = vmatpush1.msra.mxu0 %v746
        %1535 = vmatprep.subr.mxu0 %v763
        %1536 = vmatpush1.msra.mxu0 %v762
        %1537 = vmatprep.subr.mxu0 %v779
        %1538 = vmatpush1.msra.mxu0 %v778
        %1539 = vmatprep.subr.mxu0 %v795
        %1540 = vmatpush1.msra.mxu0 %v794
        %1541 = vmatprep.subr.mxu0 %v811
        %1542 = vmatpush1.msra.mxu0 %v810
        %1543 = vmatprep.subr.mxu0 %v827
        %1544 = vmatpush1.msra.mxu0 %v826
        %1545 = vmatprep.subr.mxu0 %v843
        %1546 = vmatpush1.msra.mxu0 %v842
        %1547 = vmatprep.subr.mxu0 %v859
        %1548 = vmatpush1.msra.mxu0 %v858
        %1549 = vmatprep.subr.mxu0 %v875
        %1550 = vmatpush1.msra.mxu0 %v874
        %1551 = vmatprep.subr.mxu0 %v891
        %1552 = vmatpush1.msra.mxu0 %v890
        %1553 = vmatprep.subr.mxu0 %v907
        %1554 = vmatpush1.msra.mxu0 %v906
        %1555 = vmatprep.subr.mxu0 %v923
        %1556 = vmatpush1.msra.mxu0 %v922
        %1557 = vmatprep.subr.mxu0 %v939
        %1558 = vmatpush1.msra.mxu0 %v938
        %1559 = vmatprep.subr.mxu0 %v955
        %1560 = vmatpush1.msra.mxu0 %v954
        %1561 = vmatprep.subr.mxu0 %v971
        %1562 = vmatpush1.msra.mxu0 %v970
        %1563 = vmatprep.subr.mxu0 %v987
        %1564 = vmatpush1.msra.mxu0 %v986
        %1565 = vmatprep.subr.mxu0 %v1003
        %1566 = vmatpush1.msra.mxu0 %v1002
        %1567 = vmatprep.subr.mxu0 %v1019
        %1568 = vmatpush1.msra.mxu0 %v1018
        %1569 = vmatprep.subr.mxu0 %v1035
        %1570 = vmatpush1.msra.mxu0 %v1034
        %1571 = vmatprep.subr.mxu0 %v1051
        %1572 = vmatpush1.msra.mxu0 %v1050
        %1573 = vmatprep.subr.mxu0 %v1067
        %1574 = vmatpush1.msra.mxu0 %v1066
        %1575 = vmatprep.subr.mxu0 %v1083
        %1576 = vmatpush1.msra.mxu0 %v1082
        %1577 = vmatprep.subr.mxu0 %v1099
        %1578 = vmatpush1.msra.mxu0 %v1098
        %1579 = vmatprep.subr.mxu0 %v1115
        %1580 = vmatpush1.msra.mxu0 %v1114
        %1581 = vmatprep.subr.mxu0 %v1131
        %1582 = vmatpush1.msra.mxu0 %v1130
        %1583 = vmatprep.subr.mxu0 %v1147
        %1584 = vmatpush1.msra.mxu0 %v1146
        %1585 = vmatprep.subr.mxu0 %v1163
        %1586 = vmatpush1.msra.mxu0 %v1162
        %1587 = vmatprep.subr.mxu0 %v1179
        %1588 = vmatpush1.msra.mxu0 %v1178
        %1589 = vmatprep.subr.mxu0 %v1195
        %1590 = vmatpush1.msra.mxu0 %v1194
        %1591 = vmatprep.subr.mxu0 %v1211
        %1592 = vmatpush1.msra.mxu0 %v1210
        %1593 = vmatprep.subr.mxu0 %v1227
        %1594 = vmatpush1.msra.mxu0 %v1226
        %1595 = vmatprep.mubr.f32.mxu0 %v1244
        %1596 = vmatmul.mubr.f32.gmra.mrb[0].mxu0 %v1241
        %v1597 = vpop.f32.mrb[0].mxu0
        %v1598 = vadd.f32 0.0, %v1597
        %v1599 = vpop.f32.mrb[0].mxu0
        %v1600 = vadd.f32 0.0, %v1599
        %1601 = vdwg.mxu0
        %1602 = vmatprep.subr.mxu0 %v733
        %1603 = vmatpush1.msra.mxu0 %v732
        %1604 = vmatprep.subr.mxu0 %v749
        %1605 = vmatpush1.msra.mxu0 %v748
        %1606 = vmatprep.subr.mxu0 %v765
        %1607 = vmatpush1.msra.mxu0 %v764
        %1608 = vmatprep.subr.mxu0 %v781
        %1609 = vmatpush1.msra.mxu0 %v780
        %1610 = vmatprep.subr.mxu0 %v797
        %1611 = vmatpush1.msra.mxu0 %v796
        %1612 = vmatprep.subr.mxu0 %v813
        %1613 = vmatpush1.msra.mxu0 %v812
        %1614 = vmatprep.subr.mxu0 %v829
        %1615 = vmatpush1.msra.mxu0 %v828
        %1616 = vmatprep.subr.mxu0 %v845
        %1617 = vmatpush1.msra.mxu0 %v844
        %1618 = vmatprep.subr.mxu0 %v861
        %1619 = vmatpush1.msra.mxu0 %v860
        %1620 = vmatprep.subr.mxu0 %v877
        %1621 = vmatpush1.msra.mxu0 %v876
        %1622 = vmatprep.subr.mxu0 %v893
        %1623 = vmatpush1.msra.mxu0 %v892
        %1624 = vmatprep.subr.mxu0 %v909
        %1625 = vmatpush1.msra.mxu0 %v908
        %1626 = vmatprep.subr.mxu0 %v925
        %1627 = vmatpush1.msra.mxu0 %v924
        %1628 = vmatprep.subr.mxu0 %v941
        %1629 = vmatpush1.msra.mxu0 %v940
        %1630 = vmatprep.subr.mxu0 %v957
        %1631 = vmatpush1.msra.mxu0 %v956
        %1632 = vmatprep.subr.mxu0 %v973
        %1633 = vmatpush1.msra.mxu0 %v972
        %1634 = vmatprep.subr.mxu0 %v989
        %1635 = vmatpush1.msra.mxu0 %v988
        %1636 = vmatprep.subr.mxu0 %v1005
        %1637 = vmatpush1.msra.mxu0 %v1004
        %1638 = vmatprep.subr.mxu0 %v1021
        %1639 = vmatpush1.msra.mxu0 %v1020
        %1640 = vmatprep.subr.mxu0 %v1037
        %1641 = vmatpush1.msra.mxu0 %v1036
        %1642 = vmatprep.subr.mxu0 %v1053
        %1643 = vmatpush1.msra.mxu0 %v1052
        %1644 = vmatprep.subr.mxu0 %v1069
        %1645 = vmatpush1.msra.mxu0 %v1068
        %1646 = vmatprep.subr.mxu0 %v1085
        %1647 = vmatpush1.msra.mxu0 %v1084
        %1648 = vmatprep.subr.mxu0 %v1101
        %1649 = vmatpush1.msra.mxu0 %v1100
        %1650 = vmatprep.subr.mxu0 %v1117
        %1651 = vmatpush1.msra.mxu0 %v1116
        %1652 = vmatprep.subr.mxu0 %v1133
        %1653 = vmatpush1.msra.mxu0 %v1132
        %1654 = vmatprep.subr.mxu0 %v1149
        %1655 = vmatpush1.msra.mxu0 %v1148
        %1656 = vmatprep.subr.mxu0 %v1165
        %1657 = vmatpush1.msra.mxu0 %v1164
        %1658 = vmatprep.subr.mxu0 %v1181
        %1659 = vmatpush1.msra.mxu0 %v1180
        %1660 = vmatprep.subr.mxu0 %v1197
        %1661 = vmatpush1.msra.mxu0 %v1196
        %1662 = vmatprep.subr.mxu0 %v1213
        %1663 = vmatpush1.msra.mxu0 %v1212
        %1664 = vmatprep.subr.mxu0 %v1229
        %1665 = vmatpush1.msra.mxu0 %v1228
        %1666 = vmatprep.mubr.f32.mxu0 %v1244
        %1667 = vmatmul.mubr.f32.gmra.mrb[0].mxu0 %v1241
        %v1668 = vpop.f32.mrb[0].mxu0
        %v1669 = vadd.f32 0.0, %v1668
        %v1670 = vpop.f32.mrb[0].mxu0
        %v1671 = vadd.f32 0.0, %v1670
        %1672 = vdwg.mxu0
        %1673 = vmatprep.subr.mxu0 %v735
        %1674 = vmatpush1.msra.mxu0 %v734
        %1675 = vmatprep.subr.mxu0 %v751
        %1676 = vmatpush1.msra.mxu0 %v750
        %1677 = vmatprep.subr.mxu0 %v767
        %1678 = vmatpush1.msra.mxu0 %v766
        %1679 = vmatprep.subr.mxu0 %v783
        %1680 = vmatpush1.msra.mxu0 %v782
        %1681 = vmatprep.subr.mxu0 %v799
        %1682 = vmatpush1.msra.mxu0 %v798
        %1683 = vmatprep.subr.mxu0 %v815
        %1684 = vmatpush1.msra.mxu0 %v814
        %1685 = vmatprep.subr.mxu0 %v831
        %1686 = vmatpush1.msra.mxu0 %v830
        %1687 = vmatprep.subr.mxu0 %v847
        %1688 = vmatpush1.msra.mxu0 %v846
        %1689 = vmatprep.subr.mxu0 %v863
        %1690 = vmatpush1.msra.mxu0 %v862
        %1691 = vmatprep.subr.mxu0 %v879
        %1692 = vmatpush1.msra.mxu0 %v878
        %1693 = vmatprep.subr.mxu0 %v895
        %1694 = vmatpush1.msra.mxu0 %v894
        %1695 = vmatprep.subr.mxu0 %v911
        %1696 = vmatpush1.msra.mxu0 %v910
        %1697 = vmatprep.subr.mxu0 %v927
        %1698 = vmatpush1.msra.mxu0 %v926
        %1699 = vmatprep.subr.mxu0 %v943
        %1700 = vmatpush1.msra.mxu0 %v942
        %1701 = vmatprep.subr.mxu0 %v959
        %1702 = vmatpush1.msra.mxu0 %v958
        %1703 = vmatprep.subr.mxu0 %v975
        %1704 = vmatpush1.msra.mxu0 %v974
        %1705 = vmatprep.subr.mxu0 %v991
        %1706 = vmatpush1.msra.mxu0 %v990
        %1707 = vmatprep.subr.mxu0 %v1007
        %1708 = vmatpush1.msra.mxu0 %v1006
        %1709 = vmatprep.subr.mxu0 %v1023
        %1710 = vmatpush1.msra.mxu0 %v1022
        %1711 = vmatprep.subr.mxu0 %v1039
        %1712 = vmatpush1.msra.mxu0 %v1038
        %1713 = vmatprep.subr.mxu0 %v1055
        %1714 = vmatpush1.msra.mxu0 %v1054
        %1715 = vmatprep.subr.mxu0 %v1071
        %1716 = vmatpush1.msra.mxu0 %v1070
        %1717 = vmatprep.subr.mxu0 %v1087
        %1718 = vmatpush1.msra.mxu0 %v1086
        %1719 = vmatprep.subr.mxu0 %v1103
        %1720 = vmatpush1.msra.mxu0 %v1102
        %1721 = vmatprep.subr.mxu0 %v1119
        %1722 = vmatpush1.msra.mxu0 %v1118
        %1723 = vmatprep.subr.mxu0 %v1135
        %1724 = vmatpush1.msra.mxu0 %v1134
        %1725 = vmatprep.subr.mxu0 %v1151
        %1726 = vmatpush1.msra.mxu0 %v1150
        %1727 = vmatprep.subr.mxu0 %v1167
        %1728 = vmatpush1.msra.mxu0 %v1166
        %1729 = vmatprep.subr.mxu0 %v1183
        %1730 = vmatpush1.msra.mxu0 %v1182
        %1731 = vmatprep.subr.mxu0 %v1199
        %1732 = vmatpush1.msra.mxu0 %v1198
        %1733 = vmatprep.subr.mxu0 %v1215
        %1734 = vmatpush1.msra.mxu0 %v1214
        %1735 = vmatprep.subr.mxu0 %v1231
        %1736 = vmatpush1.msra.mxu0 %v1230
        %1737 = vmatprep.mubr.f32.mxu0 %v1244
        %1738 = vmatmul.mubr.f32.gmra.mrb[0].mxu0 %v1241
        %v1739 = vpop.f32.mrb[0].mxu0
        %v1740 = vadd.f32 0.0, %v1739
        %v1741 = vpop.f32.mrb[0].mxu0
        %v1742 = vadd.f32 0.0, %v1741
        %1743 = vdwg.mxu0
        %1744 = vmatprep.subr.mxu0 %v737
        %1745 = vmatpush1.msra.mxu0 %v736
        %1746 = vmatprep.subr.mxu0 %v753
        %1747 = vmatpush1.msra.mxu0 %v752
        %1748 = vmatprep.subr.mxu0 %v769
        %1749 = vmatpush1.msra.mxu0 %v768
        %1750 = vmatprep.subr.mxu0 %v785
        %1751 = vmatpush1.msra.mxu0 %v784
        %1752 = vmatprep.subr.mxu0 %v801
        %1753 = vmatpush1.msra.mxu0 %v800
        %1754 = vmatprep.subr.mxu0 %v817
        %1755 = vmatpush1.msra.mxu0 %v816
        %1756 = vmatprep.subr.mxu0 %v833
        %1757 = vmatpush1.msra.mxu0 %v832
        %1758 = vmatprep.subr.mxu0 %v849
        %1759 = vmatpush1.msra.mxu0 %v848
        %1760 = vmatprep.subr.mxu0 %v865
        %1761 = vmatpush1.msra.mxu0 %v864
        %1762 = vmatprep.subr.mxu0 %v881
        %1763 = vmatpush1.msra.mxu0 %v880
        %1764 = vmatprep.subr.mxu0 %v897
        %1765 = vmatpush1.msra.mxu0 %v896
        %1766 = vmatprep.subr.mxu0 %v913
        %1767 = vmatpush1.msra.mxu0 %v912
        %1768 = vmatprep.subr.mxu0 %v929
        %1769 = vmatpush1.msra.mxu0 %v928
        %1770 = vmatprep.subr.mxu0 %v945
        %1771 = vmatpush1.msra.mxu0 %v944
        %1772 = vmatprep.subr.mxu0 %v961
        %1773 = vmatpush1.msra.mxu0 %v960
        %1774 = vmatprep.subr.mxu0 %v977
        %1775 = vmatpush1.msra.mxu0 %v976
        %1776 = vmatprep.subr.mxu0 %v993
        %1777 = vmatpush1.msra.mxu0 %v992
        %1778 = vmatprep.subr.mxu0 %v1009
        %1779 = vmatpush1.msra.mxu0 %v1008
        %1780 = vmatprep.subr.mxu0 %v1025
        %1781 = vmatpush1.msra.mxu0 %v1024
        %1782 = vmatprep.subr.mxu0 %v1041
        %1783 = vmatpush1.msra.mxu0 %v1040
        %1784 = vmatprep.subr.mxu0 %v1057
        %1785 = vmatpush1.msra.mxu0 %v1056
        %1786 = vmatprep.subr.mxu0 %v1073
        %1787 = vmatpush1.msra.mxu0 %v1072
        %1788 = vmatprep.subr.mxu0 %v1089
        %1789 = vmatpush1.msra.mxu0 %v1088
        %1790 = vmatprep.subr.mxu0 %v1105
        %1791 = vmatpush1.msra.mxu0 %v1104
        %1792 = vmatprep.subr.mxu0 %v1121
        %1793 = vmatpush1.msra.mxu0 %v1120
        %1794 = vmatprep.subr.mxu0 %v1137
        %1795 = vmatpush1.msra.mxu0 %v1136
        %1796 = vmatprep.subr.mxu0 %v1153
        %1797 = vmatpush1.msra.mxu0 %v1152
        %1798 = vmatprep.subr.mxu0 %v1169
        %1799 = vmatpush1.msra.mxu0 %v1168
        %1800 = vmatprep.subr.mxu0 %v1185
        %1801 = vmatpush1.msra.mxu0 %v1184
        %1802 = vmatprep.subr.mxu0 %v1201
        %1803 = vmatpush1.msra.mxu0 %v1200
        %1804 = vmatprep.subr.mxu0 %v1217
        %1805 = vmatpush1.msra.mxu0 %v1216
        %1806 = vmatprep.subr.mxu0 %v1233
        %1807 = vmatpush1.msra.mxu0 %v1232
        %1808 = vmatprep.mubr.f32.mxu0 %v1244
        %1809 = vmatmul.mubr.f32.gmra.mrb[0].mxu0 %v1241
        %v1810 = vpop.f32.mrb[0].mxu0
        %v1811 = vadd.f32 0.0, %v1810
        %v1812 = vpop.f32.mrb[0].mxu0
        %v1813 = vadd.f32 0.0, %v1812
        %1814 = vdwg.mxu0
        %1815 = vmatprep.subr.mxu0 %v206
        %1816 = vmatpush1.msra.mxu0 %v205
        %1817 = vmatprep.subr.mxu0 %v222
        %1818 = vmatpush1.msra.mxu0 %v221
        %1819 = vmatprep.subr.mxu0 %v238
        %1820 = vmatpush1.msra.mxu0 %v237
        %1821 = vmatprep.subr.mxu0 %v254
        %1822 = vmatpush1.msra.mxu0 %v253
        %1823 = vmatprep.subr.mxu0 %v270
        %1824 = vmatpush1.msra.mxu0 %v269
        %1825 = vmatprep.subr.mxu0 %v286
        %1826 = vmatpush1.msra.mxu0 %v285
        %1827 = vmatprep.subr.mxu0 %v302
        %1828 = vmatpush1.msra.mxu0 %v301
        %1829 = vmatprep.subr.mxu0 %v318
        %1830 = vmatpush1.msra.mxu0 %v317
        %1831 = vmatprep.subr.mxu0 %v334
        %1832 = vmatpush1.msra.mxu0 %v333
        %1833 = vmatprep.subr.mxu0 %v350
        %1834 = vmatpush1.msra.mxu0 %v349
        %1835 = vmatprep.subr.mxu0 %v366
        %1836 = vmatpush1.msra.mxu0 %v365
        %1837 = vmatprep.subr.mxu0 %v382
        %1838 = vmatpush1.msra.mxu0 %v381
        %1839 = vmatprep.subr.mxu0 %v398
        %1840 = vmatpush1.msra.mxu0 %v397
        %1841 = vmatprep.subr.mxu0 %v414
        %1842 = vmatpush1.msra.mxu0 %v413
        %1843 = vmatprep.subr.mxu0 %v430
        %1844 = vmatpush1.msra.mxu0 %v429
        %1845 = vmatprep.subr.mxu0 %v446
        %1846 = vmatpush1.msra.mxu0 %v445
        %1847 = vmatprep.subr.mxu0 %v462
        %1848 = vmatpush1.msra.mxu0 %v461
        %1849 = vmatprep.subr.mxu0 %v478
        %1850 = vmatpush1.msra.mxu0 %v477
        %1851 = vmatprep.subr.mxu0 %v494
        %1852 = vmatpush1.msra.mxu0 %v493
        %1853 = vmatprep.subr.mxu0 %v510
        %1854 = vmatpush1.msra.mxu0 %v509
        %1855 = vmatprep.subr.mxu0 %v526
        %1856 = vmatpush1.msra.mxu0 %v525
        %1857 = vmatprep.subr.mxu0 %v542
        %1858 = vmatpush1.msra.mxu0 %v541
        %1859 = vmatprep.subr.mxu0 %v558
        %1860 = vmatpush1.msra.mxu0 %v557
        %1861 = vmatprep.subr.mxu0 %v574
        %1862 = vmatpush1.msra.mxu0 %v573
        %1863 = vmatprep.subr.mxu0 %v590
        %1864 = vmatpush1.msra.mxu0 %v589
        %1865 = vmatprep.subr.mxu0 %v606
        %1866 = vmatpush1.msra.mxu0 %v605
        %1867 = vmatprep.subr.mxu0 %v622
        %1868 = vmatpush1.msra.mxu0 %v621
        %1869 = vmatprep.subr.mxu0 %v638
        %1870 = vmatpush1.msra.mxu0 %v637
        %1871 = vmatprep.subr.mxu0 %v654
        %1872 = vmatpush1.msra.mxu0 %v653
        %1873 = vmatprep.subr.mxu0 %v670
        %1874 = vmatpush1.msra.mxu0 %v669
        %1875 = vmatprep.subr.mxu0 %v686
        %1876 = vmatpush1.msra.mxu0 %v685
        %1877 = vmatprep.subr.mxu0 %v702
        %1878 = vmatpush1.msra.mxu0 %v701
        %1879 = vmatprep.mubr.f32.mxu0 %v204
        %1880 = vmatmul.mubr.f32.gmra.mrb[0].mxu0 %v203
        %v1881 = vpop.f32.mrb[0].mxu0
        %v1882 = vadd.f32 %v1314, %v1881
        %v1883 = vpop.f32.mrb[0].mxu0
        %v1884 = vadd.f32 %v1316, %v1883
        %1885 = vdwg.mxu0
        %1886 = vmatprep.subr.mxu0 %v208
        %1887 = vmatpush1.msra.mxu0 %v207
        %1888 = vmatprep.subr.mxu0 %v224
        %1889 = vmatpush1.msra.mxu0 %v223
        %1890 = vmatprep.subr.mxu0 %v240
        %1891 = vmatpush1.msra.mxu0 %v239
        %1892 = vmatprep.subr.mxu0 %v256
        %1893 = vmatpush1.msra.mxu0 %v255
        %1894 = vmatprep.subr.mxu0 %v272
        %1895 = vmatpush1.msra.mxu0 %v271
        %1896 = vmatprep.subr.mxu0 %v288
        %1897 = vmatpush1.msra.mxu0 %v287
        %1898 = vmatprep.subr.mxu0 %v304
        %1899 = vmatpush1.msra.mxu0 %v303
        %1900 = vmatprep.subr.mxu0 %v320
        %1901 = vmatpush1.msra.mxu0 %v319
        %1902 = vmatprep.subr.mxu0 %v336
        %1903 = vmatpush1.msra.mxu0 %v335
        %1904 = vmatprep.subr.mxu0 %v352
        %1905 = vmatpush1.msra.mxu0 %v351
        %1906 = vmatprep.subr.mxu0 %v368
        %1907 = vmatpush1.msra.mxu0 %v367
        %1908 = vmatprep.subr.mxu0 %v384
        %1909 = vmatpush1.msra.mxu0 %v383
        %1910 = vmatprep.subr.mxu0 %v400
        %1911 = vmatpush1.msra.mxu0 %v399
        %1912 = vmatprep.subr.mxu0 %v416
        %1913 = vmatpush1.msra.mxu0 %v415
        %1914 = vmatprep.subr.mxu0 %v432
        %1915 = vmatpush1.msra.mxu0 %v431
        %1916 = vmatprep.subr.mxu0 %v448
        %1917 = vmatpush1.msra.mxu0 %v447
        %1918 = vmatprep.subr.mxu0 %v464
        %1919 = vmatpush1.msra.mxu0 %v463
        %1920 = vmatprep.subr.mxu0 %v480
        %1921 = vmatpush1.msra.mxu0 %v479
        %1922 = vmatprep.subr.mxu0 %v496
        %1923 = vmatpush1.msra.mxu0 %v495
        %1924 = vmatprep.subr.mxu0 %v512
        %1925 = vmatpush1.msra.mxu0 %v511
        %1926 = vmatprep.subr.mxu0 %v528
        %1927 = vmatpush1.msra.mxu0 %v527
        %1928 = vmatprep.subr.mxu0 %v544
        %1929 = vmatpush1.msra.mxu0 %v543
        %1930 = vmatprep.subr.mxu0 %v560
        %1931 = vmatpush1.msra.mxu0 %v559
        %1932 = vmatprep.subr.mxu0 %v576
        %1933 = vmatpush1.msra.mxu0 %v575
        %1934 = vmatprep.subr.mxu0 %v592
        %1935 = vmatpush1.msra.mxu0 %v591
        %1936 = vmatprep.subr.mxu0 %v608
        %1937 = vmatpush1.msra.mxu0 %v607
        %1938 = vmatprep.subr.mxu0 %v624
        %1939 = vmatpush1.msra.mxu0 %v623
        %1940 = vmatprep.subr.mxu0 %v640
        %1941 = vmatpush1.msra.mxu0 %v639
        %1942 = vmatprep.subr.mxu0 %v656
        %1943 = vmatpush1.msra.mxu0 %v655
        %1944 = vmatprep.subr.mxu0 %v672
        %1945 = vmatpush1.msra.mxu0 %v671
        %1946 = vmatprep.subr.mxu0 %v688
        %1947 = vmatpush1.msra.mxu0 %v687
        %1948 = vmatprep.subr.mxu0 %v704
        %1949 = vmatpush1.msra.mxu0 %v703
        %1950 = vmatprep.mubr.f32.mxu0 %v204
        %1951 = vmatmul.mubr.f32.gmra.mrb[0].mxu0 %v203
        %v1952 = vpop.f32.mrb[0].mxu0
        %v1953 = vadd.f32 %v1385, %v1952
        %v1954 = vpop.f32.mrb[0].mxu0
        %v1955 = vadd.f32 %v1387, %v1954
        %1956 = vdwg.mxu0
        %1957 = vmatprep.subr.mxu0 %v210
        %1958 = vmatpush1.msra.mxu0 %v209
        %1959 = vmatprep.subr.mxu0 %v226
        %1960 = vmatpush1.msra.mxu0 %v225
        %1961 = vmatprep.subr.mxu0 %v242
        %1962 = vmatpush1.msra.mxu0 %v241
        %1963 = vmatprep.subr.mxu0 %v258
        %1964 = vmatpush1.msra.mxu0 %v257
        %1965 = vmatprep.subr.mxu0 %v274
        %1966 = vmatpush1.msra.mxu0 %v273
        %1967 = vmatprep.subr.mxu0 %v290
        %1968 = vmatpush1.msra.mxu0 %v289
        %1969 = vmatprep.subr.mxu0 %v306
        %1970 = vmatpush1.msra.mxu0 %v305
        %1971 = vmatprep.subr.mxu0 %v322
        %1972 = vmatpush1.msra.mxu0 %v321
        %1973 = vmatprep.subr.mxu0 %v338
        %1974 = vmatpush1.msra.mxu0 %v337
        %1975 = vmatprep.subr.mxu0 %v354
        %1976 = vmatpush1.msra.mxu0 %v353
        %1977 = vmatprep.subr.mxu0 %v370
        %1978 = vmatpush1.msra.mxu0 %v369
        %1979 = vmatprep.subr.mxu0 %v386
        %1980 = vmatpush1.msra.mxu0 %v385
        %1981 = vmatprep.subr.mxu0 %v402
        %1982 = vmatpush1.msra.mxu0 %v401
        %1983 = vmatprep.subr.mxu0 %v418
        %1984 = vmatpush1.msra.mxu0 %v417
        %1985 = vmatprep.subr.mxu0 %v434
        %1986 = vmatpush1.msra.mxu0 %v433
        %1987 = vmatprep.subr.mxu0 %v450
        %1988 = vmatpush1.msra.mxu0 %v449
        %1989 = vmatprep.subr.mxu0 %v466
        %1990 = vmatpush1.msra.mxu0 %v465
        %1991 = vmatprep.subr.mxu0 %v482
        %1992 = vmatpush1.msra.mxu0 %v481
        %1993 = vmatprep.subr.mxu0 %v498
        %1994 = vmatpush1.msra.mxu0 %v497
        %1995 = vmatprep.subr.mxu0 %v514
        %1996 = vmatpush1.msra.mxu0 %v513
        %1997 = vmatprep.subr.mxu0 %v530
        %1998 = vmatpush1.msra.mxu0 %v529
        %1999 = vmatprep.subr.mxu0 %v546
        %2000 = vmatpush1.msra.mxu0 %v545
        %2001 = vmatprep.subr.mxu0 %v562
        %2002 = vmatpush1.msra.mxu0 %v561
        %2003 = vmatprep.subr.mxu0 %v578
        %2004 = vmatpush1.msra.mxu0 %v577
        %2005 = vmatprep.subr.mxu0 %v594
        %2006 = vmatpush1.msra.mxu0 %v593
        %2007 = vmatprep.subr.mxu0 %v610
        %2008 = vmatpush1.msra.mxu0 %v609
        %2009 = vmatprep.subr.mxu0 %v626
        %2010 = vmatpush1.msra.mxu0 %v625
        %2011 = vmatprep.subr.mxu0 %v642
        %2012 = vmatpush1.msra.mxu0 %v641
        %2013 = vmatprep.subr.mxu0 %v658
        %2014 = vmatpush1.msra.mxu0 %v657
        %2015 = vmatprep.subr.mxu0 %v674
        %2016 = vmatpush1.msra.mxu0 %v673
        %2017 = vmatprep.subr.mxu0 %v690
        %2018 = vmatpush1.msra.mxu0 %v689
        %2019 = vmatprep.subr.mxu0 %v706
        %2020 = vmatpush1.msra.mxu0 %v705
        %2021 = vmatprep.mubr.f32.mxu0 %v204
        %2022 = vmatmul.mubr.f32.gmra.mrb[0].mxu0 %v203
        %v2023 = vpop.f32.mrb[0].mxu0
        %v2024 = vadd.f32 %v1456, %v2023
        %v2025 = vpop.f32.mrb[0].mxu0
        %v2026 = vadd.f32 %v1458, %v2025
        %2027 = vdwg.mxu0
        %2028 = vmatprep.subr.mxu0 %v212
        %2029 = vmatpush1.msra.mxu0 %v211
        %2030 = vmatprep.subr.mxu0 %v228
        %2031 = vmatpush1.msra.mxu0 %v227
        %2032 = vmatprep.subr.mxu0 %v244
        %2033 = vmatpush1.msra.mxu0 %v243
        %2034 = vmatprep.subr.mxu0 %v260
        %2035 = vmatpush1.msra.mxu0 %v259
        %2036 = vmatprep.subr.mxu0 %v276
        %2037 = vmatpush1.msra.mxu0 %v275
        %2038 = vmatprep.subr.mxu0 %v292
        %2039 = vmatpush1.msra.mxu0 %v291
        %2040 = vmatprep.subr.mxu0 %v308
        %2041 = vmatpush1.msra.mxu0 %v307
        %2042 = vmatprep.subr.mxu0 %v324
        %2043 = vmatpush1.msra.mxu0 %v323
        %2044 = vmatprep.subr.mxu0 %v340
        %2045 = vmatpush1.msra.mxu0 %v339
        %2046 = vmatprep.subr.mxu0 %v356
        %2047 = vmatpush1.msra.mxu0 %v355
        %2048 = vmatprep.subr.mxu0 %v372
        %2049 = vmatpush1.msra.mxu0 %v371
        %2050 = vmatprep.subr.mxu0 %v388
        %2051 = vmatpush1.msra.mxu0 %v387
        %2052 = vmatprep.subr.mxu0 %v404
        %2053 = vmatpush1.msra.mxu0 %v403
        %2054 = vmatprep.subr.mxu0 %v420
        %2055 = vmatpush1.msra.mxu0 %v419
        %2056 = vmatprep.subr.mxu0 %v436
        %2057 = vmatpush1.msra.mxu0 %v435
        %2058 = vmatprep.subr.mxu0 %v452
        %2059 = vmatpush1.msra.mxu0 %v451
        %2060 = vmatprep.subr.mxu0 %v468
        %2061 = vmatpush1.msra.mxu0 %v467
        %2062 = vmatprep.subr.mxu0 %v484
        %2063 = vmatpush1.msra.mxu0 %v483
        %2064 = vmatprep.subr.mxu0 %v500
        %2065 = vmatpush1.msra.mxu0 %v499
        %2066 = vmatprep.subr.mxu0 %v516
        %2067 = vmatpush1.msra.mxu0 %v515
        %2068 = vmatprep.subr.mxu0 %v532
        %2069 = vmatpush1.msra.mxu0 %v531
        %2070 = vmatprep.subr.mxu0 %v548
        %2071 = vmatpush1.msra.mxu0 %v547
        %2072 = vmatprep.subr.mxu0 %v564
        %2073 = vmatpush1.msra.mxu0 %v563
        %2074 = vmatprep.subr.mxu0 %v580
        %2075 = vmatpush1.msra.mxu0 %v579
        %2076 = vmatprep.subr.mxu0 %v596
        %2077 = vmatpush1.msra.mxu0 %v595
        %2078 = vmatprep.subr.mxu0 %v612
        %2079 = vmatpush1.msra.mxu0 %v611
        %2080 = vmatprep.subr.mxu0 %v628
        %2081 = vmatpush1.msra.mxu0 %v627
        %2082 = vmatprep.subr.mxu0 %v644
        %2083 = vmatpush1.msra.mxu0 %v643
        %2084 = vmatprep.subr.mxu0 %v660
        %2085 = vmatpush1.msra.mxu0 %v659
        %2086 = vmatprep.subr.mxu0 %v676
        %2087 = vmatpush1.msra.mxu0 %v675
        %2088 = vmatprep.subr.mxu0 %v692
        %2089 = vmatpush1.msra.mxu0 %v691
        %2090 = vmatprep.subr.mxu0 %v708
        %2091 = vmatpush1.msra.mxu0 %v707
        %2092 = vmatprep.mubr.f32.mxu0 %v204
        %2093 = vmatmul.mubr.f32.gmra.mrb[0].mxu0 %v203
        %v2094 = vpop.f32.mrb[0].mxu0
        %v2095 = vadd.f32 %v1527, %v2094
        %v2096 = vpop.f32.mrb[0].mxu0
        %v2097 = vadd.f32 %v1529, %v2096
        %2098 = vdwg.mxu0
        %2099 = vmatprep.subr.mxu0 %v214
        %2100 = vmatpush1.msra.mxu0 %v213
        %2101 = vmatprep.subr.mxu0 %v230
        %2102 = vmatpush1.msra.mxu0 %v229
        %2103 = vmatprep.subr.mxu0 %v246
        %2104 = vmatpush1.msra.mxu0 %v245
        %2105 = vmatprep.subr.mxu0 %v262
        %2106 = vmatpush1.msra.mxu0 %v261
        %2107 = vmatprep.subr.mxu0 %v278
        %2108 = vmatpush1.msra.mxu0 %v277
        %2109 = vmatprep.subr.mxu0 %v294
        %2110 = vmatpush1.msra.mxu0 %v293
        %2111 = vmatprep.subr.mxu0 %v310
        %2112 = vmatpush1.msra.mxu0 %v309
        %2113 = vmatprep.subr.mxu0 %v326
        %2114 = vmatpush1.msra.mxu0 %v325
        %2115 = vmatprep.subr.mxu0 %v342
        %2116 = vmatpush1.msra.mxu0 %v341
        %2117 = vmatprep.subr.mxu0 %v358
        %2118 = vmatpush1.msra.mxu0 %v357
        %2119 = vmatprep.subr.mxu0 %v374
        %2120 = vmatpush1.msra.mxu0 %v373
        %2121 = vmatprep.subr.mxu0 %v390
        %2122 = vmatpush1.msra.mxu0 %v389
        %2123 = vmatprep.subr.mxu0 %v406
        %2124 = vmatpush1.msra.mxu0 %v405
        %2125 = vmatprep.subr.mxu0 %v422
        %2126 = vmatpush1.msra.mxu0 %v421
        %2127 = vmatprep.subr.mxu0 %v438
        %2128 = vmatpush1.msra.mxu0 %v437
        %2129 = vmatprep.subr.mxu0 %v454
        %2130 = vmatpush1.msra.mxu0 %v453
        %2131 = vmatprep.subr.mxu0 %v470
        %2132 = vmatpush1.msra.mxu0 %v469
        %2133 = vmatprep.subr.mxu0 %v486
        %2134 = vmatpush1.msra.mxu0 %v485
        %2135 = vmatprep.subr.mxu0 %v502
        %2136 = vmatpush1.msra.mxu0 %v501
        %2137 = vmatprep.subr.mxu0 %v518
        %2138 = vmatpush1.msra.mxu0 %v517
        %2139 = vmatprep.subr.mxu0 %v534
        %2140 = vmatpush1.msra.mxu0 %v533
        %2141 = vmatprep.subr.mxu0 %v550
        %2142 = vmatpush1.msra.mxu0 %v549
        %2143 = vmatprep.subr.mxu0 %v566
        %2144 = vmatpush1.msra.mxu0 %v565
        %2145 = vmatprep.subr.mxu0 %v582
        %2146 = vmatpush1.msra.mxu0 %v581
        %2147 = vmatprep.subr.mxu0 %v598
        %2148 = vmatpush1.msra.mxu0 %v597
        %2149 = vmatprep.subr.mxu0 %v614
        %2150 = vmatpush1.msra.mxu0 %v613
        %2151 = vmatprep.subr.mxu0 %v630
        %2152 = vmatpush1.msra.mxu0 %v629
        %2153 = vmatprep.subr.mxu0 %v646
        %2154 = vmatpush1.msra.mxu0 %v645
        %2155 = vmatprep.subr.mxu0 %v662
        %2156 = vmatpush1.msra.mxu0 %v661
        %2157 = vmatprep.subr.mxu0 %v678
        %2158 = vmatpush1.msra.mxu0 %v677
        %2159 = vmatprep.subr.mxu0 %v694
        %2160 = vmatpush1.msra.mxu0 %v693
        %2161 = vmatprep.subr.mxu0 %v710
        %2162 = vmatpush1.msra.mxu0 %v709
        %2163 = vmatprep.mubr.f32.mxu0 %v204
        %2164 = vmatmul.mubr.f32.gmra.mrb[0].mxu0 %v203
        %v2165 = vpop.f32.mrb[0].mxu0
        %v2166 = vadd.f32 %v1598, %v2165
        %v2167 = vpop.f32.mrb[0].mxu0
        %v2168 = vadd.f32 %v1600, %v2167
        %2169 = vdwg.mxu0
        %2170 = vmatprep.subr.mxu0 %v216
        %2171 = vmatpush1.msra.mxu0 %v215
        %2172 = vmatprep.subr.mxu0 %v232
        %2173 = vmatpush1.msra.mxu0 %v231
        %2174 = vmatprep.subr.mxu0 %v248
        %2175 = vmatpush1.msra.mxu0 %v247
        %2176 = vmatprep.subr.mxu0 %v264
        %2177 = vmatpush1.msra.mxu0 %v263
        %2178 = vmatprep.subr.mxu0 %v280
        %2179 = vmatpush1.msra.mxu0 %v279
        %2180 = vmatprep.subr.mxu0 %v296
        %2181 = vmatpush1.msra.mxu0 %v295
        %2182 = vmatprep.subr.mxu0 %v312
        %2183 = vmatpush1.msra.mxu0 %v311
        %2184 = vmatprep.subr.mxu0 %v328
        %2185 = vmatpush1.msra.mxu0 %v327
        %2186 = vmatprep.subr.mxu0 %v344
        %2187 = vmatpush1.msra.mxu0 %v343
        %2188 = vmatprep.subr.mxu0 %v360
        %2189 = vmatpush1.msra.mxu0 %v359
        %2190 = vmatprep.subr.mxu0 %v376
        %2191 = vmatpush1.msra.mxu0 %v375
        %2192 = vmatprep.subr.mxu0 %v392
        %2193 = vmatpush1.msra.mxu0 %v391
        %2194 = vmatprep.subr.mxu0 %v408
        %2195 = vmatpush1.msra.mxu0 %v407
        %2196 = vmatprep.subr.mxu0 %v424
        %2197 = vmatpush1.msra.mxu0 %v423
        %2198 = vmatprep.subr.mxu0 %v440
        %2199 = vmatpush1.msra.mxu0 %v439
        %2200 = vmatprep.subr.mxu0 %v456
        %2201 = vmatpush1.msra.mxu0 %v455
        %2202 = vmatprep.subr.mxu0 %v472
        %2203 = vmatpush1.msra.mxu0 %v471
        %2204 = vmatprep.subr.mxu0 %v488
        %2205 = vmatpush1.msra.mxu0 %v487
        %2206 = vmatprep.subr.mxu0 %v504
        %2207 = vmatpush1.msra.mxu0 %v503
        %2208 = vmatprep.subr.mxu0 %v520
        %2209 = vmatpush1.msra.mxu0 %v519
        %2210 = vmatprep.subr.mxu0 %v536
        %2211 = vmatpush1.msra.mxu0 %v535
        %2212 = vmatprep.subr.mxu0 %v552
        %2213 = vmatpush1.msra.mxu0 %v551
        %2214 = vmatprep.subr.mxu0 %v568
        %2215 = vmatpush1.msra.mxu0 %v567
        %2216 = vmatprep.subr.mxu0 %v584
        %2217 = vmatpush1.msra.mxu0 %v583
        %2218 = vmatprep.subr.mxu0 %v600
        %2219 = vmatpush1.msra.mxu0 %v599
        %2220 = vmatprep.subr.mxu0 %v616
        %2221 = vmatpush1.msra.mxu0 %v615
        %2222 = vmatprep.subr.mxu0 %v632
        %2223 = vmatpush1.msra.mxu0 %v631
        %2224 = vmatprep.subr.mxu0 %v648
        %2225 = vmatpush1.msra.mxu0 %v647
        %2226 = vmatprep.subr.mxu0 %v664
        %2227 = vmatpush1.msra.mxu0 %v663
        %2228 = vmatprep.subr.mxu0 %v680
        %2229 = vmatpush1.msra.mxu0 %v679
        %2230 = vmatprep.subr.mxu0 %v696
        %2231 = vmatpush1.msra.mxu0 %v695
        %2232 = vmatprep.subr.mxu0 %v712
        %2233 = vmatpush1.msra.mxu0 %v711
        %2234 = vmatprep.mubr.f32.mxu0 %v204
        %2235 = vmatmul.mubr.f32.gmra.mrb[0].mxu0 %v203
        %v2236 = vpop.f32.mrb[0].mxu0
        %v2237 = vadd.f32 %v1669, %v2236
        %v2238 = vpop.f32.mrb[0].mxu0
        %v2239 = vadd.f32 %v1671, %v2238
        %2240 = vdwg.mxu0
        %2241 = vmatprep.subr.mxu0 %v218
        %2242 = vmatpush1.msra.mxu0 %v217
        %2243 = vmatprep.subr.mxu0 %v234
        %2244 = vmatpush1.msra.mxu0 %v233
        %2245 = vmatprep.subr.mxu0 %v250
        %2246 = vmatpush1.msra.mxu0 %v249
        %2247 = vmatprep.subr.mxu0 %v266
        %2248 = vmatpush1.msra.mxu0 %v265
        %2249 = vmatprep.subr.mxu0 %v282
        %2250 = vmatpush1.msra.mxu0 %v281
        %2251 = vmatprep.subr.mxu0 %v298
        %2252 = vmatpush1.msra.mxu0 %v297
        %2253 = vmatprep.subr.mxu0 %v314
        %2254 = vmatpush1.msra.mxu0 %v313
        %2255 = vmatprep.subr.mxu0 %v330
        %2256 = vmatpush1.msra.mxu0 %v329
        %2257 = vmatprep.subr.mxu0 %v346
        %2258 = vmatpush1.msra.mxu0 %v345
        %2259 = vmatprep.subr.mxu0 %v362
        %2260 = vmatpush1.msra.mxu0 %v361
        %2261 = vmatprep.subr.mxu0 %v378
        %2262 = vmatpush1.msra.mxu0 %v377
        %2263 = vmatprep.subr.mxu0 %v394
        %2264 = vmatpush1.msra.mxu0 %v393
        %2265 = vmatprep.subr.mxu0 %v410
        %2266 = vmatpush1.msra.mxu0 %v409
        %2267 = vmatprep.subr.mxu0 %v426
        %2268 = vmatpush1.msra.mxu0 %v425
        %2269 = vmatprep.subr.mxu0 %v442
        %2270 = vmatpush1.msra.mxu0 %v441
        %2271 = vmatprep.subr.mxu0 %v458
        %2272 = vmatpush1.msra.mxu0 %v457
        %2273 = vmatprep.subr.mxu0 %v474
        %2274 = vmatpush1.msra.mxu0 %v473
        %2275 = vmatprep.subr.mxu0 %v490
        %2276 = vmatpush1.msra.mxu0 %v489
        %2277 = vmatprep.subr.mxu0 %v506
        %2278 = vmatpush1.msra.mxu0 %v505
        %2279 = vmatprep.subr.mxu0 %v522
        %2280 = vmatpush1.msra.mxu0 %v521
        %2281 = vmatprep.subr.mxu0 %v538
        %2282 = vmatpush1.msra.mxu0 %v537
        %2283 = vmatprep.subr.mxu0 %v554
        %2284 = vmatpush1.msra.mxu0 %v553
        %2285 = vmatprep.subr.mxu0 %v570
        %2286 = vmatpush1.msra.mxu0 %v569
        %2287 = vmatprep.subr.mxu0 %v586
        %2288 = vmatpush1.msra.mxu0 %v585
        %2289 = vmatprep.subr.mxu0 %v602
        %2290 = vmatpush1.msra.mxu0 %v601
        %2291 = vmatprep.subr.mxu0 %v618
        %2292 = vmatpush1.msra.mxu0 %v617
        %2293 = vmatprep.subr.mxu0 %v634
        %2294 = vmatpush1.msra.mxu0 %v633
        %2295 = vmatprep.subr.mxu0 %v650
        %2296 = vmatpush1.msra.mxu0 %v649
        %2297 = vmatprep.subr.mxu0 %v666
        %2298 = vmatpush1.msra.mxu0 %v665
        %2299 = vmatprep.subr.mxu0 %v682
        %2300 = vmatpush1.msra.mxu0 %v681
        %2301 = vmatprep.subr.mxu0 %v698
        %2302 = vmatpush1.msra.mxu0 %v697
        %2303 = vmatprep.subr.mxu0 %v714
        %2304 = vmatpush1.msra.mxu0 %v713
        %2305 = vmatprep.mubr.f32.mxu0 %v204
        %2306 = vmatmul.mubr.f32.gmra.mrb[0].mxu0 %v203
        %v2307 = vpop.f32.mrb[0].mxu0
        %v2308 = vadd.f32 %v1740, %v2307
        %v2309 = vpop.f32.mrb[0].mxu0
        %v2310 = vadd.f32 %v1742, %v2309
        %2311 = vdwg.mxu0
        %2312 = vmatprep.subr.mxu0 %v220
        %2313 = vmatpush1.msra.mxu0 %v219
        %2314 = vmatprep.subr.mxu0 %v236
        %2315 = vmatpush1.msra.mxu0 %v235
        %2316 = vmatprep.subr.mxu0 %v252
        %2317 = vmatpush1.msra.mxu0 %v251
        %2318 = vmatprep.subr.mxu0 %v268
        %2319 = vmatpush1.msra.mxu0 %v267
        %2320 = vmatprep.subr.mxu0 %v284
        %2321 = vmatpush1.msra.mxu0 %v283
        %2322 = vmatprep.subr.mxu0 %v300
        %2323 = vmatpush1.msra.mxu0 %v299
        %2324 = vmatprep.subr.mxu0 %v316
        %2325 = vmatpush1.msra.mxu0 %v315
        %2326 = vmatprep.subr.mxu0 %v332
        %2327 = vmatpush1.msra.mxu0 %v331
        %2328 = vmatprep.subr.mxu0 %v348
        %2329 = vmatpush1.msra.mxu0 %v347
        %2330 = vmatprep.subr.mxu0 %v364
        %2331 = vmatpush1.msra.mxu0 %v363
        %2332 = vmatprep.subr.mxu0 %v380
        %2333 = vmatpush1.msra.mxu0 %v379
        %2334 = vmatprep.subr.mxu0 %v396
        %2335 = vmatpush1.msra.mxu0 %v395
        %2336 = vmatprep.subr.mxu0 %v412
        %2337 = vmatpush1.msra.mxu0 %v411
        %2338 = vmatprep.subr.mxu0 %v428
        %2339 = vmatpush1.msra.mxu0 %v427
        %2340 = vmatprep.subr.mxu0 %v444
        %2341 = vmatpush1.msra.mxu0 %v443
        %2342 = vmatprep.subr.mxu0 %v460
        %2343 = vmatpush1.msra.mxu0 %v459
        %2344 = vmatprep.subr.mxu0 %v476
        %2345 = vmatpush1.msra.mxu0 %v475
        %2346 = vmatprep.subr.mxu0 %v492
        %2347 = vmatpush1.msra.mxu0 %v491
        %2348 = vmatprep.subr.mxu0 %v508
        %2349 = vmatpush1.msra.mxu0 %v507
        %2350 = vmatprep.subr.mxu0 %v524
        %2351 = vmatpush1.msra.mxu0 %v523
        %2352 = vmatprep.subr.mxu0 %v540
        %2353 = vmatpush1.msra.mxu0 %v539
        %2354 = vmatprep.subr.mxu0 %v556
        %2355 = vmatpush1.msra.mxu0 %v555
        %2356 = vmatprep.subr.mxu0 %v572
        %2357 = vmatpush1.msra.mxu0 %v571
        %2358 = vmatprep.subr.mxu0 %v588
        %2359 = vmatpush1.msra.mxu0 %v587
        %2360 = vmatprep.subr.mxu0 %v604
        %2361 = vmatpush1.msra.mxu0 %v603
        %2362 = vmatprep.subr.mxu0 %v620
        %2363 = vmatpush1.msra.mxu0 %v619
        %2364 = vmatprep.subr.mxu0 %v636
        %2365 = vmatpush1.msra.mxu0 %v635
        %2366 = vmatprep.subr.mxu0 %v652
        %2367 = vmatpush1.msra.mxu0 %v651
        %2368 = vmatprep.subr.mxu0 %v668
        %2369 = vmatpush1.msra.mxu0 %v667
        %2370 = vmatprep.subr.mxu0 %v684
        %2371 = vmatpush1.msra.mxu0 %v683
        %2372 = vmatprep.subr.mxu0 %v700
        %2373 = vmatpush1.msra.mxu0 %v699
        %2374 = vmatprep.subr.mxu0 %v716
        %2375 = vmatpush1.msra.mxu0 %v715
        %2376 = vmatprep.mubr.f32.mxu0 %v204
        %2377 = vmatmul.mubr.f32.gmra.mrb[0].mxu0 %v203
        %v2378 = vpop.f32.mrb[0].mxu0
        %v2379 = vadd.f32 %v1811, %v2378
        %v2380 = vpop.f32.mrb[0].mxu0
        %v2381 = vadd.f32 %v1813, %v2380
        %2382 = vdwg.mxu0
        %v2383 = vld [vmem:[%s180] sm:$0xfc]
        %v2384 = vld [vmem:[%s180 + $0x8] sm:$0xfc]
        %v2385 = vld [vmem:[%s180 + $0x10] sm:$0x3]
        %v2386 = vld [vmem:[%s180 + $0x18] sm:$0x3]
        %s2387 = scalar_lea.vmem [#allocation3], 8192
        %v2388 = vld [vmem:[%s2387] sm:$0xff]
        %v2389 = vld [vmem:[%s2387 + $0x8] sm:$0xff]
        %v2390 = vld [vmem:[%s2387 + $0x10] sm:$0xff]
        %v2391 = vld [vmem:[%s2387 + $0x18] sm:$0xff]
        %v2392 = vld [vmem:[%s2387 + $0x20] sm:$0xff]
        %v2393 = vld [vmem:[%s2387 + $0x28] sm:$0xff]
        %v2394 = vld [vmem:[%s2387 + $0x30] sm:$0xff]
        %v2395 = vld [vmem:[%s2387 + $0x38] sm:$0xff]
        %v2396 = vld [vmem:[%s2387 + $0x40] sm:$0xff]
        %v2397 = vld [vmem:[%s2387 + $0x48] sm:$0xff]
        %v2398 = vld [vmem:[%s2387 + $0x50] sm:$0xff]
        %v2399 = vld [vmem:[%s2387 + $0x58] sm:$0xff]
        %v2400 = vld [vmem:[%s2387 + $0x60] sm:$0xff]
        %v2401 = vld [vmem:[%s2387 + $0x68] sm:$0xff]
        %v2402 = vld [vmem:[%s2387 + $0x70] sm:$0xff]
        %v2403 = vld [vmem:[%s2387 + $0x78] sm:$0xff]
        %v2404 = vld [vmem:[%s2387 + $0x80] sm:$0xff]
        %v2405 = vld [vmem:[%s2387 + $0x88] sm:$0xff]
        %v2406 = vld [vmem:[%s2387 + $0x90] sm:$0xff]
        %v2407 = vld [vmem:[%s2387 + $0x98] sm:$0xff]
        %v2408 = vld [vmem:[%s2387 + $0xa0] sm:$0xff]
        %v2409 = vld [vmem:[%s2387 + $0xa8] sm:$0xff]
        %v2410 = vld [vmem:[%s2387 + $0xb0] sm:$0xff]
        %v2411 = vld [vmem:[%s2387 + $0xb8] sm:$0xff]
        %v2412 = vld [vmem:[%s2387 + $0xc0] sm:$0xff]
        %v2413 = vld [vmem:[%s2387 + $0xc8] sm:$0xff]
        %v2414 = vld [vmem:[%s2387 + $0xd0] sm:$0xff]
        %v2415 = vld [vmem:[%s2387 + $0xd8] sm:$0xff]
        %v2416 = vld [vmem:[%s2387 + $0xe0] sm:$0xff]
        %v2417 = vld [vmem:[%s2387 + $0xe8] sm:$0xff]
        %v2418 = vld [vmem:[%s2387 + $0xf0] sm:$0xff]
        %v2419 = vld [vmem:[%s2387 + $0xf8] sm:$0xff]
        %v2420 = vld [vmem:[%s2387 + $0x100] sm:$0xff]
        %v2421 = vld [vmem:[%s2387 + $0x108] sm:$0xff]
        %v2422 = vld [vmem:[%s2387 + $0x110] sm:$0xff]
        %v2423 = vld [vmem:[%s2387 + $0x118] sm:$0xff]
        %v2424 = vld [vmem:[%s2387 + $0x120] sm:$0xff]
        %v2425 = vld [vmem:[%s2387 + $0x128] sm:$0xff]
        %v2426 = vld [vmem:[%s2387 + $0x130] sm:$0xff]
        %v2427 = vld [vmem:[%s2387 + $0x138] sm:$0xff]
        %v2428 = vld [vmem:[%s2387 + $0x140] sm:$0xff]
        %v2429 = vld [vmem:[%s2387 + $0x148] sm:$0xff]
        %v2430 = vld [vmem:[%s2387 + $0x150] sm:$0xff]
        %v2431 = vld [vmem:[%s2387 + $0x158] sm:$0xff]
        %v2432 = vld [vmem:[%s2387 + $0x160] sm:$0xff]
        %v2433 = vld [vmem:[%s2387 + $0x168] sm:$0xff]
        %v2434 = vld [vmem:[%s2387 + $0x170] sm:$0xff]
        %v2435 = vld [vmem:[%s2387 + $0x178] sm:$0xff]
        %v2436 = vld [vmem:[%s2387 + $0x180] sm:$0xff]
        %v2437 = vld [vmem:[%s2387 + $0x188] sm:$0xff]
        %v2438 = vld [vmem:[%s2387 + $0x190] sm:$0xff]
        %v2439 = vld [vmem:[%s2387 + $0x198] sm:$0xff]
        %v2440 = vld [vmem:[%s2387 + $0x1a0] sm:$0xff]
        %v2441 = vld [vmem:[%s2387 + $0x1a8] sm:$0xff]
        %v2442 = vld [vmem:[%s2387 + $0x1b0] sm:$0xff]
        %v2443 = vld [vmem:[%s2387 + $0x1b8] sm:$0xff]
        %v2444 = vld [vmem:[%s2387 + $0x1c0] sm:$0xff]
        %v2445 = vld [vmem:[%s2387 + $0x1c8] sm:$0xff]
        %v2446 = vld [vmem:[%s2387 + $0x1d0] sm:$0xff]
        %v2447 = vld [vmem:[%s2387 + $0x1d8] sm:$0xff]
        %v2448 = vld [vmem:[%s2387 + $0x1e0] sm:$0xff]
        %v2449 = vld [vmem:[%s2387 + $0x1e8] sm:$0xff]
        %v2450 = vld [vmem:[%s2387 + $0x1f0] sm:$0xff]
        %v2451 = vld [vmem:[%s2387 + $0x1f8] sm:$0xff]
        %v2452 = vld [vmem:[%s2387 + $0x200] sm:$0xff]
        %v2453 = vld [vmem:[%s2387 + $0x208] sm:$0xff]
        %v2454 = vld [vmem:[%s2387 + $0x210] sm:$0xff]
        %v2455 = vld [vmem:[%s2387 + $0x218] sm:$0xff]
        %v2456 = vld [vmem:[%s2387 + $0x220] sm:$0xff]
        %v2457 = vld [vmem:[%s2387 + $0x228] sm:$0xff]
        %v2458 = vld [vmem:[%s2387 + $0x230] sm:$0xff]
        %v2459 = vld [vmem:[%s2387 + $0x238] sm:$0xff]
        %v2460 = vld [vmem:[%s2387 + $0x240] sm:$0xff]
        %v2461 = vld [vmem:[%s2387 + $0x248] sm:$0xff]
        %v2462 = vld [vmem:[%s2387 + $0x250] sm:$0xff]
        %v2463 = vld [vmem:[%s2387 + $0x258] sm:$0xff]
        %v2464 = vld [vmem:[%s2387 + $0x260] sm:$0xff]
        %v2465 = vld [vmem:[%s2387 + $0x268] sm:$0xff]
        %v2466 = vld [vmem:[%s2387 + $0x270] sm:$0xff]
        %v2467 = vld [vmem:[%s2387 + $0x278] sm:$0xff]
        %v2468 = vld [vmem:[%s2387 + $0x280] sm:$0xff]
        %v2469 = vld [vmem:[%s2387 + $0x288] sm:$0xff]
        %v2470 = vld [vmem:[%s2387 + $0x290] sm:$0xff]
        %v2471 = vld [vmem:[%s2387 + $0x298] sm:$0xff]
        %v2472 = vld [vmem:[%s2387 + $0x2a0] sm:$0xff]
        %v2473 = vld [vmem:[%s2387 + $0x2a8] sm:$0xff]
        %v2474 = vld [vmem:[%s2387 + $0x2b0] sm:$0xff]
        %v2475 = vld [vmem:[%s2387 + $0x2b8] sm:$0xff]
        %v2476 = vld [vmem:[%s2387 + $0x2c0] sm:$0xff]
        %v2477 = vld [vmem:[%s2387 + $0x2c8] sm:$0xff]
        %v2478 = vld [vmem:[%s2387 + $0x2d0] sm:$0xff]
        %v2479 = vld [vmem:[%s2387 + $0x2d8] sm:$0xff]
        %v2480 = vld [vmem:[%s2387 + $0x2e0] sm:$0xff]
        %v2481 = vld [vmem:[%s2387 + $0x2e8] sm:$0xff]
        %v2482 = vld [vmem:[%s2387 + $0x2f0] sm:$0xff]
        %v2483 = vld [vmem:[%s2387 + $0x2f8] sm:$0xff]
        %v2484 = vld [vmem:[%s2387 + $0x300] sm:$0xff]
        %v2485 = vld [vmem:[%s2387 + $0x308] sm:$0xff]
        %v2486 = vld [vmem:[%s2387 + $0x310] sm:$0xff]
        %v2487 = vld [vmem:[%s2387 + $0x318] sm:$0xff]
        %v2488 = vld [vmem:[%s2387 + $0x320] sm:$0xff]
        %v2489 = vld [vmem:[%s2387 + $0x328] sm:$0xff]
        %v2490 = vld [vmem:[%s2387 + $0x330] sm:$0xff]
        %v2491 = vld [vmem:[%s2387 + $0x338] sm:$0xff]
        %v2492 = vld [vmem:[%s2387 + $0x340] sm:$0xff]
        %v2493 = vld [vmem:[%s2387 + $0x348] sm:$0xff]
        %v2494 = vld [vmem:[%s2387 + $0x350] sm:$0xff]
        %v2495 = vld [vmem:[%s2387 + $0x358] sm:$0xff]
        %v2496 = vld [vmem:[%s2387 + $0x360] sm:$0xff]
        %v2497 = vld [vmem:[%s2387 + $0x368] sm:$0xff]
        %v2498 = vld [vmem:[%s2387 + $0x370] sm:$0xff]
        %v2499 = vld [vmem:[%s2387 + $0x378] sm:$0xff]
        %v2500 = vld [vmem:[%s2387 + $0x380] sm:$0xff]
        %v2501 = vld [vmem:[%s2387 + $0x388] sm:$0xff]
        %v2502 = vld [vmem:[%s2387 + $0x390] sm:$0xff]
        %v2503 = vld [vmem:[%s2387 + $0x398] sm:$0xff]
        %v2504 = vld [vmem:[%s2387 + $0x3a0] sm:$0xff]
        %v2505 = vld [vmem:[%s2387 + $0x3a8] sm:$0xff]
        %v2506 = vld [vmem:[%s2387 + $0x3b0] sm:$0xff]
        %v2507 = vld [vmem:[%s2387 + $0x3b8] sm:$0xff]
        %v2508 = vld [vmem:[%s2387 + $0x3c0] sm:$0xff]
        %v2509 = vld [vmem:[%s2387 + $0x3c8] sm:$0xff]
        %v2510 = vld [vmem:[%s2387 + $0x3d0] sm:$0xff]
        %v2511 = vld [vmem:[%s2387 + $0x3d8] sm:$0xff]
        %v2512 = vld [vmem:[%s2387 + $0x3e0] sm:$0xff]
        %v2513 = vld [vmem:[%s2387 + $0x3e8] sm:$0xff]
        %v2514 = vld [vmem:[%s2387 + $0x3f0] sm:$0xff]
        %v2515 = vld [vmem:[%s2387 + $0x3f8] sm:$0xff]
        %v2516 = vld [vmem:[%s2387 + $0x400] sm:$0xff]
        %v2517 = vld [vmem:[%s2387 + $0x408] sm:$0xff]
        %v2518 = vld [vmem:[%s2387 + $0x410] sm:$0xff]
        %v2519 = vld [vmem:[%s2387 + $0x418] sm:$0xff]
        %v2520 = vld [vmem:[%s2387 + $0x420] sm:$0xff]
        %v2521 = vld [vmem:[%s2387 + $0x428] sm:$0xff]
        %v2522 = vld [vmem:[%s2387 + $0x430] sm:$0xff]
        %v2523 = vld [vmem:[%s2387 + $0x438] sm:$0xff]
        %v2524 = vld [vmem:[%s2387 + $0x440] sm:$0xff]
        %v2525 = vld [vmem:[%s2387 + $0x448] sm:$0xff]
        %v2526 = vld [vmem:[%s2387 + $0x450] sm:$0xff]
        %v2527 = vld [vmem:[%s2387 + $0x458] sm:$0xff]
        %v2528 = vld [vmem:[%s2387 + $0x460] sm:$0xff]
        %v2529 = vld [vmem:[%s2387 + $0x468] sm:$0xff]
        %v2530 = vld [vmem:[%s2387 + $0x470] sm:$0xff]
        %v2531 = vld [vmem:[%s2387 + $0x478] sm:$0xff]
        %v2532 = vld [vmem:[%s2387 + $0x480] sm:$0xff]
        %v2533 = vld [vmem:[%s2387 + $0x488] sm:$0xff]
        %v2534 = vld [vmem:[%s2387 + $0x490] sm:$0xff]
        %v2535 = vld [vmem:[%s2387 + $0x498] sm:$0xff]
        %v2536 = vld [vmem:[%s2387 + $0x4a0] sm:$0xff]
        %v2537 = vld [vmem:[%s2387 + $0x4a8] sm:$0xff]
        %v2538 = vld [vmem:[%s2387 + $0x4b0] sm:$0xff]
        %v2539 = vld [vmem:[%s2387 + $0x4b8] sm:$0xff]
        %v2540 = vld [vmem:[%s2387 + $0x4c0] sm:$0xff]
        %v2541 = vld [vmem:[%s2387 + $0x4c8] sm:$0xff]
        %v2542 = vld [vmem:[%s2387 + $0x4d0] sm:$0xff]
        %v2543 = vld [vmem:[%s2387 + $0x4d8] sm:$0xff]
        %v2544 = vld [vmem:[%s2387 + $0x4e0] sm:$0xff]
        %v2545 = vld [vmem:[%s2387 + $0x4e8] sm:$0xff]
        %v2546 = vld [vmem:[%s2387 + $0x4f0] sm:$0xff]
        %v2547 = vld [vmem:[%s2387 + $0x4f8] sm:$0xff]
        %v2548 = vld [vmem:[%s2387 + $0x500] sm:$0xff]
        %v2549 = vld [vmem:[%s2387 + $0x508] sm:$0xff]
        %v2550 = vld [vmem:[%s2387 + $0x510] sm:$0xff]
        %v2551 = vld [vmem:[%s2387 + $0x518] sm:$0xff]
        %v2552 = vld [vmem:[%s2387 + $0x520] sm:$0xff]
        %v2553 = vld [vmem:[%s2387 + $0x528] sm:$0xff]
        %v2554 = vld [vmem:[%s2387 + $0x530] sm:$0xff]
        %v2555 = vld [vmem:[%s2387 + $0x538] sm:$0xff]
        %v2556 = vld [vmem:[%s2387 + $0x540] sm:$0xff]
        %v2557 = vld [vmem:[%s2387 + $0x548] sm:$0xff]
        %v2558 = vld [vmem:[%s2387 + $0x550] sm:$0xff]
        %v2559 = vld [vmem:[%s2387 + $0x558] sm:$0xff]
        %v2560 = vld [vmem:[%s2387 + $0x560] sm:$0xff]
        %v2561 = vld [vmem:[%s2387 + $0x568] sm:$0xff]
        %v2562 = vld [vmem:[%s2387 + $0x570] sm:$0xff]
        %v2563 = vld [vmem:[%s2387 + $0x578] sm:$0xff]
        %v2564 = vld [vmem:[%s2387 + $0x580] sm:$0xff]
        %v2565 = vld [vmem:[%s2387 + $0x588] sm:$0xff]
        %v2566 = vld [vmem:[%s2387 + $0x590] sm:$0xff]
        %v2567 = vld [vmem:[%s2387 + $0x598] sm:$0xff]
        %v2568 = vld [vmem:[%s2387 + $0x5a0] sm:$0xff]
        %v2569 = vld [vmem:[%s2387 + $0x5a8] sm:$0xff]
        %v2570 = vld [vmem:[%s2387 + $0x5b0] sm:$0xff]
        %v2571 = vld [vmem:[%s2387 + $0x5b8] sm:$0xff]
        %v2572 = vld [vmem:[%s2387 + $0x5c0] sm:$0xff]
        %v2573 = vld [vmem:[%s2387 + $0x5c8] sm:$0xff]
        %v2574 = vld [vmem:[%s2387 + $0x5d0] sm:$0xff]
        %v2575 = vld [vmem:[%s2387 + $0x5d8] sm:$0xff]
        %v2576 = vld [vmem:[%s2387 + $0x5e0] sm:$0xff]
        %v2577 = vld [vmem:[%s2387 + $0x5e8] sm:$0xff]
        %v2578 = vld [vmem:[%s2387 + $0x5f0] sm:$0xff]
        %v2579 = vld [vmem:[%s2387 + $0x5f8] sm:$0xff]
        %v2580 = vld [vmem:[%s2387 + $0x600] sm:$0xff]
        %v2581 = vld [vmem:[%s2387 + $0x608] sm:$0xff]
        %v2582 = vld [vmem:[%s2387 + $0x610] sm:$0xff]
        %v2583 = vld [vmem:[%s2387 + $0x618] sm:$0xff]
        %v2584 = vld [vmem:[%s2387 + $0x620] sm:$0xff]
        %v2585 = vld [vmem:[%s2387 + $0x628] sm:$0xff]
        %v2586 = vld [vmem:[%s2387 + $0x630] sm:$0xff]
        %v2587 = vld [vmem:[%s2387 + $0x638] sm:$0xff]
        %v2588 = vld [vmem:[%s2387 + $0x640] sm:$0xff]
        %v2589 = vld [vmem:[%s2387 + $0x648] sm:$0xff]
        %v2590 = vld [vmem:[%s2387 + $0x650] sm:$0xff]
        %v2591 = vld [vmem:[%s2387 + $0x658] sm:$0xff]
        %v2592 = vld [vmem:[%s2387 + $0x660] sm:$0xff]
        %v2593 = vld [vmem:[%s2387 + $0x668] sm:$0xff]
        %v2594 = vld [vmem:[%s2387 + $0x670] sm:$0xff]
        %v2595 = vld [vmem:[%s2387 + $0x678] sm:$0xff]
        %v2596 = vld [vmem:[%s2387 + $0x680] sm:$0xff]
        %v2597 = vld [vmem:[%s2387 + $0x688] sm:$0xff]
        %v2598 = vld [vmem:[%s2387 + $0x690] sm:$0xff]
        %v2599 = vld [vmem:[%s2387 + $0x698] sm:$0xff]
        %v2600 = vld [vmem:[%s2387 + $0x6a0] sm:$0xff]
        %v2601 = vld [vmem:[%s2387 + $0x6a8] sm:$0xff]
        %v2602 = vld [vmem:[%s2387 + $0x6b0] sm:$0xff]
        %v2603 = vld [vmem:[%s2387 + $0x6b8] sm:$0xff]
        %v2604 = vld [vmem:[%s2387 + $0x6c0] sm:$0xff]
        %v2605 = vld [vmem:[%s2387 + $0x6c8] sm:$0xff]
        %v2606 = vld [vmem:[%s2387 + $0x6d0] sm:$0xff]
        %v2607 = vld [vmem:[%s2387 + $0x6d8] sm:$0xff]
        %v2608 = vld [vmem:[%s2387 + $0x6e0] sm:$0xff]
        %v2609 = vld [vmem:[%s2387 + $0x6e8] sm:$0xff]
        %v2610 = vld [vmem:[%s2387 + $0x6f0] sm:$0xff]
        %v2611 = vld [vmem:[%s2387 + $0x6f8] sm:$0xff]
        %v2612 = vld [vmem:[%s2387 + $0x700] sm:$0xff]
        %v2613 = vld [vmem:[%s2387 + $0x708] sm:$0xff]
        %v2614 = vld [vmem:[%s2387 + $0x710] sm:$0xff]
        %v2615 = vld [vmem:[%s2387 + $0x718] sm:$0xff]
        %v2616 = vld [vmem:[%s2387 + $0x720] sm:$0xff]
        %v2617 = vld [vmem:[%s2387 + $0x728] sm:$0xff]
        %v2618 = vld [vmem:[%s2387 + $0x730] sm:$0xff]
        %v2619 = vld [vmem:[%s2387 + $0x738] sm:$0xff]
        %v2620 = vld [vmem:[%s2387 + $0x740] sm:$0xff]
        %v2621 = vld [vmem:[%s2387 + $0x748] sm:$0xff]
        %v2622 = vld [vmem:[%s2387 + $0x750] sm:$0xff]
        %v2623 = vld [vmem:[%s2387 + $0x758] sm:$0xff]
        %v2624 = vld [vmem:[%s2387 + $0x760] sm:$0xff]
        %v2625 = vld [vmem:[%s2387 + $0x768] sm:$0xff]
        %v2626 = vld [vmem:[%s2387 + $0x770] sm:$0xff]
        %v2627 = vld [vmem:[%s2387 + $0x778] sm:$0xff]
        %v2628 = vld [vmem:[%s2387 + $0x780] sm:$0xff]
        %v2629 = vld [vmem:[%s2387 + $0x788] sm:$0xff]
        %v2630 = vld [vmem:[%s2387 + $0x790] sm:$0xff]
        %v2631 = vld [vmem:[%s2387 + $0x798] sm:$0xff]
        %v2632 = vld [vmem:[%s2387 + $0x7a0] sm:$0xff]
        %v2633 = vld [vmem:[%s2387 + $0x7a8] sm:$0xff]
        %v2634 = vld [vmem:[%s2387 + $0x7b0] sm:$0xff]
        %v2635 = vld [vmem:[%s2387 + $0x7b8] sm:$0xff]
        %v2636 = vld [vmem:[%s2387 + $0x7c0] sm:$0xff]
        %v2637 = vld [vmem:[%s2387 + $0x7c8] sm:$0xff]
        %v2638 = vld [vmem:[%s2387 + $0x7d0] sm:$0xff]
        %v2639 = vld [vmem:[%s2387 + $0x7d8] sm:$0xff]
        %v2640 = vld [vmem:[%s2387 + $0x7e0] sm:$0xff]
        %v2641 = vld [vmem:[%s2387 + $0x7e8] sm:$0xff]
        %v2642 = vld [vmem:[%s2387 + $0x7f0] sm:$0xff]
        %v2643 = vld [vmem:[%s2387 + $0x7f8] sm:$0xff]
        %v2644 = vld [vmem:[%s2387 + $0x800] sm:$0xff]
        %v2645 = vld [vmem:[%s2387 + $0x808] sm:$0xff]
        %v2646 = vld [vmem:[%s2387 + $0x810] sm:$0xff]
        %v2647 = vld [vmem:[%s2387 + $0x818] sm:$0xff]
        %v2648 = vld [vmem:[%s2387 + $0x820] sm:$0xff]
        %v2649 = vld [vmem:[%s2387 + $0x828] sm:$0xff]
        %v2650 = vld [vmem:[%s2387 + $0x830] sm:$0xff]
        %v2651 = vld [vmem:[%s2387 + $0x838] sm:$0xff]
        %v2652 = vld [vmem:[%s2387 + $0x840] sm:$0xff]
        %v2653 = vld [vmem:[%s2387 + $0x848] sm:$0xff]
        %v2654 = vld [vmem:[%s2387 + $0x850] sm:$0xff]
        %v2655 = vld [vmem:[%s2387 + $0x858] sm:$0xff]
        %v2656 = vld [vmem:[%s2387 + $0x860] sm:$0xff]
        %v2657 = vld [vmem:[%s2387 + $0x868] sm:$0xff]
        %v2658 = vld [vmem:[%s2387 + $0x870] sm:$0xff]
        %v2659 = vld [vmem:[%s2387 + $0x878] sm:$0xff]
        %v2660 = vld [vmem:[%s2387 + $0x880] sm:$0xff]
        %v2661 = vld [vmem:[%s2387 + $0x888] sm:$0xff]
        %v2662 = vld [vmem:[%s2387 + $0x890] sm:$0xff]
        %v2663 = vld [vmem:[%s2387 + $0x898] sm:$0xff]
        %v2664 = vld [vmem:[%s2387 + $0x8a0] sm:$0xff]
        %v2665 = vld [vmem:[%s2387 + $0x8a8] sm:$0xff]
        %v2666 = vld [vmem:[%s2387 + $0x8b0] sm:$0xff]
        %v2667 = vld [vmem:[%s2387 + $0x8b8] sm:$0xff]
        %v2668 = vld [vmem:[%s2387 + $0x8c0] sm:$0xff]
        %v2669 = vld [vmem:[%s2387 + $0x8c8] sm:$0xff]
        %v2670 = vld [vmem:[%s2387 + $0x8d0] sm:$0xff]
        %v2671 = vld [vmem:[%s2387 + $0x8d8] sm:$0xff]
        %v2672 = vld [vmem:[%s2387 + $0x8e0] sm:$0xff]
        %v2673 = vld [vmem:[%s2387 + $0x8e8] sm:$0xff]
        %v2674 = vld [vmem:[%s2387 + $0x8f0] sm:$0xff]
        %v2675 = vld [vmem:[%s2387 + $0x8f8] sm:$0xff]
        %v2676 = vld [vmem:[%s2387 + $0x900] sm:$0xff]
        %v2677 = vld [vmem:[%s2387 + $0x908] sm:$0xff]
        %v2678 = vld [vmem:[%s2387 + $0x910] sm:$0xff]
        %v2679 = vld [vmem:[%s2387 + $0x918] sm:$0xff]
        %v2680 = vld [vmem:[%s2387 + $0x920] sm:$0xff]
        %v2681 = vld [vmem:[%s2387 + $0x928] sm:$0xff]
        %v2682 = vld [vmem:[%s2387 + $0x930] sm:$0xff]
        %v2683 = vld [vmem:[%s2387 + $0x938] sm:$0xff]
        %v2684 = vld [vmem:[%s2387 + $0x940] sm:$0xff]
        %v2685 = vld [vmem:[%s2387 + $0x948] sm:$0xff]
        %v2686 = vld [vmem:[%s2387 + $0x950] sm:$0xff]
        %v2687 = vld [vmem:[%s2387 + $0x958] sm:$0xff]
        %v2688 = vld [vmem:[%s2387 + $0x960] sm:$0xff]
        %v2689 = vld [vmem:[%s2387 + $0x968] sm:$0xff]
        %v2690 = vld [vmem:[%s2387 + $0x970] sm:$0xff]
        %v2691 = vld [vmem:[%s2387 + $0x978] sm:$0xff]
        %v2692 = vld [vmem:[%s2387 + $0x980] sm:$0xff]
        %v2693 = vld [vmem:[%s2387 + $0x988] sm:$0xff]
        %v2694 = vld [vmem:[%s2387 + $0x990] sm:$0xff]
        %v2695 = vld [vmem:[%s2387 + $0x998] sm:$0xff]
        %v2696 = vld [vmem:[%s2387 + $0x9a0] sm:$0xff]
        %v2697 = vld [vmem:[%s2387 + $0x9a8] sm:$0xff]
        %v2698 = vld [vmem:[%s2387 + $0x9b0] sm:$0xff]
        %v2699 = vld [vmem:[%s2387 + $0x9b8] sm:$0xff]
        %v2700 = vld [vmem:[%s2387 + $0x9c0] sm:$0xff]
        %v2701 = vld [vmem:[%s2387 + $0x9c8] sm:$0xff]
        %v2702 = vld [vmem:[%s2387 + $0x9d0] sm:$0xff]
        %v2703 = vld [vmem:[%s2387 + $0x9d8] sm:$0xff]
        %v2704 = vld [vmem:[%s2387 + $0x9e0] sm:$0xff]
        %v2705 = vld [vmem:[%s2387 + $0x9e8] sm:$0xff]
        %v2706 = vld [vmem:[%s2387 + $0x9f0] sm:$0xff]
        %v2707 = vld [vmem:[%s2387 + $0x9f8] sm:$0xff]
        %v2708 = vld [vmem:[%s2387 + $0xa00] sm:$0xff]
        %v2709 = vld [vmem:[%s2387 + $0xa08] sm:$0xff]
        %v2710 = vld [vmem:[%s2387 + $0xa10] sm:$0xff]
        %v2711 = vld [vmem:[%s2387 + $0xa18] sm:$0xff]
        %v2712 = vld [vmem:[%s2387 + $0xa20] sm:$0xff]
        %v2713 = vld [vmem:[%s2387 + $0xa28] sm:$0xff]
        %v2714 = vld [vmem:[%s2387 + $0xa30] sm:$0xff]
        %v2715 = vld [vmem:[%s2387 + $0xa38] sm:$0xff]
        %v2716 = vld [vmem:[%s2387 + $0xa40] sm:$0xff]
        %v2717 = vld [vmem:[%s2387 + $0xa48] sm:$0xff]
        %v2718 = vld [vmem:[%s2387 + $0xa50] sm:$0xff]
        %v2719 = vld [vmem:[%s2387 + $0xa58] sm:$0xff]
        %v2720 = vld [vmem:[%s2387 + $0xa60] sm:$0xff]
        %v2721 = vld [vmem:[%s2387 + $0xa68] sm:$0xff]
        %v2722 = vld [vmem:[%s2387 + $0xa70] sm:$0xff]
        %v2723 = vld [vmem:[%s2387 + $0xa78] sm:$0xff]
        %v2724 = vld [vmem:[%s2387 + $0xa80] sm:$0xff]
        %v2725 = vld [vmem:[%s2387 + $0xa88] sm:$0xff]
        %v2726 = vld [vmem:[%s2387 + $0xa90] sm:$0xff]
        %v2727 = vld [vmem:[%s2387 + $0xa98] sm:$0xff]
        %v2728 = vld [vmem:[%s2387 + $0xaa0] sm:$0xff]
        %v2729 = vld [vmem:[%s2387 + $0xaa8] sm:$0xff]
        %v2730 = vld [vmem:[%s2387 + $0xab0] sm:$0xff]
        %v2731 = vld [vmem:[%s2387 + $0xab8] sm:$0xff]
        %v2732 = vld [vmem:[%s2387 + $0xac0] sm:$0xff]
        %v2733 = vld [vmem:[%s2387 + $0xac8] sm:$0xff]
        %v2734 = vld [vmem:[%s2387 + $0xad0] sm:$0xff]
        %v2735 = vld [vmem:[%s2387 + $0xad8] sm:$0xff]
        %v2736 = vld [vmem:[%s2387 + $0xae0] sm:$0xff]
        %v2737 = vld [vmem:[%s2387 + $0xae8] sm:$0xff]
        %v2738 = vld [vmem:[%s2387 + $0xaf0] sm:$0xff]
        %v2739 = vld [vmem:[%s2387 + $0xaf8] sm:$0xff]
        %v2740 = vld [vmem:[%s2387 + $0xb00] sm:$0xff]
        %v2741 = vld [vmem:[%s2387 + $0xb08] sm:$0xff]
        %v2742 = vld [vmem:[%s2387 + $0xb10] sm:$0xff]
        %v2743 = vld [vmem:[%s2387 + $0xb18] sm:$0xff]
        %v2744 = vld [vmem:[%s2387 + $0xb20] sm:$0xff]
        %v2745 = vld [vmem:[%s2387 + $0xb28] sm:$0xff]
        %v2746 = vld [vmem:[%s2387 + $0xb30] sm:$0xff]
        %v2747 = vld [vmem:[%s2387 + $0xb38] sm:$0xff]
        %v2748 = vld [vmem:[%s2387 + $0xb40] sm:$0xff]
        %v2749 = vld [vmem:[%s2387 + $0xb48] sm:$0xff]
        %v2750 = vld [vmem:[%s2387 + $0xb50] sm:$0xff]
        %v2751 = vld [vmem:[%s2387 + $0xb58] sm:$0xff]
        %v2752 = vld [vmem:[%s2387 + $0xb60] sm:$0xff]
        %v2753 = vld [vmem:[%s2387 + $0xb68] sm:$0xff]
        %v2754 = vld [vmem:[%s2387 + $0xb70] sm:$0xff]
        %v2755 = vld [vmem:[%s2387 + $0xb78] sm:$0xff]
        %v2756 = vld [vmem:[%s2387 + $0xb80] sm:$0xff]
        %v2757 = vld [vmem:[%s2387 + $0xb88] sm:$0xff]
        %v2758 = vld [vmem:[%s2387 + $0xb90] sm:$0xff]
        %v2759 = vld [vmem:[%s2387 + $0xb98] sm:$0xff]
        %v2760 = vld [vmem:[%s2387 + $0xba0] sm:$0xff]
        %v2761 = vld [vmem:[%s2387 + $0xba8] sm:$0xff]
        %v2762 = vld [vmem:[%s2387 + $0xbb0] sm:$0xff]
        %v2763 = vld [vmem:[%s2387 + $0xbb8] sm:$0xff]
        %v2764 = vld [vmem:[%s2387 + $0xbc0] sm:$0xff]
        %v2765 = vld [vmem:[%s2387 + $0xbc8] sm:$0xff]
        %v2766 = vld [vmem:[%s2387 + $0xbd0] sm:$0xff]
        %v2767 = vld [vmem:[%s2387 + $0xbd8] sm:$0xff]
        %v2768 = vld [vmem:[%s2387 + $0xbe0] sm:$0xff]
        %v2769 = vld [vmem:[%s2387 + $0xbe8] sm:$0xff]
        %v2770 = vld [vmem:[%s2387 + $0xbf0] sm:$0xff]
        %v2771 = vld [vmem:[%s2387 + $0xbf8] sm:$0xff]
        %v2772 = vld [vmem:[%s2387 + $0xc00] sm:$0xff]
        %v2773 = vld [vmem:[%s2387 + $0xc08] sm:$0xff]
        %v2774 = vld [vmem:[%s2387 + $0xc10] sm:$0xff]
        %v2775 = vld [vmem:[%s2387 + $0xc18] sm:$0xff]
        %v2776 = vld [vmem:[%s2387 + $0xc20] sm:$0xff]
        %v2777 = vld [vmem:[%s2387 + $0xc28] sm:$0xff]
        %v2778 = vld [vmem:[%s2387 + $0xc30] sm:$0xff]
        %v2779 = vld [vmem:[%s2387 + $0xc38] sm:$0xff]
        %v2780 = vld [vmem:[%s2387 + $0xc40] sm:$0xff]
        %v2781 = vld [vmem:[%s2387 + $0xc48] sm:$0xff]
        %v2782 = vld [vmem:[%s2387 + $0xc50] sm:$0xff]
        %v2783 = vld [vmem:[%s2387 + $0xc58] sm:$0xff]
        %v2784 = vld [vmem:[%s2387 + $0xc60] sm:$0xff]
        %v2785 = vld [vmem:[%s2387 + $0xc68] sm:$0xff]
        %v2786 = vld [vmem:[%s2387 + $0xc70] sm:$0xff]
        %v2787 = vld [vmem:[%s2387 + $0xc78] sm:$0xff]
        %v2788 = vld [vmem:[%s2387 + $0xc80] sm:$0xff]
        %v2789 = vld [vmem:[%s2387 + $0xc88] sm:$0xff]
        %v2790 = vld [vmem:[%s2387 + $0xc90] sm:$0xff]
        %v2791 = vld [vmem:[%s2387 + $0xc98] sm:$0xff]
        %v2792 = vld [vmem:[%s2387 + $0xca0] sm:$0xff]
        %v2793 = vld [vmem:[%s2387 + $0xca8] sm:$0xff]
        %v2794 = vld [vmem:[%s2387 + $0xcb0] sm:$0xff]
        %v2795 = vld [vmem:[%s2387 + $0xcb8] sm:$0xff]
        %v2796 = vld [vmem:[%s2387 + $0xcc0] sm:$0xff]
        %v2797 = vld [vmem:[%s2387 + $0xcc8] sm:$0xff]
        %v2798 = vld [vmem:[%s2387 + $0xcd0] sm:$0xff]
        %v2799 = vld [vmem:[%s2387 + $0xcd8] sm:$0xff]
        %v2800 = vld [vmem:[%s2387 + $0xce0] sm:$0xff]
        %v2801 = vld [vmem:[%s2387 + $0xce8] sm:$0xff]
        %v2802 = vld [vmem:[%s2387 + $0xcf0] sm:$0xff]
        %v2803 = vld [vmem:[%s2387 + $0xcf8] sm:$0xff]
        %v2804 = vld [vmem:[%s2387 + $0xd00] sm:$0xff]
        %v2805 = vld [vmem:[%s2387 + $0xd08] sm:$0xff]
        %v2806 = vld [vmem:[%s2387 + $0xd10] sm:$0xff]
        %v2807 = vld [vmem:[%s2387 + $0xd18] sm:$0xff]
        %v2808 = vld [vmem:[%s2387 + $0xd20] sm:$0xff]
        %v2809 = vld [vmem:[%s2387 + $0xd28] sm:$0xff]
        %v2810 = vld [vmem:[%s2387 + $0xd30] sm:$0xff]
        %v2811 = vld [vmem:[%s2387 + $0xd38] sm:$0xff]
        %v2812 = vld [vmem:[%s2387 + $0xd40] sm:$0xff]
        %v2813 = vld [vmem:[%s2387 + $0xd48] sm:$0xff]
        %v2814 = vld [vmem:[%s2387 + $0xd50] sm:$0xff]
        %v2815 = vld [vmem:[%s2387 + $0xd58] sm:$0xff]
        %v2816 = vld [vmem:[%s2387 + $0xd60] sm:$0xff]
        %v2817 = vld [vmem:[%s2387 + $0xd68] sm:$0xff]
        %v2818 = vld [vmem:[%s2387 + $0xd70] sm:$0xff]
        %v2819 = vld [vmem:[%s2387 + $0xd78] sm:$0xff]
        %v2820 = vld [vmem:[%s2387 + $0xd80] sm:$0xff]
        %v2821 = vld [vmem:[%s2387 + $0xd88] sm:$0xff]
        %v2822 = vld [vmem:[%s2387 + $0xd90] sm:$0xff]
        %v2823 = vld [vmem:[%s2387 + $0xd98] sm:$0xff]
        %v2824 = vld [vmem:[%s2387 + $0xda0] sm:$0xff]
        %v2825 = vld [vmem:[%s2387 + $0xda8] sm:$0xff]
        %v2826 = vld [vmem:[%s2387 + $0xdb0] sm:$0xff]
        %v2827 = vld [vmem:[%s2387 + $0xdb8] sm:$0xff]
        %v2828 = vld [vmem:[%s2387 + $0xdc0] sm:$0xff]
        %v2829 = vld [vmem:[%s2387 + $0xdc8] sm:$0xff]
        %v2830 = vld [vmem:[%s2387 + $0xdd0] sm:$0xff]
        %v2831 = vld [vmem:[%s2387 + $0xdd8] sm:$0xff]
        %v2832 = vld [vmem:[%s2387 + $0xde0] sm:$0xff]
        %v2833 = vld [vmem:[%s2387 + $0xde8] sm:$0xff]
        %v2834 = vld [vmem:[%s2387 + $0xdf0] sm:$0xff]
        %v2835 = vld [vmem:[%s2387 + $0xdf8] sm:$0xff]
        %v2836 = vld [vmem:[%s2387 + $0xe00] sm:$0xff]
        %v2837 = vld [vmem:[%s2387 + $0xe08] sm:$0xff]
        %v2838 = vld [vmem:[%s2387 + $0xe10] sm:$0xff]
        %v2839 = vld [vmem:[%s2387 + $0xe18] sm:$0xff]
        %v2840 = vld [vmem:[%s2387 + $0xe20] sm:$0xff]
        %v2841 = vld [vmem:[%s2387 + $0xe28] sm:$0xff]
        %v2842 = vld [vmem:[%s2387 + $0xe30] sm:$0xff]
        %v2843 = vld [vmem:[%s2387 + $0xe38] sm:$0xff]
        %v2844 = vld [vmem:[%s2387 + $0xe40] sm:$0xff]
        %v2845 = vld [vmem:[%s2387 + $0xe48] sm:$0xff]
        %v2846 = vld [vmem:[%s2387 + $0xe50] sm:$0xff]
        %v2847 = vld [vmem:[%s2387 + $0xe58] sm:$0xff]
        %v2848 = vld [vmem:[%s2387 + $0xe60] sm:$0xff]
        %v2849 = vld [vmem:[%s2387 + $0xe68] sm:$0xff]
        %v2850 = vld [vmem:[%s2387 + $0xe70] sm:$0xff]
        %v2851 = vld [vmem:[%s2387 + $0xe78] sm:$0xff]
        %v2852 = vld [vmem:[%s2387 + $0xe80] sm:$0xff]
        %v2853 = vld [vmem:[%s2387 + $0xe88] sm:$0xff]
        %v2854 = vld [vmem:[%s2387 + $0xe90] sm:$0xff]
        %v2855 = vld [vmem:[%s2387 + $0xe98] sm:$0xff]
        %v2856 = vld [vmem:[%s2387 + $0xea0] sm:$0xff]
        %v2857 = vld [vmem:[%s2387 + $0xea8] sm:$0xff]
        %v2858 = vld [vmem:[%s2387 + $0xeb0] sm:$0xff]
        %v2859 = vld [vmem:[%s2387 + $0xeb8] sm:$0xff]
        %v2860 = vld [vmem:[%s2387 + $0xec0] sm:$0xff]
        %v2861 = vld [vmem:[%s2387 + $0xec8] sm:$0xff]
        %v2862 = vld [vmem:[%s2387 + $0xed0] sm:$0xff]
        %v2863 = vld [vmem:[%s2387 + $0xed8] sm:$0xff]
        %v2864 = vld [vmem:[%s2387 + $0xee0] sm:$0xff]
        %v2865 = vld [vmem:[%s2387 + $0xee8] sm:$0xff]
        %v2866 = vld [vmem:[%s2387 + $0xef0] sm:$0xff]
        %v2867 = vld [vmem:[%s2387 + $0xef8] sm:$0xff]
        %v2868 = vld [vmem:[%s2387 + $0xf00] sm:$0xff]
        %v2869 = vld [vmem:[%s2387 + $0xf08] sm:$0xff]
        %v2870 = vld [vmem:[%s2387 + $0xf10] sm:$0xff]
        %v2871 = vld [vmem:[%s2387 + $0xf18] sm:$0xff]
        %v2872 = vld [vmem:[%s2387 + $0xf20] sm:$0xff]
        %v2873 = vld [vmem:[%s2387 + $0xf28] sm:$0xff]
        %v2874 = vld [vmem:[%s2387 + $0xf30] sm:$0xff]
        %v2875 = vld [vmem:[%s2387 + $0xf38] sm:$0xff]
        %v2876 = vld [vmem:[%s2387 + $0xf40] sm:$0xff]
        %v2877 = vld [vmem:[%s2387 + $0xf48] sm:$0xff]
        %v2878 = vld [vmem:[%s2387 + $0xf50] sm:$0xff]
        %v2879 = vld [vmem:[%s2387 + $0xf58] sm:$0xff]
        %v2880 = vld [vmem:[%s2387 + $0xf60] sm:$0xff]
        %v2881 = vld [vmem:[%s2387 + $0xf68] sm:$0xff]
        %v2882 = vld [vmem:[%s2387 + $0xf70] sm:$0xff]
        %v2883 = vld [vmem:[%s2387 + $0xf78] sm:$0xff]
        %v2884 = vld [vmem:[%s2387 + $0xf80] sm:$0xff]
        %v2885 = vld [vmem:[%s2387 + $0xf88] sm:$0xff]
        %v2886 = vld [vmem:[%s2387 + $0xf90] sm:$0xff]
        %v2887 = vld [vmem:[%s2387 + $0xf98] sm:$0xff]
        %v2888 = vld [vmem:[%s2387 + $0xfa0] sm:$0xff]
        %v2889 = vld [vmem:[%s2387 + $0xfa8] sm:$0xff]
        %v2890 = vld [vmem:[%s2387 + $0xfb0] sm:$0xff]
        %v2891 = vld [vmem:[%s2387 + $0xfb8] sm:$0xff]
        %v2892 = vld [vmem:[%s2387 + $0xfc0] sm:$0xff]
        %v2893 = vld [vmem:[%s2387 + $0xfc8] sm:$0xff]
        %v2894 = vld [vmem:[%s2387 + $0xfd0] sm:$0xff]
        %v2895 = vld [vmem:[%s2387 + $0xfd8] sm:$0xff]
        %v2896 = vld [vmem:[%s2387 + $0xfe0] sm:$0xff]
        %v2897 = vld [vmem:[%s2387 + $0xfe8] sm:$0xff]
        %v2898 = vld [vmem:[%s2387 + $0xff0] sm:$0xff]
        %v2899 = vld [vmem:[%s2387 + $0xff8] sm:$0xff]
        %vm2904 = vcmask 1045504
        %v2905 = vrot.slane %v2383, 2
        %v2906 = vrot.slane %v2385, 2
        %v2907 = vsel %vm2904, %v2905, %v2906
        %v2908 = vrot.slane %v2384, 2
        %v2909 = vrot.slane %v2386, 2
        %v2910 = vsel %vm2904, %v2908, %v2909
        %2913 = vmatprep.subr.mxu0 %v2389
        %2914 = vmatpush1.msra.mxu0 %v2388
        %2915 = vmatprep.subr.mxu0 %v2405
        %2916 = vmatpush1.msra.mxu0 %v2404
        %2917 = vmatprep.subr.mxu0 %v2421
        %2918 = vmatpush1.msra.mxu0 %v2420
        %2919 = vmatprep.subr.mxu0 %v2437
        %2920 = vmatpush1.msra.mxu0 %v2436
        %2921 = vmatprep.subr.mxu0 %v2453
        %2922 = vmatpush1.msra.mxu0 %v2452
        %2923 = vmatprep.subr.mxu0 %v2469
        %2924 = vmatpush1.msra.mxu0 %v2468
        %2925 = vmatprep.subr.mxu0 %v2485
        %2926 = vmatpush1.msra.mxu0 %v2484
        %2927 = vmatprep.subr.mxu0 %v2501
        %2928 = vmatpush1.msra.mxu0 %v2500
        %2929 = vmatprep.subr.mxu0 %v2517
        %2930 = vmatpush1.msra.mxu0 %v2516
        %2931 = vmatprep.subr.mxu0 %v2533
        %2932 = vmatpush1.msra.mxu0 %v2532
        %2933 = vmatprep.subr.mxu0 %v2549
        %2934 = vmatpush1.msra.mxu0 %v2548
        %2935 = vmatprep.subr.mxu0 %v2565
        %2936 = vmatpush1.msra.mxu0 %v2564
        %2937 = vmatprep.subr.mxu0 %v2581
        %2938 = vmatpush1.msra.mxu0 %v2580
        %2939 = vmatprep.subr.mxu0 %v2597
        %2940 = vmatpush1.msra.mxu0 %v2596
        %2941 = vmatprep.subr.mxu0 %v2613
        %2942 = vmatpush1.msra.mxu0 %v2612
        %2943 = vmatprep.subr.mxu0 %v2629
        %2944 = vmatpush1.msra.mxu0 %v2628
        %2945 = vmatprep.subr.mxu0 %v2645
        %2946 = vmatpush1.msra.mxu0 %v2644
        %2947 = vmatprep.subr.mxu0 %v2661
        %2948 = vmatpush1.msra.mxu0 %v2660
        %2949 = vmatprep.subr.mxu0 %v2677
        %2950 = vmatpush1.msra.mxu0 %v2676
        %2951 = vmatprep.subr.mxu0 %v2693
        %2952 = vmatpush1.msra.mxu0 %v2692
        %2953 = vmatprep.subr.mxu0 %v2709
        %2954 = vmatpush1.msra.mxu0 %v2708
        %2955 = vmatprep.subr.mxu0 %v2725
        %2956 = vmatpush1.msra.mxu0 %v2724
        %2957 = vmatprep.subr.mxu0 %v2741
        %2958 = vmatpush1.msra.mxu0 %v2740
        %2959 = vmatprep.subr.mxu0 %v2757
        %2960 = vmatpush1.msra.mxu0 %v2756
        %2961 = vmatprep.subr.mxu0 %v2773
        %2962 = vmatpush1.msra.mxu0 %v2772
        %2963 = vmatprep.subr.mxu0 %v2789
        %2964 = vmatpush1.msra.mxu0 %v2788
        %2965 = vmatprep.subr.mxu0 %v2805
        %2966 = vmatpush1.msra.mxu0 %v2804
        %2967 = vmatprep.subr.mxu0 %v2821
        %2968 = vmatpush1.msra.mxu0 %v2820
        %2969 = vmatprep.subr.mxu0 %v2837
        %2970 = vmatpush1.msra.mxu0 %v2836
        %2971 = vmatprep.subr.mxu0 %v2853
        %2972 = vmatpush1.msra.mxu0 %v2852
        %2973 = vmatprep.subr.mxu0 %v2869
        %2974 = vmatpush1.msra.mxu0 %v2868
        %2975 = vmatprep.subr.mxu0 %v2885
        %2976 = vmatpush1.msra.mxu0 %v2884
        %2977 = vmatprep.mubr.f32.mxu0 %v2910
        %2978 = vmatmul.mubr.f32.gmra.mrb[0].mxu0 %v2907
        %v2979 = vpop.f32.mrb[0].mxu0
        %v2980 = vadd.f32 0.0, %v2979
        %v2981 = vpop.f32.mrb[0].mxu0
        %v2982 = vadd.f32 0.0, %v2981
        %2983 = vdwg.mxu0
        %2984 = vmatprep.subr.mxu0 %v2391
        %2985 = vmatpush1.msra.mxu0 %v2390
        %2986 = vmatprep.subr.mxu0 %v2407
        %2987 = vmatpush1.msra.mxu0 %v2406
        %2988 = vmatprep.subr.mxu0 %v2423
        %2989 = vmatpush1.msra.mxu0 %v2422
        %2990 = vmatprep.subr.mxu0 %v2439
        %2991 = vmatpush1.msra.mxu0 %v2438
        %2992 = vmatprep.subr.mxu0 %v2455
        %2993 = vmatpush1.msra.mxu0 %v2454
        %2994 = vmatprep.subr.mxu0 %v2471
        %2995 = vmatpush1.msra.mxu0 %v2470
        %2996 = vmatprep.subr.mxu0 %v2487
        %2997 = vmatpush1.msra.mxu0 %v2486
        %2998 = vmatprep.subr.mxu0 %v2503
        %2999 = vmatpush1.msra.mxu0 %v2502
        %3000 = vmatprep.subr.mxu0 %v2519
        %3001 = vmatpush1.msra.mxu0 %v2518
        %3002 = vmatprep.subr.mxu0 %v2535
        %3003 = vmatpush1.msra.mxu0 %v2534
        %3004 = vmatprep.subr.mxu0 %v2551
        %3005 = vmatpush1.msra.mxu0 %v2550
        %3006 = vmatprep.subr.mxu0 %v2567
        %3007 = vmatpush1.msra.mxu0 %v2566
        %3008 = vmatprep.subr.mxu0 %v2583
        %3009 = vmatpush1.msra.mxu0 %v2582
        %3010 = vmatprep.subr.mxu0 %v2599
        %3011 = vmatpush1.msra.mxu0 %v2598
        %3012 = vmatprep.subr.mxu0 %v2615
        %3013 = vmatpush1.msra.mxu0 %v2614
        %3014 = vmatprep.subr.mxu0 %v2631
        %3015 = vmatpush1.msra.mxu0 %v2630
        %3016 = vmatprep.subr.mxu0 %v2647
        %3017 = vmatpush1.msra.mxu0 %v2646
        %3018 = vmatprep.subr.mxu0 %v2663
        %3019 = vmatpush1.msra.mxu0 %v2662
        %3020 = vmatprep.subr.mxu0 %v2679
        %3021 = vmatpush1.msra.mxu0 %v2678
        %3022 = vmatprep.subr.mxu0 %v2695
        %3023 = vmatpush1.msra.mxu0 %v2694
        %3024 = vmatprep.subr.mxu0 %v2711
        %3025 = vmatpush1.msra.mxu0 %v2710
        %3026 = vmatprep.subr.mxu0 %v2727
        %3027 = vmatpush1.msra.mxu0 %v2726
        %3028 = vmatprep.subr.mxu0 %v2743
        %3029 = vmatpush1.msra.mxu0 %v2742
        %3030 = vmatprep.subr.mxu0 %v2759
        %3031 = vmatpush1.msra.mxu0 %v2758
        %3032 = vmatprep.subr.mxu0 %v2775
        %3033 = vmatpush1.msra.mxu0 %v2774
        %3034 = vmatprep.subr.mxu0 %v2791
        %3035 = vmatpush1.msra.mxu0 %v2790
        %3036 = vmatprep.subr.mxu0 %v2807
        %3037 = vmatpush1.msra.mxu0 %v2806
        %3038 = vmatprep.subr.mxu0 %v2823
        %3039 = vmatpush1.msra.mxu0 %v2822
        %3040 = vmatprep.subr.mxu0 %v2839
        %3041 = vmatpush1.msra.mxu0 %v2838
        %3042 = vmatprep.subr.mxu0 %v2855
        %3043 = vmatpush1.msra.mxu0 %v2854
        %3044 = vmatprep.subr.mxu0 %v2871
        %3045 = vmatpush1.msra.mxu0 %v2870
        %3046 = vmatprep.subr.mxu0 %v2887
        %3047 = vmatpush1.msra.mxu0 %v2886
        %3048 = vmatprep.mubr.f32.mxu0 %v2910
        %3049 = vmatmul.mubr.f32.gmra.mrb[0].mxu0 %v2907
        %v3050 = vpop.f32.mrb[0].mxu0
        %v3051 = vadd.f32 0.0, %v3050
        %v3052 = vpop.f32.mrb[0].mxu0
        %v3053 = vadd.f32 0.0, %v3052
        %3054 = vdwg.mxu0
        %3055 = vmatprep.subr.mxu0 %v2393
        %3056 = vmatpush1.msra.mxu0 %v2392
        %3057 = vmatprep.subr.mxu0 %v2409
        %3058 = vmatpush1.msra.mxu0 %v2408
        %3059 = vmatprep.subr.mxu0 %v2425
        %3060 = vmatpush1.msra.mxu0 %v2424
        %3061 = vmatprep.subr.mxu0 %v2441
        %3062 = vmatpush1.msra.mxu0 %v2440
        %3063 = vmatprep.subr.mxu0 %v2457
        %3064 = vmatpush1.msra.mxu0 %v2456
        %3065 = vmatprep.subr.mxu0 %v2473
        %3066 = vmatpush1.msra.mxu0 %v2472
        %3067 = vmatprep.subr.mxu0 %v2489
        %3068 = vmatpush1.msra.mxu0 %v2488
        %3069 = vmatprep.subr.mxu0 %v2505
        %3070 = vmatpush1.msra.mxu0 %v2504
        %3071 = vmatprep.subr.mxu0 %v2521
        %3072 = vmatpush1.msra.mxu0 %v2520
        %3073 = vmatprep.subr.mxu0 %v2537
        %3074 = vmatpush1.msra.mxu0 %v2536
        %3075 = vmatprep.subr.mxu0 %v2553
        %3076 = vmatpush1.msra.mxu0 %v2552
        %3077 = vmatprep.subr.mxu0 %v2569
        %3078 = vmatpush1.msra.mxu0 %v2568
        %3079 = vmatprep.subr.mxu0 %v2585
        %3080 = vmatpush1.msra.mxu0 %v2584
        %3081 = vmatprep.subr.mxu0 %v2601
        %3082 = vmatpush1.msra.mxu0 %v2600
        %3083 = vmatprep.subr.mxu0 %v2617
        %3084 = vmatpush1.msra.mxu0 %v2616
        %3085 = vmatprep.subr.mxu0 %v2633
        %3086 = vmatpush1.msra.mxu0 %v2632
        %3087 = vmatprep.subr.mxu0 %v2649
        %3088 = vmatpush1.msra.mxu0 %v2648
        %3089 = vmatprep.subr.mxu0 %v2665
        %3090 = vmatpush1.msra.mxu0 %v2664
        %3091 = vmatprep.subr.mxu0 %v2681
        %3092 = vmatpush1.msra.mxu0 %v2680
        %3093 = vmatprep.subr.mxu0 %v2697
        %3094 = vmatpush1.msra.mxu0 %v2696
        %3095 = vmatprep.subr.mxu0 %v2713
        %3096 = vmatpush1.msra.mxu0 %v2712
        %3097 = vmatprep.subr.mxu0 %v2729
        %3098 = vmatpush1.msra.mxu0 %v2728
        %3099 = vmatprep.subr.mxu0 %v2745
        %3100 = vmatpush1.msra.mxu0 %v2744
        %3101 = vmatprep.subr.mxu0 %v2761
        %3102 = vmatpush1.msra.mxu0 %v2760
        %3103 = vmatprep.subr.mxu0 %v2777
        %3104 = vmatpush1.msra.mxu0 %v2776
        %3105 = vmatprep.subr.mxu0 %v2793
        %3106 = vmatpush1.msra.mxu0 %v2792
        %3107 = vmatprep.subr.mxu0 %v2809
        %3108 = vmatpush1.msra.mxu0 %v2808
        %3109 = vmatprep.subr.mxu0 %v2825
        %3110 = vmatpush1.msra.mxu0 %v2824
        %3111 = vmatprep.subr.mxu0 %v2841
        %3112 = vmatpush1.msra.mxu0 %v2840
        %3113 = vmatprep.subr.mxu0 %v2857
        %3114 = vmatpush1.msra.mxu0 %v2856
        %3115 = vmatprep.subr.mxu0 %v2873
        %3116 = vmatpush1.msra.mxu0 %v2872
        %3117 = vmatprep.subr.mxu0 %v2889
        %3118 = vmatpush1.msra.mxu0 %v2888
        %3119 = vmatprep.mubr.f32.mxu0 %v2910
        %3120 = vmatmul.mubr.f32.gmra.mrb[0].mxu0 %v2907
        %v3121 = vpop.f32.mrb[0].mxu0
        %v3122 = vadd.f32 0.0, %v3121
        %v3123 = vpop.f32.mrb[0].mxu0
        %v3124 = vadd.f32 0.0, %v3123
        %3125 = vdwg.mxu0
        %3126 = vmatprep.subr.mxu0 %v2395
        %3127 = vmatpush1.msra.mxu0 %v2394
        %3128 = vmatprep.subr.mxu0 %v2411
        %3129 = vmatpush1.msra.mxu0 %v2410
        %3130 = vmatprep.subr.mxu0 %v2427
        %3131 = vmatpush1.msra.mxu0 %v2426
        %3132 = vmatprep.subr.mxu0 %v2443
        %3133 = vmatpush1.msra.mxu0 %v2442
        %3134 = vmatprep.subr.mxu0 %v2459
        %3135 = vmatpush1.msra.mxu0 %v2458
        %3136 = vmatprep.subr.mxu0 %v2475
        %3137 = vmatpush1.msra.mxu0 %v2474
        %3138 = vmatprep.subr.mxu0 %v2491
        %3139 = vmatpush1.msra.mxu0 %v2490
        %3140 = vmatprep.subr.mxu0 %v2507
        %3141 = vmatpush1.msra.mxu0 %v2506
        %3142 = vmatprep.subr.mxu0 %v2523
        %3143 = vmatpush1.msra.mxu0 %v2522
        %3144 = vmatprep.subr.mxu0 %v2539
        %3145 = vmatpush1.msra.mxu0 %v2538
        %3146 = vmatprep.subr.mxu0 %v2555
        %3147 = vmatpush1.msra.mxu0 %v2554
        %3148 = vmatprep.subr.mxu0 %v2571
        %3149 = vmatpush1.msra.mxu0 %v2570
        %3150 = vmatprep.subr.mxu0 %v2587
        %3151 = vmatpush1.msra.mxu0 %v2586
        %3152 = vmatprep.subr.mxu0 %v2603
        %3153 = vmatpush1.msra.mxu0 %v2602
        %3154 = vmatprep.subr.mxu0 %v2619
        %3155 = vmatpush1.msra.mxu0 %v2618
        %3156 = vmatprep.subr.mxu0 %v2635
        %3157 = vmatpush1.msra.mxu0 %v2634
        %3158 = vmatprep.subr.mxu0 %v2651
        %3159 = vmatpush1.msra.mxu0 %v2650
        %3160 = vmatprep.subr.mxu0 %v2667
        %3161 = vmatpush1.msra.mxu0 %v2666
        %3162 = vmatprep.subr.mxu0 %v2683
        %3163 = vmatpush1.msra.mxu0 %v2682
        %3164 = vmatprep.subr.mxu0 %v2699
        %3165 = vmatpush1.msra.mxu0 %v2698
        %3166 = vmatprep.subr.mxu0 %v2715
        %3167 = vmatpush1.msra.mxu0 %v2714
        %3168 = vmatprep.subr.mxu0 %v2731
        %3169 = vmatpush1.msra.mxu0 %v2730
        %3170 = vmatprep.subr.mxu0 %v2747
        %3171 = vmatpush1.msra.mxu0 %v2746
        %3172 = vmatprep.subr.mxu0 %v2763
        %3173 = vmatpush1.msra.mxu0 %v2762
        %3174 = vmatprep.subr.mxu0 %v2779
        %3175 = vmatpush1.msra.mxu0 %v2778
        %3176 = vmatprep.subr.mxu0 %v2795
        %3177 = vmatpush1.msra.mxu0 %v2794
        %3178 = vmatprep.subr.mxu0 %v2811
        %3179 = vmatpush1.msra.mxu0 %v2810
        %3180 = vmatprep.subr.mxu0 %v2827
        %3181 = vmatpush1.msra.mxu0 %v2826
        %3182 = vmatprep.subr.mxu0 %v2843
        %3183 = vmatpush1.msra.mxu0 %v2842
        %3184 = vmatprep.subr.mxu0 %v2859
        %3185 = vmatpush1.msra.mxu0 %v2858
        %3186 = vmatprep.subr.mxu0 %v2875
        %3187 = vmatpush1.msra.mxu0 %v2874
        %3188 = vmatprep.subr.mxu0 %v2891
        %3189 = vmatpush1.msra.mxu0 %v2890
        %3190 = vmatprep.mubr.f32.mxu0 %v2910
        %3191 = vmatmul.mubr.f32.gmra.mrb[0].mxu0 %v2907
        %v3192 = vpop.f32.mrb[0].mxu0
        %v3193 = vadd.f32 0.0, %v3192
        %v3194 = vpop.f32.mrb[0].mxu0
        %v3195 = vadd.f32 0.0, %v3194
        %3196 = vdwg.mxu0
        %3197 = vmatprep.subr.mxu0 %v2397
        %3198 = vmatpush1.msra.mxu0 %v2396
        %3199 = vmatprep.subr.mxu0 %v2413
        %3200 = vmatpush1.msra.mxu0 %v2412
        %3201 = vmatprep.subr.mxu0 %v2429
        %3202 = vmatpush1.msra.mxu0 %v2428
        %3203 = vmatprep.subr.mxu0 %v2445
        %3204 = vmatpush1.msra.mxu0 %v2444
        %3205 = vmatprep.subr.mxu0 %v2461
        %3206 = vmatpush1.msra.mxu0 %v2460
        %3207 = vmatprep.subr.mxu0 %v2477
        %3208 = vmatpush1.msra.mxu0 %v2476
        %3209 = vmatprep.subr.mxu0 %v2493
        %3210 = vmatpush1.msra.mxu0 %v2492
        %3211 = vmatprep.subr.mxu0 %v2509
        %3212 = vmatpush1.msra.mxu0 %v2508
        %3213 = vmatprep.subr.mxu0 %v2525
        %3214 = vmatpush1.msra.mxu0 %v2524
        %3215 = vmatprep.subr.mxu0 %v2541
        %3216 = vmatpush1.msra.mxu0 %v2540
        %3217 = vmatprep.subr.mxu0 %v2557
        %3218 = vmatpush1.msra.mxu0 %v2556
        %3219 = vmatprep.subr.mxu0 %v2573
        %3220 = vmatpush1.msra.mxu0 %v2572
        %3221 = vmatprep.subr.mxu0 %v2589
        %3222 = vmatpush1.msra.mxu0 %v2588
        %3223 = vmatprep.subr.mxu0 %v2605
        %3224 = vmatpush1.msra.mxu0 %v2604
        %3225 = vmatprep.subr.mxu0 %v2621
        %3226 = vmatpush1.msra.mxu0 %v2620
        %3227 = vmatprep.subr.mxu0 %v2637
        %3228 = vmatpush1.msra.mxu0 %v2636
        %3229 = vmatprep.subr.mxu0 %v2653
        %3230 = vmatpush1.msra.mxu0 %v2652
        %3231 = vmatprep.subr.mxu0 %v2669
        %3232 = vmatpush1.msra.mxu0 %v2668
        %3233 = vmatprep.subr.mxu0 %v2685
        %3234 = vmatpush1.msra.mxu0 %v2684
        %3235 = vmatprep.subr.mxu0 %v2701
        %3236 = vmatpush1.msra.mxu0 %v2700
        %3237 = vmatprep.subr.mxu0 %v2717
        %3238 = vmatpush1.msra.mxu0 %v2716
        %3239 = vmatprep.subr.mxu0 %v2733
        %3240 = vmatpush1.msra.mxu0 %v2732
        %3241 = vmatprep.subr.mxu0 %v2749
        %3242 = vmatpush1.msra.mxu0 %v2748
        %3243 = vmatprep.subr.mxu0 %v2765
        %3244 = vmatpush1.msra.mxu0 %v2764
        %3245 = vmatprep.subr.mxu0 %v2781
        %3246 = vmatpush1.msra.mxu0 %v2780
        %3247 = vmatprep.subr.mxu0 %v2797
        %3248 = vmatpush1.msra.mxu0 %v2796
        %3249 = vmatprep.subr.mxu0 %v2813
        %3250 = vmatpush1.msra.mxu0 %v2812
        %3251 = vmatprep.subr.mxu0 %v2829
        %3252 = vmatpush1.msra.mxu0 %v2828
        %3253 = vmatprep.subr.mxu0 %v2845
        %3254 = vmatpush1.msra.mxu0 %v2844
        %3255 = vmatprep.subr.mxu0 %v2861
        %3256 = vmatpush1.msra.mxu0 %v2860
        %3257 = vmatprep.subr.mxu0 %v2877
        %3258 = vmatpush1.msra.mxu0 %v2876
        %3259 = vmatprep.subr.mxu0 %v2893
        %3260 = vmatpush1.msra.mxu0 %v2892
        %3261 = vmatprep.mubr.f32.mxu0 %v2910
        %3262 = vmatmul.mubr.f32.gmra.mrb[0].mxu0 %v2907
        %v3263 = vpop.f32.mrb[0].mxu0
        %v3264 = vadd.f32 0.0, %v3263
        %v3265 = vpop.f32.mrb[0].mxu0
        %v3266 = vadd.f32 0.0, %v3265
        %3267 = vdwg.mxu0
        %3268 = vmatprep.subr.mxu0 %v2399
        %3269 = vmatpush1.msra.mxu0 %v2398
        %3270 = vmatprep.subr.mxu0 %v2415
        %3271 = vmatpush1.msra.mxu0 %v2414
        %3272 = vmatprep.subr.mxu0 %v2431
        %3273 = vmatpush1.msra.mxu0 %v2430
        %3274 = vmatprep.subr.mxu0 %v2447
        %3275 = vmatpush1.msra.mxu0 %v2446
        %3276 = vmatprep.subr.mxu0 %v2463
        %3277 = vmatpush1.msra.mxu0 %v2462
        %3278 = vmatprep.subr.mxu0 %v2479
        %3279 = vmatpush1.msra.mxu0 %v2478
        %3280 = vmatprep.subr.mxu0 %v2495
        %3281 = vmatpush1.msra.mxu0 %v2494
        %3282 = vmatprep.subr.mxu0 %v2511
        %3283 = vmatpush1.msra.mxu0 %v2510
        %3284 = vmatprep.subr.mxu0 %v2527
        %3285 = vmatpush1.msra.mxu0 %v2526
        %3286 = vmatprep.subr.mxu0 %v2543
        %3287 = vmatpush1.msra.mxu0 %v2542
        %3288 = vmatprep.subr.mxu0 %v2559
        %3289 = vmatpush1.msra.mxu0 %v2558
        %3290 = vmatprep.subr.mxu0 %v2575
        %3291 = vmatpush1.msra.mxu0 %v2574
        %3292 = vmatprep.subr.mxu0 %v2591
        %3293 = vmatpush1.msra.mxu0 %v2590
        %3294 = vmatprep.subr.mxu0 %v2607
        %3295 = vmatpush1.msra.mxu0 %v2606
        %3296 = vmatprep.subr.mxu0 %v2623
        %3297 = vmatpush1.msra.mxu0 %v2622
        %3298 = vmatprep.subr.mxu0 %v2639
        %3299 = vmatpush1.msra.mxu0 %v2638
        %3300 = vmatprep.subr.mxu0 %v2655
        %3301 = vmatpush1.msra.mxu0 %v2654
        %3302 = vmatprep.subr.mxu0 %v2671
        %3303 = vmatpush1.msra.mxu0 %v2670
        %3304 = vmatprep.subr.mxu0 %v2687
        %3305 = vmatpush1.msra.mxu0 %v2686
        %3306 = vmatprep.subr.mxu0 %v2703
        %3307 = vmatpush1.msra.mxu0 %v2702
        %3308 = vmatprep.subr.mxu0 %v2719
        %3309 = vmatpush1.msra.mxu0 %v2718
        %3310 = vmatprep.subr.mxu0 %v2735
        %3311 = vmatpush1.msra.mxu0 %v2734
        %3312 = vmatprep.subr.mxu0 %v2751
        %3313 = vmatpush1.msra.mxu0 %v2750
        %3314 = vmatprep.subr.mxu0 %v2767
        %3315 = vmatpush1.msra.mxu0 %v2766
        %3316 = vmatprep.subr.mxu0 %v2783
        %3317 = vmatpush1.msra.mxu0 %v2782
        %3318 = vmatprep.subr.mxu0 %v2799
        %3319 = vmatpush1.msra.mxu0 %v2798
        %3320 = vmatprep.subr.mxu0 %v2815
        %3321 = vmatpush1.msra.mxu0 %v2814
        %3322 = vmatprep.subr.mxu0 %v2831
        %3323 = vmatpush1.msra.mxu0 %v2830
        %3324 = vmatprep.subr.mxu0 %v2847
        %3325 = vmatpush1.msra.mxu0 %v2846
        %3326 = vmatprep.subr.mxu0 %v2863
        %3327 = vmatpush1.msra.mxu0 %v2862
        %3328 = vmatprep.subr.mxu0 %v2879
        %3329 = vmatpush1.msra.mxu0 %v2878
        %3330 = vmatprep.subr.mxu0 %v2895
        %3331 = vmatpush1.msra.mxu0 %v2894
        %3332 = vmatprep.mubr.f32.mxu0 %v2910
        %3333 = vmatmul.mubr.f32.gmra.mrb[0].mxu0 %v2907
        %v3334 = vpop.f32.mrb[0].mxu0
        %v3335 = vadd.f32 0.0, %v3334
        %v3336 = vpop.f32.mrb[0].mxu0
        %v3337 = vadd.f32 0.0, %v3336
        %3338 = vdwg.mxu0
        %3339 = vmatprep.subr.mxu0 %v2401
        %3340 = vmatpush1.msra.mxu0 %v2400
        %3341 = vmatprep.subr.mxu0 %v2417
        %3342 = vmatpush1.msra.mxu0 %v2416
        %3343 = vmatprep.subr.mxu0 %v2433
        %3344 = vmatpush1.msra.mxu0 %v2432
        %3345 = vmatprep.subr.mxu0 %v2449
        %3346 = vmatpush1.msra.mxu0 %v2448
        %3347 = vmatprep.subr.mxu0 %v2465
        %3348 = vmatpush1.msra.mxu0 %v2464
        %3349 = vmatprep.subr.mxu0 %v2481
        %3350 = vmatpush1.msra.mxu0 %v2480
        %3351 = vmatprep.subr.mxu0 %v2497
        %3352 = vmatpush1.msra.mxu0 %v2496
        %3353 = vmatprep.subr.mxu0 %v2513
        %3354 = vmatpush1.msra.mxu0 %v2512
        %3355 = vmatprep.subr.mxu0 %v2529
        %3356 = vmatpush1.msra.mxu0 %v2528
        %3357 = vmatprep.subr.mxu0 %v2545
        %3358 = vmatpush1.msra.mxu0 %v2544
        %3359 = vmatprep.subr.mxu0 %v2561
        %3360 = vmatpush1.msra.mxu0 %v2560
        %3361 = vmatprep.subr.mxu0 %v2577
        %3362 = vmatpush1.msra.mxu0 %v2576
        %3363 = vmatprep.subr.mxu0 %v2593
        %3364 = vmatpush1.msra.mxu0 %v2592
        %3365 = vmatprep.subr.mxu0 %v2609
        %3366 = vmatpush1.msra.mxu0 %v2608
        %3367 = vmatprep.subr.mxu0 %v2625
        %3368 = vmatpush1.msra.mxu0 %v2624
        %3369 = vmatprep.subr.mxu0 %v2641
        %3370 = vmatpush1.msra.mxu0 %v2640
        %3371 = vmatprep.subr.mxu0 %v2657
        %3372 = vmatpush1.msra.mxu0 %v2656
        %3373 = vmatprep.subr.mxu0 %v2673
        %3374 = vmatpush1.msra.mxu0 %v2672
        %3375 = vmatprep.subr.mxu0 %v2689
        %3376 = vmatpush1.msra.mxu0 %v2688
        %3377 = vmatprep.subr.mxu0 %v2705
        %3378 = vmatpush1.msra.mxu0 %v2704
        %3379 = vmatprep.subr.mxu0 %v2721
        %3380 = vmatpush1.msra.mxu0 %v2720
        %3381 = vmatprep.subr.mxu0 %v2737
        %3382 = vmatpush1.msra.mxu0 %v2736
        %3383 = vmatprep.subr.mxu0 %v2753
        %3384 = vmatpush1.msra.mxu0 %v2752
        %3385 = vmatprep.subr.mxu0 %v2769
        %3386 = vmatpush1.msra.mxu0 %v2768
        %3387 = vmatprep.subr.mxu0 %v2785
        %3388 = vmatpush1.msra.mxu0 %v2784
        %3389 = vmatprep.subr.mxu0 %v2801
        %3390 = vmatpush1.msra.mxu0 %v2800
        %3391 = vmatprep.subr.mxu0 %v2817
        %3392 = vmatpush1.msra.mxu0 %v2816
        %3393 = vmatprep.subr.mxu0 %v2833
        %3394 = vmatpush1.msra.mxu0 %v2832
        %3395 = vmatprep.subr.mxu0 %v2849
        %3396 = vmatpush1.msra.mxu0 %v2848
        %3397 = vmatprep.subr.mxu0 %v2865
        %3398 = vmatpush1.msra.mxu0 %v2864
        %3399 = vmatprep.subr.mxu0 %v2881
        %3400 = vmatpush1.msra.mxu0 %v2880
        %3401 = vmatprep.subr.mxu0 %v2897
        %3402 = vmatpush1.msra.mxu0 %v2896
        %3403 = vmatprep.mubr.f32.mxu0 %v2910
        %3404 = vmatmul.mubr.f32.gmra.mrb[0].mxu0 %v2907
        %v3405 = vpop.f32.mrb[0].mxu0
        %v3406 = vadd.f32 0.0, %v3405
        %v3407 = vpop.f32.mrb[0].mxu0
        %v3408 = vadd.f32 0.0, %v3407
        %3409 = vdwg.mxu0
        %3410 = vmatprep.subr.mxu0 %v2403
        %3411 = vmatpush1.msra.mxu0 %v2402
        %3412 = vmatprep.subr.mxu0 %v2419
        %3413 = vmatpush1.msra.mxu0 %v2418
        %3414 = vmatprep.subr.mxu0 %v2435
        %3415 = vmatpush1.msra.mxu0 %v2434
        %3416 = vmatprep.subr.mxu0 %v2451
        %3417 = vmatpush1.msra.mxu0 %v2450
        %3418 = vmatprep.subr.mxu0 %v2467
        %3419 = vmatpush1.msra.mxu0 %v2466
        %3420 = vmatprep.subr.mxu0 %v2483
        %3421 = vmatpush1.msra.mxu0 %v2482
        %3422 = vmatprep.subr.mxu0 %v2499
        %3423 = vmatpush1.msra.mxu0 %v2498
        %3424 = vmatprep.subr.mxu0 %v2515
        %3425 = vmatpush1.msra.mxu0 %v2514
        %3426 = vmatprep.subr.mxu0 %v2531
        %3427 = vmatpush1.msra.mxu0 %v2530
        %3428 = vmatprep.subr.mxu0 %v2547
        %3429 = vmatpush1.msra.mxu0 %v2546
        %3430 = vmatprep.subr.mxu0 %v2563
        %3431 = vmatpush1.msra.mxu0 %v2562
        %3432 = vmatprep.subr.mxu0 %v2579
        %3433 = vmatpush1.msra.mxu0 %v2578
        %3434 = vmatprep.subr.mxu0 %v2595
        %3435 = vmatpush1.msra.mxu0 %v2594
        %3436 = vmatprep.subr.mxu0 %v2611
        %3437 = vmatpush1.msra.mxu0 %v2610
        %3438 = vmatprep.subr.mxu0 %v2627
        %3439 = vmatpush1.msra.mxu0 %v2626
        %3440 = vmatprep.subr.mxu0 %v2643
        %3441 = vmatpush1.msra.mxu0 %v2642
        %3442 = vmatprep.subr.mxu0 %v2659
        %3443 = vmatpush1.msra.mxu0 %v2658
        %3444 = vmatprep.subr.mxu0 %v2675
        %3445 = vmatpush1.msra.mxu0 %v2674
        %3446 = vmatprep.subr.mxu0 %v2691
        %3447 = vmatpush1.msra.mxu0 %v2690
        %3448 = vmatprep.subr.mxu0 %v2707
        %3449 = vmatpush1.msra.mxu0 %v2706
        %3450 = vmatprep.subr.mxu0 %v2723
        %3451 = vmatpush1.msra.mxu0 %v2722
        %3452 = vmatprep.subr.mxu0 %v2739
        %3453 = vmatpush1.msra.mxu0 %v2738
        %3454 = vmatprep.subr.mxu0 %v2755
        %3455 = vmatpush1.msra.mxu0 %v2754
        %3456 = vmatprep.subr.mxu0 %v2771
        %3457 = vmatpush1.msra.mxu0 %v2770
        %3458 = vmatprep.subr.mxu0 %v2787
        %3459 = vmatpush1.msra.mxu0 %v2786
        %3460 = vmatprep.subr.mxu0 %v2803
        %3461 = vmatpush1.msra.mxu0 %v2802
        %3462 = vmatprep.subr.mxu0 %v2819
        %3463 = vmatpush1.msra.mxu0 %v2818
        %3464 = vmatprep.subr.mxu0 %v2835
        %3465 = vmatpush1.msra.mxu0 %v2834
        %3466 = vmatprep.subr.mxu0 %v2851
        %3467 = vmatpush1.msra.mxu0 %v2850
        %3468 = vmatprep.subr.mxu0 %v2867
        %3469 = vmatpush1.msra.mxu0 %v2866
        %3470 = vmatprep.subr.mxu0 %v2883
        %3471 = vmatpush1.msra.mxu0 %v2882
        %3472 = vmatprep.subr.mxu0 %v2899
        %3473 = vmatpush1.msra.mxu0 %v2898
        %3474 = vmatprep.mubr.f32.mxu0 %v2910
        %3475 = vmatmul.mubr.f32.gmra.mrb[0].mxu0 %v2907
        %v3476 = vpop.f32.mrb[0].mxu0
        %v3477 = vadd.f32 0.0, %v3476
        %v3478 = vpop.f32.mrb[0].mxu0
        %v3479 = vadd.f32 0.0, %v3478
        %3480 = vdwg.mxu0
        %v3481 = vadd.f32 %v1882, %v2980
        %v3482 = vadd.f32 %v1884, %v2982
        %v3483 = vadd.f32 %v1953, %v3051
        %v3484 = vadd.f32 %v1955, %v3053
        %v3485 = vadd.f32 %v2024, %v3122
        %v3486 = vadd.f32 %v2026, %v3124
        %v3487 = vadd.f32 %v2095, %v3193
        %v3488 = vadd.f32 %v2097, %v3195
        %v3489 = vadd.f32 %v2166, %v3264
        %v3490 = vadd.f32 %v2168, %v3266
        %v3491 = vadd.f32 %v2237, %v3335
        %v3492 = vadd.f32 %v2239, %v3337
        %v3493 = vadd.f32 %v2308, %v3406
        %v3494 = vadd.f32 %v2310, %v3408
        %v3495 = vadd.f32 %v2379, %v3477
        %v3496 = vadd.f32 %v2381, %v3479
        %vm3497 = vcmask 64512
        %v3499 = vsel %vm3497, 1.0, 0
        %3501 = vmatprep.subr.mxu0 %v3482
        %3502 = vmatpush1.msra.mxu0 %v3481
        %3503 = vmatprep.subr.mxu0 0.0
        %3504 = vmatpush1.msra.mxu0 0.0
        %3505 = vmatprep.subr.mxu0 0.0
        %3506 = vmatpush1.msra.mxu0 0.0
        %3507 = vmatprep.subr.mxu0 0.0
        %3508 = vmatpush1.msra.mxu0 0.0
        %3509 = vmatprep.subr.mxu0 0.0
        %3510 = vmatpush1.msra.mxu0 0.0
        %3511 = vmatprep.subr.mxu0 0.0
        %3512 = vmatpush1.msra.mxu0 0.0
        %3513 = vmatprep.subr.mxu0 0.0
        %3514 = vmatpush1.msra.mxu0 0.0
        %3515 = vmatprep.subr.mxu0 0.0
        %3516 = vmatpush1.msra.mxu0 0.0
        %3517 = vmatprep.subr.mxu0 0.0
        %3518 = vmatpush1.msra.mxu0 0.0
        %3519 = vmatprep.subr.mxu0 0.0
        %3520 = vmatpush1.msra.mxu0 0.0
        %3521 = vmatprep.subr.mxu0 0.0
        %3522 = vmatpush1.msra.mxu0 0.0
        %3523 = vmatprep.subr.mxu0 0.0
        %3524 = vmatpush1.msra.mxu0 0.0
        %3525 = vmatprep.subr.mxu0 0.0
        %3526 = vmatpush1.msra.mxu0 0.0
        %3527 = vmatprep.subr.mxu0 0.0
        %3528 = vmatpush1.msra.mxu0 0.0
        %3529 = vmatprep.subr.mxu0 0.0
        %3530 = vmatpush1.msra.mxu0 0.0
        %3531 = vmatprep.subr.mxu0 0.0
        %3532 = vmatpush1.msra.mxu0 0.0
        %3533 = vmatprep.subr.mxu0 0.0
        %3534 = vmatpush1.msra.mxu0 0.0
        %3535 = vmatprep.subr.mxu0 0.0
        %3536 = vmatpush1.msra.mxu0 0.0
        %3537 = vmatprep.subr.mxu0 0.0
        %3538 = vmatpush1.msra.mxu0 0.0
        %3539 = vmatprep.subr.mxu0 0.0
        %3540 = vmatpush1.msra.mxu0 0.0
        %3541 = vmatprep.subr.mxu0 0.0
        %3542 = vmatpush1.msra.mxu0 0.0
        %3543 = vmatprep.subr.mxu0 0.0
        %3544 = vmatpush1.msra.mxu0 0.0
        %3545 = vmatprep.subr.mxu0 0.0
        %3546 = vmatpush1.msra.mxu0 0.0
        %3547 = vmatprep.subr.mxu0 0.0
        %3548 = vmatpush1.msra.mxu0 0.0
        %3549 = vmatprep.subr.mxu0 0.0
        %3550 = vmatpush1.msra.mxu0 0.0
        %3551 = vmatprep.subr.mxu0 0.0
        %3552 = vmatpush1.msra.mxu0 0.0
        %3553 = vmatprep.subr.mxu0 0.0
        %3554 = vmatpush1.msra.mxu0 0.0
        %3555 = vmatprep.subr.mxu0 0.0
        %3556 = vmatpush1.msra.mxu0 0.0
        %3557 = vmatprep.subr.mxu0 0.0
        %3558 = vmatpush1.msra.mxu0 0.0
        %3559 = vmatprep.subr.mxu0 0.0
        %3560 = vmatpush1.msra.mxu0 0.0
        %3561 = vmatprep.subr.mxu0 0.0
        %3562 = vmatpush1.msra.mxu0 0.0
        %3563 = vmatprep.subr.mxu0 0.0
        %3564 = vmatpush1.msra.mxu0 0.0
        %3565 = vmatprep.mubr.f32.mxu0 0.0
        %3566 = vmatmul.mubr.f32.gmra.mrb[0].mxu0 %v3499
        %v3567 = vpop.f32.mrb[0].mxu0
        %v3568 = vadd.f32 0.0, %v3567
        %v3569 = vpop.f32.mrb[0].mxu0
        %v3570 = vadd.f32 0.0, %v3569
        %3571 = vdwg.mxu0
        %3572 = vmatprep.subr.mxu0 %v3484
        %3573 = vmatpush1.msra.mxu0 %v3483
        %3574 = vmatprep.subr.mxu0 0.0
        %3575 = vmatpush1.msra.mxu0 0.0
        %3576 = vmatprep.subr.mxu0 0.0
        %3577 = vmatpush1.msra.mxu0 0.0
        %3578 = vmatprep.subr.mxu0 0.0
        %3579 = vmatpush1.msra.mxu0 0.0
        %3580 = vmatprep.subr.mxu0 0.0
        %3581 = vmatpush1.msra.mxu0 0.0
        %3582 = vmatprep.subr.mxu0 0.0
        %3583 = vmatpush1.msra.mxu0 0.0
        %3584 = vmatprep.subr.mxu0 0.0
        %3585 = vmatpush1.msra.mxu0 0.0
        %3586 = vmatprep.subr.mxu0 0.0
        %3587 = vmatpush1.msra.mxu0 0.0
        %3588 = vmatprep.subr.mxu0 0.0
        %3589 = vmatpush1.msra.mxu0 0.0
        %3590 = vmatprep.subr.mxu0 0.0
        %3591 = vmatpush1.msra.mxu0 0.0
        %3592 = vmatprep.subr.mxu0 0.0
        %3593 = vmatpush1.msra.mxu0 0.0
        %3594 = vmatprep.subr.mxu0 0.0
        %3595 = vmatpush1.msra.mxu0 0.0
        %3596 = vmatprep.subr.mxu0 0.0
        %3597 = vmatpush1.msra.mxu0 0.0
        %3598 = vmatprep.subr.mxu0 0.0
        %3599 = vmatpush1.msra.mxu0 0.0
        %3600 = vmatprep.subr.mxu0 0.0
        %3601 = vmatpush1.msra.mxu0 0.0
        %3602 = vmatprep.subr.mxu0 0.0
        %3603 = vmatpush1.msra.mxu0 0.0
        %3604 = vmatprep.subr.mxu0 0.0
        %3605 = vmatpush1.msra.mxu0 0.0
        %3606 = vmatprep.subr.mxu0 0.0
        %3607 = vmatpush1.msra.mxu0 0.0
        %3608 = vmatprep.subr.mxu0 0.0
        %3609 = vmatpush1.msra.mxu0 0.0
        %3610 = vmatprep.subr.mxu0 0.0
        %3611 = vmatpush1.msra.mxu0 0.0
        %3612 = vmatprep.subr.mxu0 0.0
        %3613 = vmatpush1.msra.mxu0 0.0
        %3614 = vmatprep.subr.mxu0 0.0
        %3615 = vmatpush1.msra.mxu0 0.0
        %3616 = vmatprep.subr.mxu0 0.0
        %3617 = vmatpush1.msra.mxu0 0.0
        %3618 = vmatprep.subr.mxu0 0.0
        %3619 = vmatpush1.msra.mxu0 0.0
        %3620 = vmatprep.subr.mxu0 0.0
        %3621 = vmatpush1.msra.mxu0 0.0
        %3622 = vmatprep.subr.mxu0 0.0
        %3623 = vmatpush1.msra.mxu0 0.0
        %3624 = vmatprep.subr.mxu0 0.0
        %3625 = vmatpush1.msra.mxu0 0.0
        %3626 = vmatprep.subr.mxu0 0.0
        %3627 = vmatpush1.msra.mxu0 0.0
        %3628 = vmatprep.subr.mxu0 0.0
        %3629 = vmatpush1.msra.mxu0 0.0
        %3630 = vmatprep.subr.mxu0 0.0
        %3631 = vmatpush1.msra.mxu0 0.0
        %3632 = vmatprep.subr.mxu0 0.0
        %3633 = vmatpush1.msra.mxu0 0.0
        %3634 = vmatprep.subr.mxu0 0.0
        %3635 = vmatpush1.msra.mxu0 0.0
        %3636 = vmatprep.mubr.f32.mxu0 0.0
        %3637 = vmatmul.mubr.f32.gmra.mrb[0].mxu0 %v3499
        %v3638 = vpop.f32.mrb[0].mxu0
        %v3639 = vadd.f32 0.0, %v3638
        %v3640 = vpop.f32.mrb[0].mxu0
        %v3641 = vadd.f32 0.0, %v3640
        %3642 = vdwg.mxu0
        %3643 = vmatprep.subr.mxu0 %v3486
        %3644 = vmatpush1.msra.mxu0 %v3485
        %3645 = vmatprep.subr.mxu0 0.0
        %3646 = vmatpush1.msra.mxu0 0.0
        %3647 = vmatprep.subr.mxu0 0.0
        %3648 = vmatpush1.msra.mxu0 0.0
        %3649 = vmatprep.subr.mxu0 0.0
        %3650 = vmatpush1.msra.mxu0 0.0
        %3651 = vmatprep.subr.mxu0 0.0
        %3652 = vmatpush1.msra.mxu0 0.0
        %3653 = vmatprep.subr.mxu0 0.0
        %3654 = vmatpush1.msra.mxu0 0.0
        %3655 = vmatprep.subr.mxu0 0.0
        %3656 = vmatpush1.msra.mxu0 0.0
        %3657 = vmatprep.subr.mxu0 0.0
        %3658 = vmatpush1.msra.mxu0 0.0
        %3659 = vmatprep.subr.mxu0 0.0
        %3660 = vmatpush1.msra.mxu0 0.0
        %3661 = vmatprep.subr.mxu0 0.0
        %3662 = vmatpush1.msra.mxu0 0.0
        %3663 = vmatprep.subr.mxu0 0.0
        %3664 = vmatpush1.msra.mxu0 0.0
        %3665 = vmatprep.subr.mxu0 0.0
        %3666 = vmatpush1.msra.mxu0 0.0
        %3667 = vmatprep.subr.mxu0 0.0
        %3668 = vmatpush1.msra.mxu0 0.0
        %3669 = vmatprep.subr.mxu0 0.0
        %3670 = vmatpush1.msra.mxu0 0.0
        %3671 = vmatprep.subr.mxu0 0.0
        %3672 = vmatpush1.msra.mxu0 0.0
        %3673 = vmatprep.subr.mxu0 0.0
        %3674 = vmatpush1.msra.mxu0 0.0
        %3675 = vmatprep.subr.mxu0 0.0
        %3676 = vmatpush1.msra.mxu0 0.0
        %3677 = vmatprep.subr.mxu0 0.0
        %3678 = vmatpush1.msra.mxu0 0.0
        %3679 = vmatprep.subr.mxu0 0.0
        %3680 = vmatpush1.msra.mxu0 0.0
        %3681 = vmatprep.subr.mxu0 0.0
        %3682 = vmatpush1.msra.mxu0 0.0
        %3683 = vmatprep.subr.mxu0 0.0
        %3684 = vmatpush1.msra.mxu0 0.0
        %3685 = vmatprep.subr.mxu0 0.0
        %3686 = vmatpush1.msra.mxu0 0.0
        %3687 = vmatprep.subr.mxu0 0.0
        %3688 = vmatpush1.msra.mxu0 0.0
        %3689 = vmatprep.subr.mxu0 0.0
        %3690 = vmatpush1.msra.mxu0 0.0
        %3691 = vmatprep.subr.mxu0 0.0
        %3692 = vmatpush1.msra.mxu0 0.0
        %3693 = vmatprep.subr.mxu0 0.0
        %3694 = vmatpush1.msra.mxu0 0.0
        %3695 = vmatprep.subr.mxu0 0.0
        %3696 = vmatpush1.msra.mxu0 0.0
        %3697 = vmatprep.subr.mxu0 0.0
        %3698 = vmatpush1.msra.mxu0 0.0
        %3699 = vmatprep.subr.mxu0 0.0
        %3700 = vmatpush1.msra.mxu0 0.0
        %3701 = vmatprep.subr.mxu0 0.0
        %3702 = vmatpush1.msra.mxu0 0.0
        %3703 = vmatprep.subr.mxu0 0.0
        %3704 = vmatpush1.msra.mxu0 0.0
        %3705 = vmatprep.subr.mxu0 0.0
        %3706 = vmatpush1.msra.mxu0 0.0
        %3707 = vmatprep.mubr.f32.mxu0 0.0
        %3708 = vmatmul.mubr.f32.gmra.mrb[0].mxu0 %v3499
        %v3709 = vpop.f32.mrb[0].mxu0
        %v3710 = vadd.f32 0.0, %v3709
        %v3711 = vpop.f32.mrb[0].mxu0
        %v3712 = vadd.f32 0.0, %v3711
        %3713 = vdwg.mxu0
        %3714 = vmatprep.subr.mxu0 %v3488
        %3715 = vmatpush1.msra.mxu0 %v3487
        %3716 = vmatprep.subr.mxu0 0.0
        %3717 = vmatpush1.msra.mxu0 0.0
        %3718 = vmatprep.subr.mxu0 0.0
        %3719 = vmatpush1.msra.mxu0 0.0
        %3720 = vmatprep.subr.mxu0 0.0
        %3721 = vmatpush1.msra.mxu0 0.0
        %3722 = vmatprep.subr.mxu0 0.0
        %3723 = vmatpush1.msra.mxu0 0.0
        %3724 = vmatprep.subr.mxu0 0.0
        %3725 = vmatpush1.msra.mxu0 0.0
        %3726 = vmatprep.subr.mxu0 0.0
        %3727 = vmatpush1.msra.mxu0 0.0
        %3728 = vmatprep.subr.mxu0 0.0
        %3729 = vmatpush1.msra.mxu0 0.0
        %3730 = vmatprep.subr.mxu0 0.0
        %3731 = vmatpush1.msra.mxu0 0.0
        %3732 = vmatprep.subr.mxu0 0.0
        %3733 = vmatpush1.msra.mxu0 0.0
        %3734 = vmatprep.subr.mxu0 0.0
        %3735 = vmatpush1.msra.mxu0 0.0
        %3736 = vmatprep.subr.mxu0 0.0
        %3737 = vmatpush1.msra.mxu0 0.0
        %3738 = vmatprep.subr.mxu0 0.0
        %3739 = vmatpush1.msra.mxu0 0.0
        %3740 = vmatprep.subr.mxu0 0.0
        %3741 = vmatpush1.msra.mxu0 0.0
        %3742 = vmatprep.subr.mxu0 0.0
        %3743 = vmatpush1.msra.mxu0 0.0
        %3744 = vmatprep.subr.mxu0 0.0
        %3745 = vmatpush1.msra.mxu0 0.0
        %3746 = vmatprep.subr.mxu0 0.0
        %3747 = vmatpush1.msra.mxu0 0.0
        %3748 = vmatprep.subr.mxu0 0.0
        %3749 = vmatpush1.msra.mxu0 0.0
        %3750 = vmatprep.subr.mxu0 0.0
        %3751 = vmatpush1.msra.mxu0 0.0
        %3752 = vmatprep.subr.mxu0 0.0
        %3753 = vmatpush1.msra.mxu0 0.0
        %3754 = vmatprep.subr.mxu0 0.0
        %3755 = vmatpush1.msra.mxu0 0.0
        %3756 = vmatprep.subr.mxu0 0.0
        %3757 = vmatpush1.msra.mxu0 0.0
        %3758 = vmatprep.subr.mxu0 0.0
        %3759 = vmatpush1.msra.mxu0 0.0
        %3760 = vmatprep.subr.mxu0 0.0
        %3761 = vmatpush1.msra.mxu0 0.0
        %3762 = vmatprep.subr.mxu0 0.0
        %3763 = vmatpush1.msra.mxu0 0.0
        %3764 = vmatprep.subr.mxu0 0.0
        %3765 = vmatpush1.msra.mxu0 0.0
        %3766 = vmatprep.subr.mxu0 0.0
        %3767 = vmatpush1.msra.mxu0 0.0
        %3768 = vmatprep.subr.mxu0 0.0
        %3769 = vmatpush1.msra.mxu0 0.0
        %3770 = vmatprep.subr.mxu0 0.0
        %3771 = vmatpush1.msra.mxu0 0.0
        %3772 = vmatprep.subr.mxu0 0.0
        %3773 = vmatpush1.msra.mxu0 0.0
        %3774 = vmatprep.subr.mxu0 0.0
        %3775 = vmatpush1.msra.mxu0 0.0
        %3776 = vmatprep.subr.mxu0 0.0
        %3777 = vmatpush1.msra.mxu0 0.0
        %3778 = vmatprep.mubr.f32.mxu0 0.0
        %3779 = vmatmul.mubr.f32.gmra.mrb[0].mxu0 %v3499
        %v3780 = vpop.f32.mrb[0].mxu0
        %v3781 = vadd.f32 0.0, %v3780
        %v3782 = vpop.f32.mrb[0].mxu0
        %v3783 = vadd.f32 0.0, %v3782
        %3784 = vdwg.mxu0
        %3785 = vmatprep.subr.mxu0 %v3490
        %3786 = vmatpush1.msra.mxu0 %v3489
        %3787 = vmatprep.subr.mxu0 0.0
        %3788 = vmatpush1.msra.mxu0 0.0
        %3789 = vmatprep.subr.mxu0 0.0
        %3790 = vmatpush1.msra.mxu0 0.0
        %3791 = vmatprep.subr.mxu0 0.0
        %3792 = vmatpush1.msra.mxu0 0.0
        %3793 = vmatprep.subr.mxu0 0.0
        %3794 = vmatpush1.msra.mxu0 0.0
        %3795 = vmatprep.subr.mxu0 0.0
        %3796 = vmatpush1.msra.mxu0 0.0
        %3797 = vmatprep.subr.mxu0 0.0
        %3798 = vmatpush1.msra.mxu0 0.0
        %3799 = vmatprep.subr.mxu0 0.0
        %3800 = vmatpush1.msra.mxu0 0.0
        %3801 = vmatprep.subr.mxu0 0.0
        %3802 = vmatpush1.msra.mxu0 0.0
        %3803 = vmatprep.subr.mxu0 0.0
        %3804 = vmatpush1.msra.mxu0 0.0
        %3805 = vmatprep.subr.mxu0 0.0
        %3806 = vmatpush1.msra.mxu0 0.0
        %3807 = vmatprep.subr.mxu0 0.0
        %3808 = vmatpush1.msra.mxu0 0.0
        %3809 = vmatprep.subr.mxu0 0.0
        %3810 = vmatpush1.msra.mxu0 0.0
        %3811 = vmatprep.subr.mxu0 0.0
        %3812 = vmatpush1.msra.mxu0 0.0
        %3813 = vmatprep.subr.mxu0 0.0
        %3814 = vmatpush1.msra.mxu0 0.0
        %3815 = vmatprep.subr.mxu0 0.0
        %3816 = vmatpush1.msra.mxu0 0.0
        %3817 = vmatprep.subr.mxu0 0.0
        %3818 = vmatpush1.msra.mxu0 0.0
        %3819 = vmatprep.subr.mxu0 0.0
        %3820 = vmatpush1.msra.mxu0 0.0
        %3821 = vmatprep.subr.mxu0 0.0
        %3822 = vmatpush1.msra.mxu0 0.0
        %3823 = vmatprep.subr.mxu0 0.0
        %3824 = vmatpush1.msra.mxu0 0.0
        %3825 = vmatprep.subr.mxu0 0.0
        %3826 = vmatpush1.msra.mxu0 0.0
        %3827 = vmatprep.subr.mxu0 0.0
        %3828 = vmatpush1.msra.mxu0 0.0
        %3829 = vmatprep.subr.mxu0 0.0
        %3830 = vmatpush1.msra.mxu0 0.0
        %3831 = vmatprep.subr.mxu0 0.0
        %3832 = vmatpush1.msra.mxu0 0.0
        %3833 = vmatprep.subr.mxu0 0.0
        %3834 = vmatpush1.msra.mxu0 0.0
        %3835 = vmatprep.subr.mxu0 0.0
        %3836 = vmatpush1.msra.mxu0 0.0
        %3837 = vmatprep.subr.mxu0 0.0
        %3838 = vmatpush1.msra.mxu0 0.0
        %3839 = vmatprep.subr.mxu0 0.0
        %3840 = vmatpush1.msra.mxu0 0.0
        %3841 = vmatprep.subr.mxu0 0.0
        %3842 = vmatpush1.msra.mxu0 0.0
        %3843 = vmatprep.subr.mxu0 0.0
        %3844 = vmatpush1.msra.mxu0 0.0
        %3845 = vmatprep.subr.mxu0 0.0
        %3846 = vmatpush1.msra.mxu0 0.0
        %3847 = vmatprep.subr.mxu0 0.0
        %3848 = vmatpush1.msra.mxu0 0.0
        %3849 = vmatprep.mubr.f32.mxu0 0.0
        %3850 = vmatmul.mubr.f32.gmra.mrb[0].mxu0 %v3499
        %v3851 = vpop.f32.mrb[0].mxu0
        %v3852 = vadd.f32 0.0, %v3851
        %v3853 = vpop.f32.mrb[0].mxu0
        %v3854 = vadd.f32 0.0, %v3853
        %3855 = vdwg.mxu0
        %3856 = vmatprep.subr.mxu0 %v3492
        %3857 = vmatpush1.msra.mxu0 %v3491
        %3858 = vmatprep.subr.mxu0 0.0
        %3859 = vmatpush1.msra.mxu0 0.0
        %3860 = vmatprep.subr.mxu0 0.0
        %3861 = vmatpush1.msra.mxu0 0.0
        %3862 = vmatprep.subr.mxu0 0.0
        %3863 = vmatpush1.msra.mxu0 0.0
        %3864 = vmatprep.subr.mxu0 0.0
        %3865 = vmatpush1.msra.mxu0 0.0
        %3866 = vmatprep.subr.mxu0 0.0
        %3867 = vmatpush1.msra.mxu0 0.0
        %3868 = vmatprep.subr.mxu0 0.0
        %3869 = vmatpush1.msra.mxu0 0.0
        %3870 = vmatprep.subr.mxu0 0.0
        %3871 = vmatpush1.msra.mxu0 0.0
        %3872 = vmatprep.subr.mxu0 0.0
        %3873 = vmatpush1.msra.mxu0 0.0
        %3874 = vmatprep.subr.mxu0 0.0
        %3875 = vmatpush1.msra.mxu0 0.0
        %3876 = vmatprep.subr.mxu0 0.0
        %3877 = vmatpush1.msra.mxu0 0.0
        %3878 = vmatprep.subr.mxu0 0.0
        %3879 = vmatpush1.msra.mxu0 0.0
        %3880 = vmatprep.subr.mxu0 0.0
        %3881 = vmatpush1.msra.mxu0 0.0
        %3882 = vmatprep.subr.mxu0 0.0
        %3883 = vmatpush1.msra.mxu0 0.0
        %3884 = vmatprep.subr.mxu0 0.0
        %3885 = vmatpush1.msra.mxu0 0.0
        %3886 = vmatprep.subr.mxu0 0.0
        %3887 = vmatpush1.msra.mxu0 0.0
        %3888 = vmatprep.subr.mxu0 0.0
        %3889 = vmatpush1.msra.mxu0 0.0
        %3890 = vmatprep.subr.mxu0 0.0
        %3891 = vmatpush1.msra.mxu0 0.0
        %3892 = vmatprep.subr.mxu0 0.0
        %3893 = vmatpush1.msra.mxu0 0.0
        %3894 = vmatprep.subr.mxu0 0.0
        %3895 = vmatpush1.msra.mxu0 0.0
        %3896 = vmatprep.subr.mxu0 0.0
        %3897 = vmatpush1.msra.mxu0 0.0
        %3898 = vmatprep.subr.mxu0 0.0
        %3899 = vmatpush1.msra.mxu0 0.0
        %3900 = vmatprep.subr.mxu0 0.0
        %3901 = vmatpush1.msra.mxu0 0.0
        %3902 = vmatprep.subr.mxu0 0.0
        %3903 = vmatpush1.msra.mxu0 0.0
        %3904 = vmatprep.subr.mxu0 0.0
        %3905 = vmatpush1.msra.mxu0 0.0
        %3906 = vmatprep.subr.mxu0 0.0
        %3907 = vmatpush1.msra.mxu0 0.0
        %3908 = vmatprep.subr.mxu0 0.0
        %3909 = vmatpush1.msra.mxu0 0.0
        %3910 = vmatprep.subr.mxu0 0.0
        %3911 = vmatpush1.msra.mxu0 0.0
        %3912 = vmatprep.subr.mxu0 0.0
        %3913 = vmatpush1.msra.mxu0 0.0
        %3914 = vmatprep.subr.mxu0 0.0
        %3915 = vmatpush1.msra.mxu0 0.0
        %3916 = vmatprep.subr.mxu0 0.0
        %3917 = vmatpush1.msra.mxu0 0.0
        %3918 = vmatprep.subr.mxu0 0.0
        %3919 = vmatpush1.msra.mxu0 0.0
        %3920 = vmatprep.mubr.f32.mxu0 0.0
        %3921 = vmatmul.mubr.f32.gmra.mrb[0].mxu0 %v3499
        %v3922 = vpop.f32.mrb[0].mxu0
        %v3923 = vadd.f32 0.0, %v3922
        %v3924 = vpop.f32.mrb[0].mxu0
        %v3925 = vadd.f32 0.0, %v3924
        %3926 = vdwg.mxu0
        %3927 = vmatprep.subr.mxu0 %v3494
        %3928 = vmatpush1.msra.mxu0 %v3493
        %3929 = vmatprep.subr.mxu0 0.0
        %3930 = vmatpush1.msra.mxu0 0.0
        %3931 = vmatprep.subr.mxu0 0.0
        %3932 = vmatpush1.msra.mxu0 0.0
        %3933 = vmatprep.subr.mxu0 0.0
        %3934 = vmatpush1.msra.mxu0 0.0
        %3935 = vmatprep.subr.mxu0 0.0
        %3936 = vmatpush1.msra.mxu0 0.0
        %3937 = vmatprep.subr.mxu0 0.0
        %3938 = vmatpush1.msra.mxu0 0.0
        %3939 = vmatprep.subr.mxu0 0.0
        %3940 = vmatpush1.msra.mxu0 0.0
        %3941 = vmatprep.subr.mxu0 0.0
        %3942 = vmatpush1.msra.mxu0 0.0
        %3943 = vmatprep.subr.mxu0 0.0
        %3944 = vmatpush1.msra.mxu0 0.0
        %3945 = vmatprep.subr.mxu0 0.0
        %3946 = vmatpush1.msra.mxu0 0.0
        %3947 = vmatprep.subr.mxu0 0.0
        %3948 = vmatpush1.msra.mxu0 0.0
        %3949 = vmatprep.subr.mxu0 0.0
        %3950 = vmatpush1.msra.mxu0 0.0
        %3951 = vmatprep.subr.mxu0 0.0
        %3952 = vmatpush1.msra.mxu0 0.0
        %3953 = vmatprep.subr.mxu0 0.0
        %3954 = vmatpush1.msra.mxu0 0.0
        %3955 = vmatprep.subr.mxu0 0.0
        %3956 = vmatpush1.msra.mxu0 0.0
        %3957 = vmatprep.subr.mxu0 0.0
        %3958 = vmatpush1.msra.mxu0 0.0
        %3959 = vmatprep.subr.mxu0 0.0
        %3960 = vmatpush1.msra.mxu0 0.0
        %3961 = vmatprep.subr.mxu0 0.0
        %3962 = vmatpush1.msra.mxu0 0.0
        %3963 = vmatprep.subr.mxu0 0.0
        %3964 = vmatpush1.msra.mxu0 0.0
        %3965 = vmatprep.subr.mxu0 0.0
        %3966 = vmatpush1.msra.mxu0 0.0
        %3967 = vmatprep.subr.mxu0 0.0
        %3968 = vmatpush1.msra.mxu0 0.0
        %3969 = vmatprep.subr.mxu0 0.0
        %3970 = vmatpush1.msra.mxu0 0.0
        %3971 = vmatprep.subr.mxu0 0.0
        %3972 = vmatpush1.msra.mxu0 0.0
        %3973 = vmatprep.subr.mxu0 0.0
        %3974 = vmatpush1.msra.mxu0 0.0
        %3975 = vmatprep.subr.mxu0 0.0
        %3976 = vmatpush1.msra.mxu0 0.0
        %3977 = vmatprep.subr.mxu0 0.0
        %3978 = vmatpush1.msra.mxu0 0.0
        %3979 = vmatprep.subr.mxu0 0.0
        %3980 = vmatpush1.msra.mxu0 0.0
        %3981 = vmatprep.subr.mxu0 0.0
        %3982 = vmatpush1.msra.mxu0 0.0
        %3983 = vmatprep.subr.mxu0 0.0
        %3984 = vmatpush1.msra.mxu0 0.0
        %3985 = vmatprep.subr.mxu0 0.0
        %3986 = vmatpush1.msra.mxu0 0.0
        %3987 = vmatprep.subr.mxu0 0.0
        %3988 = vmatpush1.msra.mxu0 0.0
        %3989 = vmatprep.subr.mxu0 0.0
        %3990 = vmatpush1.msra.mxu0 0.0
        %3991 = vmatprep.mubr.f32.mxu0 0.0
        %3992 = vmatmul.mubr.f32.gmra.mrb[0].mxu0 %v3499
        %v3993 = vpop.f32.mrb[0].mxu0
        %v3994 = vadd.f32 0.0, %v3993
        %v3995 = vpop.f32.mrb[0].mxu0
        %v3996 = vadd.f32 0.0, %v3995
        %3997 = vdwg.mxu0
        %3998 = vmatprep.subr.mxu0 %v3496
        %3999 = vmatpush1.msra.mxu0 %v3495
        %4000 = vmatprep.subr.mxu0 0.0
        %4001 = vmatpush1.msra.mxu0 0.0
        %4002 = vmatprep.subr.mxu0 0.0
        %4003 = vmatpush1.msra.mxu0 0.0
        %4004 = vmatprep.subr.mxu0 0.0
        %4005 = vmatpush1.msra.mxu0 0.0
        %4006 = vmatprep.subr.mxu0 0.0
        %4007 = vmatpush1.msra.mxu0 0.0
        %4008 = vmatprep.subr.mxu0 0.0
        %4009 = vmatpush1.msra.mxu0 0.0
        %4010 = vmatprep.subr.mxu0 0.0
        %4011 = vmatpush1.msra.mxu0 0.0
        %4012 = vmatprep.subr.mxu0 0.0
        %4013 = vmatpush1.msra.mxu0 0.0
        %4014 = vmatprep.subr.mxu0 0.0
        %4015 = vmatpush1.msra.mxu0 0.0
        %4016 = vmatprep.subr.mxu0 0.0
        %4017 = vmatpush1.msra.mxu0 0.0
        %4018 = vmatprep.subr.mxu0 0.0
        %4019 = vmatpush1.msra.mxu0 0.0
        %4020 = vmatprep.subr.mxu0 0.0
        %4021 = vmatpush1.msra.mxu0 0.0
        %4022 = vmatprep.subr.mxu0 0.0
        %4023 = vmatpush1.msra.mxu0 0.0
        %4024 = vmatprep.subr.mxu0 0.0
        %4025 = vmatpush1.msra.mxu0 0.0
        %4026 = vmatprep.subr.mxu0 0.0
        %4027 = vmatpush1.msra.mxu0 0.0
        %4028 = vmatprep.subr.mxu0 0.0
        %4029 = vmatpush1.msra.mxu0 0.0
        %4030 = vmatprep.subr.mxu0 0.0
        %4031 = vmatpush1.msra.mxu0 0.0
        %4032 = vmatprep.subr.mxu0 0.0
        %4033 = vmatpush1.msra.mxu0 0.0
        %4034 = vmatprep.subr.mxu0 0.0
        %4035 = vmatpush1.msra.mxu0 0.0
        %4036 = vmatprep.subr.mxu0 0.0
        %4037 = vmatpush1.msra.mxu0 0.0
        %4038 = vmatprep.subr.mxu0 0.0
        %4039 = vmatpush1.msra.mxu0 0.0
        %4040 = vmatprep.subr.mxu0 0.0
        %4041 = vmatpush1.msra.mxu0 0.0
        %4042 = vmatprep.subr.mxu0 0.0
        %4043 = vmatpush1.msra.mxu0 0.0
        %4044 = vmatprep.subr.mxu0 0.0
        %4045 = vmatpush1.msra.mxu0 0.0
        %4046 = vmatprep.subr.mxu0 0.0
        %4047 = vmatpush1.msra.mxu0 0.0
        %4048 = vmatprep.subr.mxu0 0.0
        %4049 = vmatpush1.msra.mxu0 0.0
        %4050 = vmatprep.subr.mxu0 0.0
        %4051 = vmatpush1.msra.mxu0 0.0
        %4052 = vmatprep.subr.mxu0 0.0
        %4053 = vmatpush1.msra.mxu0 0.0
        %4054 = vmatprep.subr.mxu0 0.0
        %4055 = vmatpush1.msra.mxu0 0.0
        %4056 = vmatprep.subr.mxu0 0.0
        %4057 = vmatpush1.msra.mxu0 0.0
        %4058 = vmatprep.subr.mxu0 0.0
        %4059 = vmatpush1.msra.mxu0 0.0
        %4060 = vmatprep.subr.mxu0 0.0
        %4061 = vmatpush1.msra.mxu0 0.0
        %4062 = vmatprep.mubr.f32.mxu0 0.0
        %4063 = vmatmul.mubr.f32.gmra.mrb[0].mxu0 %v3499
        %v4064 = vpop.f32.mrb[0].mxu0
        %v4065 = vadd.f32 0.0, %v4064
        %v4066 = vpop.f32.mrb[0].mxu0
        %v4067 = vadd.f32 0.0, %v4066
        %4068 = vdwg.mxu0
        %v4069 = vmul.f32 %v3481, %v3481
        %v4070 = vmul.f32 %v3482, %v3482
        %v4071 = vmul.f32 %v3483, %v3483
        %v4072 = vmul.f32 %v3484, %v3484
        %v4073 = vmul.f32 %v3485, %v3485
        %v4074 = vmul.f32 %v3486, %v3486
        %v4075 = vmul.f32 %v3487, %v3487
        %v4076 = vmul.f32 %v3488, %v3488
        %v4077 = vmul.f32 %v3489, %v3489
        %v4078 = vmul.f32 %v3490, %v3490
        %v4079 = vmul.f32 %v3491, %v3491
        %v4080 = vmul.f32 %v3492, %v3492
        %v4081 = vmul.f32 %v3493, %v3493
        %v4082 = vmul.f32 %v3494, %v3494
        %v4083 = vmul.f32 %v3495, %v3495
        %v4084 = vmul.f32 %v3496, %v3496
        %4085 = vmatprep.subr.mxu0 %v4070
        %4086 = vmatpush1.msra.mxu0 %v4069
        %4087 = vmatprep.subr.mxu0 0.0
        %4088 = vmatpush1.msra.mxu0 0.0
        %4089 = vmatprep.subr.mxu0 0.0
        %4090 = vmatpush1.msra.mxu0 0.0
        %4091 = vmatprep.subr.mxu0 0.0
        %4092 = vmatpush1.msra.mxu0 0.0
        %4093 = vmatprep.subr.mxu0 0.0
        %4094 = vmatpush1.msra.mxu0 0.0
        %4095 = vmatprep.subr.mxu0 0.0
        %4096 = vmatpush1.msra.mxu0 0.0
        %4097 = vmatprep.subr.mxu0 0.0
        %4098 = vmatpush1.msra.mxu0 0.0
        %4099 = vmatprep.subr.mxu0 0.0
        %4100 = vmatpush1.msra.mxu0 0.0
        %4101 = vmatprep.subr.mxu0 0.0
        %4102 = vmatpush1.msra.mxu0 0.0
        %4103 = vmatprep.subr.mxu0 0.0
        %4104 = vmatpush1.msra.mxu0 0.0
        %4105 = vmatprep.subr.mxu0 0.0
        %4106 = vmatpush1.msra.mxu0 0.0
        %4107 = vmatprep.subr.mxu0 0.0
        %4108 = vmatpush1.msra.mxu0 0.0
        %4109 = vmatprep.subr.mxu0 0.0
        %4110 = vmatpush1.msra.mxu0 0.0
        %4111 = vmatprep.subr.mxu0 0.0
        %4112 = vmatpush1.msra.mxu0 0.0
        %4113 = vmatprep.subr.mxu0 0.0
        %4114 = vmatpush1.msra.mxu0 0.0
        %4115 = vmatprep.subr.mxu0 0.0
        %4116 = vmatpush1.msra.mxu0 0.0
        %4117 = vmatprep.subr.mxu0 0.0
        %4118 = vmatpush1.msra.mxu0 0.0
        %4119 = vmatprep.subr.mxu0 0.0
        %4120 = vmatpush1.msra.mxu0 0.0
        %4121 = vmatprep.subr.mxu0 0.0
        %4122 = vmatpush1.msra.mxu0 0.0
        %4123 = vmatprep.subr.mxu0 0.0
        %4124 = vmatpush1.msra.mxu0 0.0
        %4125 = vmatprep.subr.mxu0 0.0
        %4126 = vmatpush1.msra.mxu0 0.0
        %4127 = vmatprep.subr.mxu0 0.0
        %4128 = vmatpush1.msra.mxu0 0.0
        %4129 = vmatprep.subr.mxu0 0.0
        %4130 = vmatpush1.msra.mxu0 0.0
        %4131 = vmatprep.subr.mxu0 0.0
        %4132 = vmatpush1.msra.mxu0 0.0
        %4133 = vmatprep.subr.mxu0 0.0
        %4134 = vmatpush1.msra.mxu0 0.0
        %4135 = vmatprep.subr.mxu0 0.0
        %4136 = vmatpush1.msra.mxu0 0.0
        %4137 = vmatprep.subr.mxu0 0.0
        %4138 = vmatpush1.msra.mxu0 0.0
        %4139 = vmatprep.subr.mxu0 0.0
        %4140 = vmatpush1.msra.mxu0 0.0
        %4141 = vmatprep.subr.mxu0 0.0
        %4142 = vmatpush1.msra.mxu0 0.0
        %4143 = vmatprep.subr.mxu0 0.0
        %4144 = vmatpush1.msra.mxu0 0.0
        %4145 = vmatprep.subr.mxu0 0.0
        %4146 = vmatpush1.msra.mxu0 0.0
        %4147 = vmatprep.subr.mxu0 0.0
        %4148 = vmatpush1.msra.mxu0 0.0
        %4149 = vmatprep.mubr.f32.mxu0 0.0
        %4150 = vmatmul.mubr.f32.gmra.mrb[0].mxu0 %v3499
        %v4151 = vpop.f32.mrb[0].mxu0
        %v4152 = vadd.f32 0.0, %v4151
        %v4153 = vpop.f32.mrb[0].mxu0
        %v4154 = vadd.f32 0.0, %v4153
        %4155 = vdwg.mxu0
        %4156 = vmatprep.subr.mxu0 %v4072
        %4157 = vmatpush1.msra.mxu0 %v4071
        %4158 = vmatprep.subr.mxu0 0.0
        %4159 = vmatpush1.msra.mxu0 0.0
        %4160 = vmatprep.subr.mxu0 0.0
        %4161 = vmatpush1.msra.mxu0 0.0
        %4162 = vmatprep.subr.mxu0 0.0
        %4163 = vmatpush1.msra.mxu0 0.0
        %4164 = vmatprep.subr.mxu0 0.0
        %4165 = vmatpush1.msra.mxu0 0.0
        %4166 = vmatprep.subr.mxu0 0.0
        %4167 = vmatpush1.msra.mxu0 0.0
        %4168 = vmatprep.subr.mxu0 0.0
        %4169 = vmatpush1.msra.mxu0 0.0
        %4170 = vmatprep.subr.mxu0 0.0
        %4171 = vmatpush1.msra.mxu0 0.0
        %4172 = vmatprep.subr.mxu0 0.0
        %4173 = vmatpush1.msra.mxu0 0.0
        %4174 = vmatprep.subr.mxu0 0.0
        %4175 = vmatpush1.msra.mxu0 0.0
        %4176 = vmatprep.subr.mxu0 0.0
        %4177 = vmatpush1.msra.mxu0 0.0
        %4178 = vmatprep.subr.mxu0 0.0
        %4179 = vmatpush1.msra.mxu0 0.0
        %4180 = vmatprep.subr.mxu0 0.0
        %4181 = vmatpush1.msra.mxu0 0.0
        %4182 = vmatprep.subr.mxu0 0.0
        %4183 = vmatpush1.msra.mxu0 0.0
        %4184 = vmatprep.subr.mxu0 0.0
        %4185 = vmatpush1.msra.mxu0 0.0
        %4186 = vmatprep.subr.mxu0 0.0
        %4187 = vmatpush1.msra.mxu0 0.0
        %4188 = vmatprep.subr.mxu0 0.0
        %4189 = vmatpush1.msra.mxu0 0.0
        %4190 = vmatprep.subr.mxu0 0.0
        %4191 = vmatpush1.msra.mxu0 0.0
        %4192 = vmatprep.subr.mxu0 0.0
        %4193 = vmatpush1.msra.mxu0 0.0
        %4194 = vmatprep.subr.mxu0 0.0
        %4195 = vmatpush1.msra.mxu0 0.0
        %4196 = vmatprep.subr.mxu0 0.0
        %4197 = vmatpush1.msra.mxu0 0.0
        %4198 = vmatprep.subr.mxu0 0.0
        %4199 = vmatpush1.msra.mxu0 0.0
        %4200 = vmatprep.subr.mxu0 0.0
        %4201 = vmatpush1.msra.mxu0 0.0
        %4202 = vmatprep.subr.mxu0 0.0
        %4203 = vmatpush1.msra.mxu0 0.0
        %4204 = vmatprep.subr.mxu0 0.0
        %4205 = vmatpush1.msra.mxu0 0.0
        %4206 = vmatprep.subr.mxu0 0.0
        %4207 = vmatpush1.msra.mxu0 0.0
        %4208 = vmatprep.subr.mxu0 0.0
        %4209 = vmatpush1.msra.mxu0 0.0
        %4210 = vmatprep.subr.mxu0 0.0
        %4211 = vmatpush1.msra.mxu0 0.0
        %4212 = vmatprep.subr.mxu0 0.0
        %4213 = vmatpush1.msra.mxu0 0.0
        %4214 = vmatprep.subr.mxu0 0.0
        %4215 = vmatpush1.msra.mxu0 0.0
        %4216 = vmatprep.subr.mxu0 0.0
        %4217 = vmatpush1.msra.mxu0 0.0
        %4218 = vmatprep.subr.mxu0 0.0
        %4219 = vmatpush1.msra.mxu0 0.0
        %4220 = vmatprep.mubr.f32.mxu0 0.0
        %4221 = vmatmul.mubr.f32.gmra.mrb[0].mxu0 %v3499
        %v4222 = vpop.f32.mrb[0].mxu0
        %v4223 = vadd.f32 0.0, %v4222
        %v4224 = vpop.f32.mrb[0].mxu0
        %v4225 = vadd.f32 0.0, %v4224
        %4226 = vdwg.mxu0
        %4227 = vmatprep.subr.mxu0 %v4074
        %4228 = vmatpush1.msra.mxu0 %v4073
        %4229 = vmatprep.subr.mxu0 0.0
        %4230 = vmatpush1.msra.mxu0 0.0
        %4231 = vmatprep.subr.mxu0 0.0
        %4232 = vmatpush1.msra.mxu0 0.0
        %4233 = vmatprep.subr.mxu0 0.0
        %4234 = vmatpush1.msra.mxu0 0.0
        %4235 = vmatprep.subr.mxu0 0.0
        %4236 = vmatpush1.msra.mxu0 0.0
        %4237 = vmatprep.subr.mxu0 0.0
        %4238 = vmatpush1.msra.mxu0 0.0
        %4239 = vmatprep.subr.mxu0 0.0
        %4240 = vmatpush1.msra.mxu0 0.0
        %4241 = vmatprep.subr.mxu0 0.0
        %4242 = vmatpush1.msra.mxu0 0.0
        %4243 = vmatprep.subr.mxu0 0.0
        %4244 = vmatpush1.msra.mxu0 0.0
        %4245 = vmatprep.subr.mxu0 0.0
        %4246 = vmatpush1.msra.mxu0 0.0
        %4247 = vmatprep.subr.mxu0 0.0
        %4248 = vmatpush1.msra.mxu0 0.0
        %4249 = vmatprep.subr.mxu0 0.0
        %4250 = vmatpush1.msra.mxu0 0.0
        %4251 = vmatprep.subr.mxu0 0.0
        %4252 = vmatpush1.msra.mxu0 0.0
        %4253 = vmatprep.subr.mxu0 0.0
        %4254 = vmatpush1.msra.mxu0 0.0
        %4255 = vmatprep.subr.mxu0 0.0
        %4256 = vmatpush1.msra.mxu0 0.0
        %4257 = vmatprep.subr.mxu0 0.0
        %4258 = vmatpush1.msra.mxu0 0.0
        %4259 = vmatprep.subr.mxu0 0.0
        %4260 = vmatpush1.msra.mxu0 0.0
        %4261 = vmatprep.subr.mxu0 0.0
        %4262 = vmatpush1.msra.mxu0 0.0
        %4263 = vmatprep.subr.mxu0 0.0
        %4264 = vmatpush1.msra.mxu0 0.0
        %4265 = vmatprep.subr.mxu0 0.0
        %4266 = vmatpush1.msra.mxu0 0.0
        %4267 = vmatprep.subr.mxu0 0.0
        %4268 = vmatpush1.msra.mxu0 0.0
        %4269 = vmatprep.subr.mxu0 0.0
        %4270 = vmatpush1.msra.mxu0 0.0
        %4271 = vmatprep.subr.mxu0 0.0
        %4272 = vmatpush1.msra.mxu0 0.0
        %4273 = vmatprep.subr.mxu0 0.0
        %4274 = vmatpush1.msra.mxu0 0.0
        %4275 = vmatprep.subr.mxu0 0.0
        %4276 = vmatpush1.msra.mxu0 0.0
        %4277 = vmatprep.subr.mxu0 0.0
        %4278 = vmatpush1.msra.mxu0 0.0
        %4279 = vmatprep.subr.mxu0 0.0
        %4280 = vmatpush1.msra.mxu0 0.0
        %4281 = vmatprep.subr.mxu0 0.0
        %4282 = vmatpush1.msra.mxu0 0.0
        %4283 = vmatprep.subr.mxu0 0.0
        %4284 = vmatpush1.msra.mxu0 0.0
        %4285 = vmatprep.subr.mxu0 0.0
        %4286 = vmatpush1.msra.mxu0 0.0
        %4287 = vmatprep.subr.mxu0 0.0
        %4288 = vmatpush1.msra.mxu0 0.0
        %4289 = vmatprep.subr.mxu0 0.0
        %4290 = vmatpush1.msra.mxu0 0.0
        %4291 = vmatprep.mubr.f32.mxu0 0.0
        %4292 = vmatmul.mubr.f32.gmra.mrb[0].mxu0 %v3499
        %v4293 = vpop.f32.mrb[0].mxu0
        %v4294 = vadd.f32 0.0, %v4293
        %v4295 = vpop.f32.mrb[0].mxu0
        %v4296 = vadd.f32 0.0, %v4295
        %4297 = vdwg.mxu0
        %4298 = vmatprep.subr.mxu0 %v4076
        %4299 = vmatpush1.msra.mxu0 %v4075
        %4300 = vmatprep.subr.mxu0 0.0
        %4301 = vmatpush1.msra.mxu0 0.0
        %4302 = vmatprep.subr.mxu0 0.0
        %4303 = vmatpush1.msra.mxu0 0.0
        %4304 = vmatprep.subr.mxu0 0.0
        %4305 = vmatpush1.msra.mxu0 0.0
        %4306 = vmatprep.subr.mxu0 0.0
        %4307 = vmatpush1.msra.mxu0 0.0
        %4308 = vmatprep.subr.mxu0 0.0
        %4309 = vmatpush1.msra.mxu0 0.0
        %4310 = vmatprep.subr.mxu0 0.0
        %4311 = vmatpush1.msra.mxu0 0.0
        %4312 = vmatprep.subr.mxu0 0.0
        %4313 = vmatpush1.msra.mxu0 0.0
        %4314 = vmatprep.subr.mxu0 0.0
        %4315 = vmatpush1.msra.mxu0 0.0
        %4316 = vmatprep.subr.mxu0 0.0
        %4317 = vmatpush1.msra.mxu0 0.0
        %4318 = vmatprep.subr.mxu0 0.0
        %4319 = vmatpush1.msra.mxu0 0.0
        %4320 = vmatprep.subr.mxu0 0.0
        %4321 = vmatpush1.msra.mxu0 0.0
        %4322 = vmatprep.subr.mxu0 0.0
        %4323 = vmatpush1.msra.mxu0 0.0
        %4324 = vmatprep.subr.mxu0 0.0
        %4325 = vmatpush1.msra.mxu0 0.0
        %4326 = vmatprep.subr.mxu0 0.0
        %4327 = vmatpush1.msra.mxu0 0.0
        %4328 = vmatprep.subr.mxu0 0.0
        %4329 = vmatpush1.msra.mxu0 0.0
        %4330 = vmatprep.subr.mxu0 0.0
        %4331 = vmatpush1.msra.mxu0 0.0
        %4332 = vmatprep.subr.mxu0 0.0
        %4333 = vmatpush1.msra.mxu0 0.0
        %4334 = vmatprep.subr.mxu0 0.0
        %4335 = vmatpush1.msra.mxu0 0.0
        %4336 = vmatprep.subr.mxu0 0.0
        %4337 = vmatpush1.msra.mxu0 0.0
        %4338 = vmatprep.subr.mxu0 0.0
        %4339 = vmatpush1.msra.mxu0 0.0
        %4340 = vmatprep.subr.mxu0 0.0
        %4341 = vmatpush1.msra.mxu0 0.0
        %4342 = vmatprep.subr.mxu0 0.0
        %4343 = vmatpush1.msra.mxu0 0.0
        %4344 = vmatprep.subr.mxu0 0.0
        %4345 = vmatpush1.msra.mxu0 0.0
        %4346 = vmatprep.subr.mxu0 0.0
        %4347 = vmatpush1.msra.mxu0 0.0
        %4348 = vmatprep.subr.mxu0 0.0
        %4349 = vmatpush1.msra.mxu0 0.0
        %4350 = vmatprep.subr.mxu0 0.0
        %4351 = vmatpush1.msra.mxu0 0.0
        %4352 = vmatprep.subr.mxu0 0.0
        %4353 = vmatpush1.msra.mxu0 0.0
        %4354 = vmatprep.subr.mxu0 0.0
        %4355 = vmatpush1.msra.mxu0 0.0
        %4356 = vmatprep.subr.mxu0 0.0
        %4357 = vmatpush1.msra.mxu0 0.0
        %4358 = vmatprep.subr.mxu0 0.0
        %4359 = vmatpush1.msra.mxu0 0.0
        %4360 = vmatprep.subr.mxu0 0.0
        %4361 = vmatpush1.msra.mxu0 0.0
        %4362 = vmatprep.mubr.f32.mxu0 0.0
        %4363 = vmatmul.mubr.f32.gmra.mrb[0].mxu0 %v3499
        %v4364 = vpop.f32.mrb[0].mxu0
        %v4365 = vadd.f32 0.0, %v4364
        %v4366 = vpop.f32.mrb[0].mxu0
        %v4367 = vadd.f32 0.0, %v4366
        %4368 = vdwg.mxu0
        %4369 = vmatprep.subr.mxu0 %v4078
        %4370 = vmatpush1.msra.mxu0 %v4077
        %4371 = vmatprep.subr.mxu0 0.0
        %4372 = vmatpush1.msra.mxu0 0.0
        %4373 = vmatprep.subr.mxu0 0.0
        %4374 = vmatpush1.msra.mxu0 0.0
        %4375 = vmatprep.subr.mxu0 0.0
        %4376 = vmatpush1.msra.mxu0 0.0
        %4377 = vmatprep.subr.mxu0 0.0
        %4378 = vmatpush1.msra.mxu0 0.0
        %4379 = vmatprep.subr.mxu0 0.0
        %4380 = vmatpush1.msra.mxu0 0.0
        %4381 = vmatprep.subr.mxu0 0.0
        %4382 = vmatpush1.msra.mxu0 0.0
        %4383 = vmatprep.subr.mxu0 0.0
        %4384 = vmatpush1.msra.mxu0 0.0
        %4385 = vmatprep.subr.mxu0 0.0
        %4386 = vmatpush1.msra.mxu0 0.0
        %4387 = vmatprep.subr.mxu0 0.0
        %4388 = vmatpush1.msra.mxu0 0.0
        %4389 = vmatprep.subr.mxu0 0.0
        %4390 = vmatpush1.msra.mxu0 0.0
        %4391 = vmatprep.subr.mxu0 0.0
        %4392 = vmatpush1.msra.mxu0 0.0
        %4393 = vmatprep.subr.mxu0 0.0
        %4394 = vmatpush1.msra.mxu0 0.0
        %4395 = vmatprep.subr.mxu0 0.0
        %4396 = vmatpush1.msra.mxu0 0.0
        %4397 = vmatprep.subr.mxu0 0.0
        %4398 = vmatpush1.msra.mxu0 0.0
        %4399 = vmatprep.subr.mxu0 0.0
        %4400 = vmatpush1.msra.mxu0 0.0
        %4401 = vmatprep.subr.mxu0 0.0
        %4402 = vmatpush1.msra.mxu0 0.0
        %4403 = vmatprep.subr.mxu0 0.0
        %4404 = vmatpush1.msra.mxu0 0.0
        %4405 = vmatprep.subr.mxu0 0.0
        %4406 = vmatpush1.msra.mxu0 0.0
        %4407 = vmatprep.subr.mxu0 0.0
        %4408 = vmatpush1.msra.mxu0 0.0
        %4409 = vmatprep.subr.mxu0 0.0
        %4410 = vmatpush1.msra.mxu0 0.0
        %4411 = vmatprep.subr.mxu0 0.0
        %4412 = vmatpush1.msra.mxu0 0.0
        %4413 = vmatprep.subr.mxu0 0.0
        %4414 = vmatpush1.msra.mxu0 0.0
        %4415 = vmatprep.subr.mxu0 0.0
        %4416 = vmatpush1.msra.mxu0 0.0
        %4417 = vmatprep.subr.mxu0 0.0
        %4418 = vmatpush1.msra.mxu0 0.0
        %4419 = vmatprep.subr.mxu0 0.0
        %4420 = vmatpush1.msra.mxu0 0.0
        %4421 = vmatprep.subr.mxu0 0.0
        %4422 = vmatpush1.msra.mxu0 0.0
        %4423 = vmatprep.subr.mxu0 0.0
        %4424 = vmatpush1.msra.mxu0 0.0
        %4425 = vmatprep.subr.mxu0 0.0
        %4426 = vmatpush1.msra.mxu0 0.0
        %4427 = vmatprep.subr.mxu0 0.0
        %4428 = vmatpush1.msra.mxu0 0.0
        %4429 = vmatprep.subr.mxu0 0.0
        %4430 = vmatpush1.msra.mxu0 0.0
        %4431 = vmatprep.subr.mxu0 0.0
        %4432 = vmatpush1.msra.mxu0 0.0
        %4433 = vmatprep.mubr.f32.mxu0 0.0
        %4434 = vmatmul.mubr.f32.gmra.mrb[0].mxu0 %v3499
        %v4435 = vpop.f32.mrb[0].mxu0
        %v4436 = vadd.f32 0.0, %v4435
        %v4437 = vpop.f32.mrb[0].mxu0
        %v4438 = vadd.f32 0.0, %v4437
        %4439 = vdwg.mxu0
        %4440 = vmatprep.subr.mxu0 %v4080
        %4441 = vmatpush1.msra.mxu0 %v4079
        %4442 = vmatprep.subr.mxu0 0.0
        %4443 = vmatpush1.msra.mxu0 0.0
        %4444 = vmatprep.subr.mxu0 0.0
        %4445 = vmatpush1.msra.mxu0 0.0
        %4446 = vmatprep.subr.mxu0 0.0
        %4447 = vmatpush1.msra.mxu0 0.0
        %4448 = vmatprep.subr.mxu0 0.0
        %4449 = vmatpush1.msra.mxu0 0.0
        %4450 = vmatprep.subr.mxu0 0.0
        %4451 = vmatpush1.msra.mxu0 0.0
        %4452 = vmatprep.subr.mxu0 0.0
        %4453 = vmatpush1.msra.mxu0 0.0
        %4454 = vmatprep.subr.mxu0 0.0
        %4455 = vmatpush1.msra.mxu0 0.0
        %4456 = vmatprep.subr.mxu0 0.0
        %4457 = vmatpush1.msra.mxu0 0.0
        %4458 = vmatprep.subr.mxu0 0.0
        %4459 = vmatpush1.msra.mxu0 0.0
        %4460 = vmatprep.subr.mxu0 0.0
        %4461 = vmatpush1.msra.mxu0 0.0
        %4462 = vmatprep.subr.mxu0 0.0
        %4463 = vmatpush1.msra.mxu0 0.0
        %4464 = vmatprep.subr.mxu0 0.0
        %4465 = vmatpush1.msra.mxu0 0.0
        %4466 = vmatprep.subr.mxu0 0.0
        %4467 = vmatpush1.msra.mxu0 0.0
        %4468 = vmatprep.subr.mxu0 0.0
        %4469 = vmatpush1.msra.mxu0 0.0
        %4470 = vmatprep.subr.mxu0 0.0
        %4471 = vmatpush1.msra.mxu0 0.0
        %4472 = vmatprep.subr.mxu0 0.0
        %4473 = vmatpush1.msra.mxu0 0.0
        %4474 = vmatprep.subr.mxu0 0.0
        %4475 = vmatpush1.msra.mxu0 0.0
        %4476 = vmatprep.subr.mxu0 0.0
        %4477 = vmatpush1.msra.mxu0 0.0
        %4478 = vmatprep.subr.mxu0 0.0
        %4479 = vmatpush1.msra.mxu0 0.0
        %4480 = vmatprep.subr.mxu0 0.0
        %4481 = vmatpush1.msra.mxu0 0.0
        %4482 = vmatprep.subr.mxu0 0.0
        %4483 = vmatpush1.msra.mxu0 0.0
        %4484 = vmatprep.subr.mxu0 0.0
        %4485 = vmatpush1.msra.mxu0 0.0
        %4486 = vmatprep.subr.mxu0 0.0
        %4487 = vmatpush1.msra.mxu0 0.0
        %4488 = vmatprep.subr.mxu0 0.0
        %4489 = vmatpush1.msra.mxu0 0.0
        %4490 = vmatprep.subr.mxu0 0.0
        %4491 = vmatpush1.msra.mxu0 0.0
        %4492 = vmatprep.subr.mxu0 0.0
        %4493 = vmatpush1.msra.mxu0 0.0
        %4494 = vmatprep.subr.mxu0 0.0
        %4495 = vmatpush1.msra.mxu0 0.0
        %4496 = vmatprep.subr.mxu0 0.0
        %4497 = vmatpush1.msra.mxu0 0.0
        %4498 = vmatprep.subr.mxu0 0.0
        %4499 = vmatpush1.msra.mxu0 0.0
        %4500 = vmatprep.subr.mxu0 0.0
        %4501 = vmatpush1.msra.mxu0 0.0
        %4502 = vmatprep.subr.mxu0 0.0
        %4503 = vmatpush1.msra.mxu0 0.0
        %4504 = vmatprep.mubr.f32.mxu0 0.0
        %4505 = vmatmul.mubr.f32.gmra.mrb[0].mxu0 %v3499
        %v4506 = vpop.f32.mrb[0].mxu0
        %v4507 = vadd.f32 0.0, %v4506
        %v4508 = vpop.f32.mrb[0].mxu0
        %v4509 = vadd.f32 0.0, %v4508
        %4510 = vdwg.mxu0
        %4511 = vmatprep.subr.mxu0 %v4082
        %4512 = vmatpush1.msra.mxu0 %v4081
        %4513 = vmatprep.subr.mxu0 0.0
        %4514 = vmatpush1.msra.mxu0 0.0
        %4515 = vmatprep.subr.mxu0 0.0
        %4516 = vmatpush1.msra.mxu0 0.0
        %4517 = vmatprep.subr.mxu0 0.0
        %4518 = vmatpush1.msra.mxu0 0.0
        %4519 = vmatprep.subr.mxu0 0.0
        %4520 = vmatpush1.msra.mxu0 0.0
        %4521 = vmatprep.subr.mxu0 0.0
        %4522 = vmatpush1.msra.mxu0 0.0
        %4523 = vmatprep.subr.mxu0 0.0
        %4524 = vmatpush1.msra.mxu0 0.0
        %4525 = vmatprep.subr.mxu0 0.0
        %4526 = vmatpush1.msra.mxu0 0.0
        %4527 = vmatprep.subr.mxu0 0.0
        %4528 = vmatpush1.msra.mxu0 0.0
        %4529 = vmatprep.subr.mxu0 0.0
        %4530 = vmatpush1.msra.mxu0 0.0
        %4531 = vmatprep.subr.mxu0 0.0
        %4532 = vmatpush1.msra.mxu0 0.0
        %4533 = vmatprep.subr.mxu0 0.0
        %4534 = vmatpush1.msra.mxu0 0.0
        %4535 = vmatprep.subr.mxu0 0.0
        %4536 = vmatpush1.msra.mxu0 0.0
        %4537 = vmatprep.subr.mxu0 0.0
        %4538 = vmatpush1.msra.mxu0 0.0
        %4539 = vmatprep.subr.mxu0 0.0
        %4540 = vmatpush1.msra.mxu0 0.0
        %4541 = vmatprep.subr.mxu0 0.0
        %4542 = vmatpush1.msra.mxu0 0.0
        %4543 = vmatprep.subr.mxu0 0.0
        %4544 = vmatpush1.msra.mxu0 0.0
        %4545 = vmatprep.subr.mxu0 0.0
        %4546 = vmatpush1.msra.mxu0 0.0
        %4547 = vmatprep.subr.mxu0 0.0
        %4548 = vmatpush1.msra.mxu0 0.0
        %4549 = vmatprep.subr.mxu0 0.0
        %4550 = vmatpush1.msra.mxu0 0.0
        %4551 = vmatprep.subr.mxu0 0.0
        %4552 = vmatpush1.msra.mxu0 0.0
        %4553 = vmatprep.subr.mxu0 0.0
        %4554 = vmatpush1.msra.mxu0 0.0
        %4555 = vmatprep.subr.mxu0 0.0
        %4556 = vmatpush1.msra.mxu0 0.0
        %4557 = vmatprep.subr.mxu0 0.0
        %4558 = vmatpush1.msra.mxu0 0.0
        %4559 = vmatprep.subr.mxu0 0.0
        %4560 = vmatpush1.msra.mxu0 0.0
        %4561 = vmatprep.subr.mxu0 0.0
        %4562 = vmatpush1.msra.mxu0 0.0
        %4563 = vmatprep.subr.mxu0 0.0
        %4564 = vmatpush1.msra.mxu0 0.0
        %4565 = vmatprep.subr.mxu0 0.0
        %4566 = vmatpush1.msra.mxu0 0.0
        %4567 = vmatprep.subr.mxu0 0.0
        %4568 = vmatpush1.msra.mxu0 0.0
        %4569 = vmatprep.subr.mxu0 0.0
        %4570 = vmatpush1.msra.mxu0 0.0
        %4571 = vmatprep.subr.mxu0 0.0
        %4572 = vmatpush1.msra.mxu0 0.0
        %4573 = vmatprep.subr.mxu0 0.0
        %4574 = vmatpush1.msra.mxu0 0.0
        %4575 = vmatprep.mubr.f32.mxu0 0.0
        %4576 = vmatmul.mubr.f32.gmra.mrb[0].mxu0 %v3499
        %v4577 = vpop.f32.mrb[0].mxu0
        %v4578 = vadd.f32 0.0, %v4577
        %v4579 = vpop.f32.mrb[0].mxu0
        %v4580 = vadd.f32 0.0, %v4579
        %4581 = vdwg.mxu0
        %4582 = vmatprep.subr.mxu0 %v4084
        %4583 = vmatpush1.msra.mxu0 %v4083
        %4584 = vmatprep.subr.mxu0 0.0
        %4585 = vmatpush1.msra.mxu0 0.0
        %4586 = vmatprep.subr.mxu0 0.0
        %4587 = vmatpush1.msra.mxu0 0.0
        %4588 = vmatprep.subr.mxu0 0.0
        %4589 = vmatpush1.msra.mxu0 0.0
        %4590 = vmatprep.subr.mxu0 0.0
        %4591 = vmatpush1.msra.mxu0 0.0
        %4592 = vmatprep.subr.mxu0 0.0
        %4593 = vmatpush1.msra.mxu0 0.0
        %4594 = vmatprep.subr.mxu0 0.0
        %4595 = vmatpush1.msra.mxu0 0.0
        %4596 = vmatprep.subr.mxu0 0.0
        %4597 = vmatpush1.msra.mxu0 0.0
        %4598 = vmatprep.subr.mxu0 0.0
        %4599 = vmatpush1.msra.mxu0 0.0
        %4600 = vmatprep.subr.mxu0 0.0
        %4601 = vmatpush1.msra.mxu0 0.0
        %4602 = vmatprep.subr.mxu0 0.0
        %4603 = vmatpush1.msra.mxu0 0.0
        %4604 = vmatprep.subr.mxu0 0.0
        %4605 = vmatpush1.msra.mxu0 0.0
        %4606 = vmatprep.subr.mxu0 0.0
        %4607 = vmatpush1.msra.mxu0 0.0
        %4608 = vmatprep.subr.mxu0 0.0
        %4609 = vmatpush1.msra.mxu0 0.0
        %4610 = vmatprep.subr.mxu0 0.0
        %4611 = vmatpush1.msra.mxu0 0.0
        %4612 = vmatprep.subr.mxu0 0.0
        %4613 = vmatpush1.msra.mxu0 0.0
        %4614 = vmatprep.subr.mxu0 0.0
        %4615 = vmatpush1.msra.mxu0 0.0
        %4616 = vmatprep.subr.mxu0 0.0
        %4617 = vmatpush1.msra.mxu0 0.0
        %4618 = vmatprep.subr.mxu0 0.0
        %4619 = vmatpush1.msra.mxu0 0.0
        %4620 = vmatprep.subr.mxu0 0.0
        %4621 = vmatpush1.msra.mxu0 0.0
        %4622 = vmatprep.subr.mxu0 0.0
        %4623 = vmatpush1.msra.mxu0 0.0
        %4624 = vmatprep.subr.mxu0 0.0
        %4625 = vmatpush1.msra.mxu0 0.0
        %4626 = vmatprep.subr.mxu0 0.0
        %4627 = vmatpush1.msra.mxu0 0.0
        %4628 = vmatprep.subr.mxu0 0.0
        %4629 = vmatpush1.msra.mxu0 0.0
        %4630 = vmatprep.subr.mxu0 0.0
        %4631 = vmatpush1.msra.mxu0 0.0
        %4632 = vmatprep.subr.mxu0 0.0
        %4633 = vmatpush1.msra.mxu0 0.0
        %4634 = vmatprep.subr.mxu0 0.0
        %4635 = vmatpush1.msra.mxu0 0.0
        %4636 = vmatprep.subr.mxu0 0.0
        %4637 = vmatpush1.msra.mxu0 0.0
        %4638 = vmatprep.subr.mxu0 0.0
        %4639 = vmatpush1.msra.mxu0 0.0
        %4640 = vmatprep.subr.mxu0 0.0
        %4641 = vmatpush1.msra.mxu0 0.0
        %4642 = vmatprep.subr.mxu0 0.0
        %4643 = vmatpush1.msra.mxu0 0.0
        %4644 = vmatprep.subr.mxu0 0.0
        %4645 = vmatpush1.msra.mxu0 0.0
        %4646 = vmatprep.mubr.f32.mxu0 0.0
        %4647 = vmatmul.mubr.f32.gmra.mrb[0].mxu0 %v3499
        %v4648 = vpop.f32.mrb[0].mxu0
        %v4649 = vadd.f32 0.0, %v4648
        %v4650 = vpop.f32.mrb[0].mxu0
        %v4651 = vadd.f32 0.0, %v4650
        %4652 = vdwg.mxu0
        %v4653 = vld [vmem:[#allocation2] ss:$8 sm:$0xf]
        %v4654 = vld [vmem:[#allocation2] ss:$8 sm:$0xf0]
        %v4655 = vor.u32 %v4653, %v4654
        %s4656 = scalar_lea.vmem [#allocation2], 64
        %v4657 = vld [vmem:[%s4656] ss:$8 sm:$0xf]
        %v4658 = vld [vmem:[%s4656] ss:$8 sm:$0xf0]
        %v4659 = vor.u32 %v4657, %v4658
        %v4676 = vcombine.low %v3568, %v3570
        %v4677 = vcombine.low %v3639, %v3641
        %v4678 = vcombine.low %v3710, %v3712
        %v4679 = vcombine.low %v3781, %v3783
        %v4681 = vunpack.c.l.s4 1966171168
        %v4682 = vunpack.c.0.s8 %v4681
        %v4683 = vlaneseq
        %v4684 = vshrl.u32 %v4683, 7
        %v4685 = vsub.s32 %v4682, %v4684
        %v4686 = vrot.slane %v4676, %v4685
        %v4688 = vunpack.c.l.s4 1966171168
        %v4689 = vunpack.c.0.s8 %v4688
        %v4690 = vlaneseq
        %v4691 = vshrl.u32 %v4690, 7
        %v4692 = vsub.s32 %v4689, %v4691
        %v4693 = vrot.slane %v4677, %v4692
        %v4695 = vunpack.c.l.s4 1966171168
        %v4696 = vunpack.c.0.s8 %v4695
        %v4697 = vlaneseq
        %v4698 = vshrl.u32 %v4697, 7
        %v4699 = vsub.s32 %v4696, %v4698
        %v4700 = vrot.slane %v4678, %v4699
        %v4702 = vunpack.c.l.s4 1966171168
        %v4703 = vunpack.c.0.s8 %v4702
        %v4704 = vlaneseq
        %v4705 = vshrl.u32 %v4704, 7
        %v4706 = vsub.s32 %v4703, %v4705
        %v4707 = vrot.slane %v4679, %v4706
        %v4708 = vcombine.low %v4686, %v4693
        %v4709 = vcombine.low %v4700, %v4707
        %v4711 = vunpack.c.l.s4 1966171168
        %v4712 = vunpack.c.0.s8 %v4711
        %v4713 = vlaneseq
        %v4714 = vshrl.u32 %v4713, 7
        %v4715 = vsub.s32 %v4712, %v4714
        %v4716 = vrot.slane %v4708, %v4715
        %v4718 = vunpack.c.l.s4 1966171168
        %v4719 = vunpack.c.0.s8 %v4718
        %v4720 = vlaneseq
        %v4721 = vshrl.u32 %v4720, 7
        %v4722 = vsub.s32 %v4719, %v4721
        %v4723 = vrot.slane %v4709, %v4722
        %v4724 = vcombine.low %v4716, %v4723
        %v4725 = vcombine.low %v3852, %v3854
        %v4726 = vcombine.low %v3923, %v3925
        %v4727 = vcombine.low %v3994, %v3996
        %v4728 = vcombine.low %v4065, %v4067
        %v4730 = vunpack.c.l.s4 1966171168
        %v4731 = vunpack.c.0.s8 %v4730
        %v4732 = vlaneseq
        %v4733 = vshrl.u32 %v4732, 7
        %v4734 = vsub.s32 %v4731, %v4733
        %v4735 = vrot.slane %v4725, %v4734
        %v4737 = vunpack.c.l.s4 1966171168
        %v4738 = vunpack.c.0.s8 %v4737
        %v4739 = vlaneseq
        %v4740 = vshrl.u32 %v4739, 7
        %v4741 = vsub.s32 %v4738, %v4740
        %v4742 = vrot.slane %v4726, %v4741
        %v4744 = vunpack.c.l.s4 1966171168
        %v4745 = vunpack.c.0.s8 %v4744
        %v4746 = vlaneseq
        %v4747 = vshrl.u32 %v4746, 7
        %v4748 = vsub.s32 %v4745, %v4747
        %v4749 = vrot.slane %v4727, %v4748
        %v4751 = vunpack.c.l.s4 1966171168
        %v4752 = vunpack.c.0.s8 %v4751
        %v4753 = vlaneseq
        %v4754 = vshrl.u32 %v4753, 7
        %v4755 = vsub.s32 %v4752, %v4754
        %v4756 = vrot.slane %v4728, %v4755
        %v4757 = vcombine.low %v4735, %v4742
        %v4758 = vcombine.low %v4749, %v4756
        %v4760 = vunpack.c.l.s4 1966171168
        %v4761 = vunpack.c.0.s8 %v4760
        %v4762 = vlaneseq
        %v4763 = vshrl.u32 %v4762, 7
        %v4764 = vsub.s32 %v4761, %v4763
        %v4765 = vrot.slane %v4757, %v4764
        %v4767 = vunpack.c.l.s4 1966171168
        %v4768 = vunpack.c.0.s8 %v4767
        %v4769 = vlaneseq
        %v4770 = vshrl.u32 %v4769, 7
        %v4771 = vsub.s32 %v4768, %v4770
        %v4772 = vrot.slane %v4758, %v4771
        %v4773 = vcombine.low %v4765, %v4772
        %v4776 = vadd.f32 %v4655, %v4724
        %v4777 = vadd.f32 %v4659, %v4773
        %4778 = vst [vmem:[#allocation2] ss:$8 sm:$0xf] %v4776
        %4779 = vst [vmem:[#allocation2] ss:$8 sm:$0xf0] %v4776
        %4780 = vst [vmem:[%s4656] ss:$8 sm:$0xf] %v4777
        %4781 = vst [vmem:[%s4656] ss:$8 sm:$0xf0] %v4777
        %s4782 = scalar_lea.vmem [#allocation2], 1
        %v4783 = vld [vmem:[%s4782] ss:$8 sm:$0xf]
        %v4784 = vld [vmem:[%s4782] ss:$8 sm:$0xf0]
        %v4785 = vor.u32 %v4783, %v4784
        %s4786 = scalar_lea.vmem [#allocation2], 65
        %v4787 = vld [vmem:[%s4786] ss:$8 sm:$0xf]
        %v4788 = vld [vmem:[%s4786] ss:$8 sm:$0xf0]
        %v4789 = vor.u32 %v4787, %v4788
        %v4806 = vcombine.low %v4152, %v4154
        %v4807 = vcombine.low %v4223, %v4225
        %v4808 = vcombine.low %v4294, %v4296
        %v4809 = vcombine.low %v4365, %v4367
        %v4811 = vunpack.c.l.s4 1966171168
        %v4812 = vunpack.c.0.s8 %v4811
        %v4813 = vlaneseq
        %v4814 = vshrl.u32 %v4813, 7
        %v4815 = vsub.s32 %v4812, %v4814
        %v4816 = vrot.slane %v4806, %v4815
        %v4818 = vunpack.c.l.s4 1966171168
        %v4819 = vunpack.c.0.s8 %v4818
        %v4820 = vlaneseq
        %v4821 = vshrl.u32 %v4820, 7
        %v4822 = vsub.s32 %v4819, %v4821
        %v4823 = vrot.slane %v4807, %v4822
        %v4825 = vunpack.c.l.s4 1966171168
        %v4826 = vunpack.c.0.s8 %v4825
        %v4827 = vlaneseq
        %v4828 = vshrl.u32 %v4827, 7
        %v4829 = vsub.s32 %v4826, %v4828
        %v4830 = vrot.slane %v4808, %v4829
        %v4832 = vunpack.c.l.s4 1966171168
        %v4833 = vunpack.c.0.s8 %v4832
        %v4834 = vlaneseq
        %v4835 = vshrl.u32 %v4834, 7
        %v4836 = vsub.s32 %v4833, %v4835
        %v4837 = vrot.slane %v4809, %v4836
        %v4838 = vcombine.low %v4816, %v4823
        %v4839 = vcombine.low %v4830, %v4837
        %v4841 = vunpack.c.l.s4 1966171168
        %v4842 = vunpack.c.0.s8 %v4841
        %v4843 = vlaneseq
        %v4844 = vshrl.u32 %v4843, 7
        %v4845 = vsub.s32 %v4842, %v4844
        %v4846 = vrot.slane %v4838, %v4845
        %v4848 = vunpack.c.l.s4 1966171168
        %v4849 = vunpack.c.0.s8 %v4848
        %v4850 = vlaneseq
        %v4851 = vshrl.u32 %v4850, 7
        %v4852 = vsub.s32 %v4849, %v4851
        %v4853 = vrot.slane %v4839, %v4852
        %v4854 = vcombine.low %v4846, %v4853
        %v4855 = vcombine.low %v4436, %v4438
        %v4856 = vcombine.low %v4507, %v4509
        %v4857 = vcombine.low %v4578, %v4580
        %v4858 = vcombine.low %v4649, %v4651
        %v4860 = vunpack.c.l.s4 1966171168
        %v4861 = vunpack.c.0.s8 %v4860
        %v4862 = vlaneseq
        %v4863 = vshrl.u32 %v4862, 7
        %v4864 = vsub.s32 %v4861, %v4863
        %v4865 = vrot.slane %v4855, %v4864
        %v4867 = vunpack.c.l.s4 1966171168
        %v4868 = vunpack.c.0.s8 %v4867
        %v4869 = vlaneseq
        %v4870 = vshrl.u32 %v4869, 7
        %v4871 = vsub.s32 %v4868, %v4870
        %v4872 = vrot.slane %v4856, %v4871
        %v4874 = vunpack.c.l.s4 1966171168
        %v4875 = vunpack.c.0.s8 %v4874
        %v4876 = vlaneseq
        %v4877 = vshrl.u32 %v4876, 7
        %v4878 = vsub.s32 %v4875, %v4877
        %v4879 = vrot.slane %v4857, %v4878
        %v4881 = vunpack.c.l.s4 1966171168
        %v4882 = vunpack.c.0.s8 %v4881
        %v4883 = vlaneseq
        %v4884 = vshrl.u32 %v4883, 7
        %v4885 = vsub.s32 %v4882, %v4884
        %v4886 = vrot.slane %v4858, %v4885
        %v4887 = vcombine.low %v4865, %v4872
        %v4888 = vcombine.low %v4879, %v4886
        %v4890 = vunpack.c.l.s4 1966171168
        %v4891 = vunpack.c.0.s8 %v4890
        %v4892 = vlaneseq
        %v4893 = vshrl.u32 %v4892, 7
        %v4894 = vsub.s32 %v4891, %v4893
        %v4895 = vrot.slane %v4887, %v4894
        %v4897 = vunpack.c.l.s4 1966171168
        %v4898 = vunpack.c.0.s8 %v4897
        %v4899 = vlaneseq
        %v4900 = vshrl.u32 %v4899, 7
        %v4901 = vsub.s32 %v4898, %v4900
        %v4902 = vrot.slane %v4888, %v4901
        %v4903 = vcombine.low %v4895, %v4902
        %v4906 = vadd.f32 %v4785, %v4854
        %v4907 = vadd.f32 %v4789, %v4903
        %4908 = vst [vmem:[%s4782] ss:$8 sm:$0xf] %v4906
        %4909 = vst [vmem:[%s4782] ss:$8 sm:$0xf0] %v4906
        %4910 = vst [vmem:[%s4786] ss:$8 sm:$0xf] %v4907
        %4911 = vst [vmem:[%s4786] ss:$8 sm:$0xf0] %v4907
        %p4912 = scmp.eq.s32.totalorder %s22, 1
        // Predicated region
        $region37: #{tpu_custom_call.1} parent=27 // pred_check
          %p4913 = pneg %p4912
        $region38: #{tpu_custom_call.1} parent=27 // pred_check_branch
          %4915 = sbr.rel (%p4913) target = $region40
        $region39: #{tpu_custom_call.1} parent=27 // pred_region
          %v4916 = vld [vmem:[#allocation2] sm:$0xff]
          %v4917 = vld [vmem:[#allocation2 + $0x8] sm:$0xff]
          %v4918 = vld [vmem:[#allocation2 + $0x10] sm:$0xff]
          %v4919 = vld [vmem:[#allocation2 + $0x18] sm:$0xff]
          %v4920 = vld [vmem:[#allocation2 + $0x20] sm:$0xff]
          %v4921 = vld [vmem:[#allocation2 + $0x28] sm:$0xff]
          %v4922 = vld [vmem:[#allocation2 + $0x30] sm:$0xff]
          %v4923 = vld [vmem:[#allocation2 + $0x38] sm:$0xff]
          %v4924 = vld [vmem:[#allocation2 + $0x40] sm:$0xff]
          %v4925 = vld [vmem:[#allocation2 + $0x48] sm:$0xff]
          %v4926 = vld [vmem:[#allocation2 + $0x50] sm:$0xff]
          %v4927 = vld [vmem:[#allocation2 + $0x58] sm:$0xff]
          %v4928 = vld [vmem:[#allocation2 + $0x60] sm:$0xff]
          %v4929 = vld [vmem:[#allocation2 + $0x68] sm:$0xff]
          %v4930 = vld [vmem:[#allocation2 + $0x70] sm:$0xff]
          %v4931 = vld [vmem:[#allocation2 + $0x78] sm:$0xff]
          %4932 = vst [vmem:[%s173] sm:$0xff] %v4916
          %4933 = vst [vmem:[%s173 + $0x8] sm:$0xff] %v4917
          %4934 = vst [vmem:[%s173 + $0x10] sm:$0xff] %v4918
          %4935 = vst [vmem:[%s173 + $0x18] sm:$0xff] %v4919
          %4936 = vst [vmem:[%s173 + $0x20] sm:$0xff] %v4920
          %4937 = vst [vmem:[%s173 + $0x28] sm:$0xff] %v4921
          %4938 = vst [vmem:[%s173 + $0x30] sm:$0xff] %v4922
          %4939 = vst [vmem:[%s173 + $0x38] sm:$0xff] %v4923
          %4940 = vst [vmem:[%s173 + $0x40] sm:$0xff] %v4924
          %4941 = vst [vmem:[%s173 + $0x48] sm:$0xff] %v4925
          %4942 = vst [vmem:[%s173 + $0x50] sm:$0xff] %v4926
          %4943 = vst [vmem:[%s173 + $0x58] sm:$0xff] %v4927
          %4944 = vst [vmem:[%s173 + $0x60] sm:$0xff] %v4928
          %4945 = vst [vmem:[%s173 + $0x68] sm:$0xff] %v4929
          %4946 = vst [vmem:[%s173 + $0x70] sm:$0xff] %v4930
          %4947 = vst [vmem:[%s173 + $0x78] sm:$0xff] %v4931
        $region40: #{tpu_custom_call.1} parent=27 // pred_fallthru
          _
        %s4948 = sand.u32 %s88, 1
        %s4949 = scalar_lea.sflag [#allocation5], %s4948
        %s4950 = sand.u32 %s88, 1
        %s4951 = smul.addr %s4950, 128
        %s4952 = scalar_lea.vmem [#allocation6], %s4951
        // Predicated region
        $region41: #{tpu_custom_call.1} parent=27 // pred_check
          %p4953 = pneg %p98
        $region42: #{tpu_custom_call.1} parent=27 // pred_check_branch
          %4955 = sbr.rel (%p4953) target = $region44
        $region43: #{tpu_custom_call.1} parent=27 // pred_region
          %s4957 = ssub.s32 2048, 2048
          %4958 = vsyncadd %s4949, %s4957
          %s4959 = smul.addr %s21, 16
          %s4960 = smul.addr %s4959, 128
          %s4961 = scalar_lea.hbm %s2, %s4960
          %s4963 = sshll.u32 %s4952, 4
          %s4964 = int_to_ptr.vmem [resolvable:$true] %s4963
          %4966 = dma.vmem_to_hbm [thread:$0]  %s4964, 2048, %s4961, %s4949
        $region44: #{tpu_custom_call.1} parent=27 // pred_fallthru
          _
      $region28: #{tpu_custom_call.1} parent=5 // pred_fallthru
        _
      %p4967 = scmp.le.s32.totalorder 2, %s12
      // Predicated region
      $region45: #{tpu_custom_call.1} parent=5 // pred_check
        %p4968 = pneg %p4967
      $region46: #{tpu_custom_call.1} parent=5 // pred_check_branch
        %4970 = sbr.rel (%p4968) target = $region48
      $region47: #{tpu_custom_call.1} parent=5 // pred_region
        %s4971 = ssub.s32 %s12, 2
        // Predicated region
        $region49: #{tpu_custom_call.1} parent=47 // pred_check
          %p4972 = pneg %p104
        $region50: #{tpu_custom_call.1} parent=47 // pred_check_branch
          %4974 = sbr.rel (%p4972) target = $region52
        $region51: #{tpu_custom_call.1} parent=47 // pred_region
          %s4975 = sand.u32 %s89, 1
          %s4976 = scalar_lea.sflag [#allocation5], %s4975
          %s4977 = sand.u32 %s89, 1
          %s4978 = smul.addr %s4977, 128
          %s4979 = scalar_lea.vmem [#allocation6], %s4978
          %4980 = dma.done %s4976, 2048
        $region52: #{tpu_custom_call.1} parent=47 // pred_fallthru
          _
      $region48: #{tpu_custom_call.1} parent=5 // pred_fallthru
        _
    $region6: #{tpu_custom_call.1} parent=1 // loop_footer
      %s16 = sadd.s32 1, %s12
    $region7: #{tpu_custom_call.1} parent=1 // loop_footer_branch
      %11 = sbr.rel target = $region3
    $region8: #{tpu_custom_call.1} parent=1 // loop_exit
      _
    %4981 = vsyncpa [#allocation4], 1
    %s4982 = scalar_lea.sflag [#allocation4], 1
    %4983 = vsyncpa %s4982, 1
    %4984 = vsyncpa [#allocation5], 1
    %s4985 = scalar_lea.sflag [#allocation5], 1
    %4986 = vsyncpa %s4985, 1

</llo_original>
